<compile_context>
chip_gen: v7x
topology: tpu7x:2x2x1
jax: 0.10.0
libtpu: 0.0.40
codegen_flags: <defaults>
</compile_context>

<pallas_src>
import functools

import jax
import jax.numpy as jnp
from jax.experimental import pallas as pl
from jax.experimental.pallas import tpu as pltpu


LATENT_DIM = 20
LATENT_PAD = 128        # lane-aligned latent width (zero-padded)
HIDDEN_DIM = 400
HIDDEN_PAD = 512        # lane-aligned hidden width (zero-padded)
MAX_TILE_B = 512        # amortizes per-step pipeline overhead; fits VMEM easily


def _round_up(n, m):
    return ((n + m - 1) // m) * m


def _vae_kernel(x_ref, eps_ref,
                w1_ref, b1_ref,
                wmv_ref, bmv_ref,
                w3_ref, b3_ref,
                w4_ref, b4_ref,
                recon_ref, mulogvar_ref):
    # x arrives in its original dtype; cast to bf16 for the MXU in-kernel.
    x = x_ref[...].astype(jnp.bfloat16)

    # encode: h = relu(x @ W1 + b1)   (MXU bf16, accumulate + bias/relu in f32)
    h = jnp.dot(x, w1_ref[...], preferred_element_type=jnp.float32) + b1_ref[...]
    h = jnp.maximum(h, 0.0)

    # fused mean/logvar head: y = h @ [Wm | Wv] + [bm | bv]  -> (TILE_B, 256)
    # mean occupies lanes [0:128), logvar lanes [128:256) (first 20 of each used).
    y = jnp.dot(h.astype(jnp.bfloat16), wmv_ref[...],
                preferred_element_type=jnp.float32) + bmv_ref[...]
    mu = y[:, :LATENT_PAD]          # lane-aligned 128-wide slice
    logvar = y[:, LATENT_PAD:]      # lane-aligned 128-wide slice

    # reparameterize: z = mu + eps * exp(logvar / 2)
    # padded lanes: mu=0, logvar=0 -> std=1, eps=0 -> z=0, so padding is inert.
    std = jnp.exp(logvar * 0.5)
    z = mu + eps_ref[...] * std

    # decode: out = sigmoid(relu(z @ W3 + b3) @ W4 + b4)
    h2 = jnp.dot(z.astype(jnp.bfloat16), w3_ref[...],
                 preferred_element_type=jnp.float32) + b3_ref[...]
    h2 = jnp.maximum(h2, 0.0)
    logits = jnp.dot(h2.astype(jnp.bfloat16), w4_ref[...],
                     preferred_element_type=jnp.float32) + b4_ref[...]

    # sigmoid = 1 / (1 + exp(-x)); approx reciprocal lands on the EUP slot.
    sig = pl.reciprocal(1.0 + jnp.exp(-logits), approx=True)
    recon_ref[...] = sig.astype(recon_ref.dtype)
    mulogvar_ref[...] = y


def pack_params(params, input_size):
    """One-time packing: fuse mean/logvar heads, zero-pad hidden/latent dims to
    lane multiples, cast matmul weights to bf16. Padded rows/cols are exact
    zeros so the forward pass is unchanged."""
    H, HP = HIDDEN_DIM, HIDDEN_PAD
    L, LP = LATENT_DIM, LATENT_PAD

    w1 = jnp.zeros((input_size, HP), jnp.float32).at[:, :H].set(params["w1"])
    b1 = jnp.zeros((1, HP), jnp.float32).at[:, :H].set(params["b1"])

    w_mv = jnp.zeros((HP, 2 * LP), jnp.float32)
    w_mv = w_mv.at[:H, :L].set(params["wm"]).at[:H, LP:LP + L].set(params["wv"])
    b_mv = jnp.zeros((1, 2 * LP), jnp.float32)
    b_mv = b_mv.at[:, :L].set(params["bm"]).at[:, LP:LP + L].set(params["bv"])

    w3 = jnp.zeros((LP, HP), jnp.float32).at[:L, :H].set(params["w3"])
    b3 = jnp.zeros((1, HP), jnp.float32).at[:, :H].set(params["b3"])

    w4 = jnp.zeros((HP, input_size), jnp.float32).at[:H, :].set(params["w4"])
    b4 = params["b4"].astype(jnp.float32)

    return dict(
        w1=w1.astype(jnp.bfloat16), b1=b1,
        w_mv=w_mv.astype(jnp.bfloat16), b_mv=b_mv,
        w3=w3.astype(jnp.bfloat16), b3=b3,
        w4=w4.astype(jnp.bfloat16), b4=b4,
    )


@functools.partial(jax.jit, static_argnames=("input_size",))
def vae_forward(x, eps, packed, *, input_size):
    """VAE forward. x: (..., C, H, W) or (B, input_size); eps: (B, LATENT_DIM).
    Returns (reconstructed[bf16], mu[f32], logvar[f32])."""
    x_flat = x.reshape(-1, input_size)
    batch = x_flat.shape[0]
    assert eps.shape == (batch, LATENT_DIM), (eps.shape, batch)

    # Pad batch to a full number of tiles (>= 8 sublanes).
    padded = _round_up(max(batch, 1), 8)
    tile_b = min(MAX_TILE_B, padded)
    padded = _round_up(padded, tile_b)
    grid = (padded // tile_b,)

    # Only materialize a padded copy of x when actually needed (static branch);
    # keep original dtype and cast to bf16 inside the kernel.
    if padded != batch:
        x_p = jnp.pad(x_flat, ((0, padded - batch), (0, 0)))
    else:
        x_p = x_flat
    # eps is tiny: always pad to 128 lanes (zeros) so z math is lane-aligned.
    eps_p = jnp.pad(eps.astype(jnp.float32),
                    ((0, padded - batch), (0, LATENT_PAD - LATENT_DIM)))

    def tiled(cols):
        return pl.BlockSpec((tile_b, cols), lambda i: (i, 0))

    def resident(arr):
        # Whole array in VMEM, same block every grid step -> loaded once.
        return pl.BlockSpec(arr.shape, lambda i: (0, 0))

    weight_args = (
        packed["w1"], packed["b1"],
        packed["w_mv"], packed["b_mv"],
        packed["w3"], packed["b3"],
        packed["w4"], packed["b4"],
    )

    in_specs = [tiled(input_size), tiled(LATENT_PAD)] + [resident(w) for w in weight_args]

    out_shapes = (
        jax.ShapeDtypeStruct((padded, input_size), jnp.bfloat16),     # reconstructed
        jax.ShapeDtypeStruct((padded, 2 * LATENT_PAD), jnp.float32),  # mu || logvar
    )
    out_specs = (tiled(input_size), tiled(2 * LATENT_PAD))

    recon_p, mulogvar_p = pl.pallas_call(
        _vae_kernel,
        grid=grid,
        in_specs=in_specs,
        out_specs=out_specs,
        out_shape=out_shapes,
        compiler_params=pltpu.CompilerParams(
            dimension_semantics=("parallel",),
            vmem_limit_bytes=48 << 20,
        ),
    )(x_p, eps_p, *weight_args)

    recon = recon_p[:batch]
    mu = mulogvar_p[:batch, :LATENT_DIM]
    logvar = mulogvar_p[:batch, LATENT_PAD:LATENT_PAD + LATENT_DIM]
    return recon, mu, logvar


def init_params(key, input_size):
    """Deterministic parameter init (uniform +-1/sqrt(fan_in), like torch Linear)."""
    def linear(k, fan_in, fan_out):
        kw, kb = jax.random.split(k)
        bound = 1.0 / jnp.sqrt(float(fan_in))
        w = jax.random.uniform(kw, (fan_in, fan_out), jnp.float32, -bound, bound)
        b = jax.random.uniform(kb, (1, fan_out), jnp.float32, -bound, bound)
        return w, b

    k1, k2, k3, k4, k5 = jax.random.split(key, 5)
    w1, b1 = linear(k1, input_size, HIDDEN_DIM)
    wm, bm = linear(k2, HIDDEN_DIM, LATENT_DIM)
    wv, bv = linear(k3, HIDDEN_DIM, LATENT_DIM)
    w3, b3 = linear(k4, LATENT_DIM, HIDDEN_DIM)
    w4, b4 = linear(k5, HIDDEN_DIM, input_size)
    return dict(w1=w1, b1=b1, wm=wm, bm=bm, wv=wv, bv=bv,
                w3=w3, b3=b3, w4=w4, b4=b4)


def vae_forward_ref(x, eps, params, input_size):
    """Pure-JAX f32 reference (unpadded weights) for correctness check."""
    xf = x.reshape(-1, input_size).astype(jnp.float32)
    h = jnp.maximum(xf @ params["w1"] + params["b1"], 0.0)
    mu = h @ params["wm"] + params["bm"]
    logvar = h @ params["wv"] + params["bv"]
    z = mu + eps * jnp.exp(logvar * 0.5)
    h2 = jnp.maximum(z @ params["w3"] + params["b3"], 0.0)
    recon = jax.nn.sigmoid(h2 @ params["w4"] + params["b4"])
    return recon, mu, logvar


if __name__ == "__main__":
    key = jax.random.PRNGKey(0)
    k_x, k_eps, k_p = jax.random.split(key, 3)

    B, C, H, W = 2, 4, 16, 16
    input_size = C * H * W  # 1024

    x = jax.random.uniform(k_x, (B, C, H, W), jnp.float32)
    eps = jax.random.normal(k_eps, (B, LATENT_DIM), jnp.float32)
    params = init_params(k_p, input_size)
    packed = pack_params(params, input_size)

    recon, mu, logvar = vae_forward(x, eps, packed, input_size=input_size)
    jax.block_until_ready((recon, mu, logvar))

    recon_r, mu_r, logvar_r = vae_forward_ref(x, eps, params, input_size)
    assert recon.shape == (B, input_size)
    assert mu.shape == (B, LATENT_DIM) and logvar.shape == (B, LATENT_DIM)
    # bf16 MXU inputs + bf16 recon store -> relaxed tolerances vs. f32 reference.
    assert jnp.allclose(recon.astype(jnp.float32), recon_r, atol=2e-2, rtol=2e-2)
    assert jnp.allclose(mu, mu_r, atol=2e-2, rtol=2e-2)
    assert jnp.allclose(logvar, logvar_r, atol=2e-2, rtol=2e-2)

    print("KERNEL_OK")
</pallas_src>

<mosaic_0001>
module attributes {stable_mosaic.version = 11 : i64} {
  func.func @_vae_kernel(%arg0: i32, %arg1: memref<8x1024xf32, #tpu.memory_space<vmem>>, %arg2: memref<8x128xf32, #tpu.memory_space<vmem>>, %arg3: memref<1024x512xbf16, #tpu.memory_space<vmem>>, %arg4: memref<1x512xf32, #tpu.memory_space<vmem>>, %arg5: memref<512x256xbf16, #tpu.memory_space<vmem>>, %arg6: memref<1x256xf32, #tpu.memory_space<vmem>>, %arg7: memref<128x512xbf16, #tpu.memory_space<vmem>>, %arg8: memref<1x512xf32, #tpu.memory_space<vmem>>, %arg9: memref<512x1024xbf16, #tpu.memory_space<vmem>>, %arg10: memref<1x1024xf32, #tpu.memory_space<vmem>>, %arg11: memref<8x1024xbf16, #tpu.memory_space<vmem>>, %arg12: memref<8x256xf32, #tpu.memory_space<vmem>>) attributes {dimension_semantics = [#tpu.dimension_semantics<parallel>], iteration_bounds = array<i64: 1>, scalar_prefetch = 0 : i64, scratch_operands = 0 : i64, tpu.core_type = #tpu.core_type<tc>, window_params = [{transform_indices = @transform_0, window_bounds = array<i64: 8, 1024>}, {transform_indices = @transform_1, window_bounds = array<i64: 8, 128>}, {pipeline_mode = #tpu.pipeline_mode<synchronous>, transform_indices = @transform_2, window_bounds = array<i64: 1024, 512>}, {pipeline_mode = #tpu.pipeline_mode<synchronous>, transform_indices = @transform_3, window_bounds = array<i64: 1, 512>}, {pipeline_mode = #tpu.pipeline_mode<synchronous>, transform_indices = @transform_4, window_bounds = array<i64: 512, 256>}, {pipeline_mode = #tpu.pipeline_mode<synchronous>, transform_indices = @transform_5, window_bounds = array<i64: 1, 256>}, {pipeline_mode = #tpu.pipeline_mode<synchronous>, transform_indices = @transform_6, window_bounds = array<i64: 128, 512>}, {pipeline_mode = #tpu.pipeline_mode<synchronous>, transform_indices = @transform_7, window_bounds = array<i64: 1, 512>}, {pipeline_mode = #tpu.pipeline_mode<synchronous>, transform_indices = @transform_8, window_bounds = array<i64: 512, 1024>}, {pipeline_mode = #tpu.pipeline_mode<synchronous>, transform_indices = @transform_9, window_bounds = array<i64: 1, 1024>}, {transform_indices = @transform_10, window_bounds = array<i64: 8, 1024>}, {transform_indices = @transform_11, window_bounds = array<i64: 8, 256>}]} {
    %c0 = arith.constant 0 : index
    %c0_0 = arith.constant 0 : index
    %0 = vector.load %arg1[%c0, %c0_0] : memref<8x1024xf32, #tpu.memory_space<vmem>>, vector<8x1024xf32>
    %1 = arith.truncf %0 : vector<8x1024xf32> to vector<8x1024xbf16>
    %c0_1 = arith.constant 0 : index
    %c0_2 = arith.constant 0 : index
    %2 = vector.load %arg3[%c0_1, %c0_2] : memref<1024x512xbf16, #tpu.memory_space<vmem>>, vector<1024x512xbf16>
    %cst = arith.constant dense<0.000000e+00> : vector<8x512xf32>
    %3 = tpu.matmul %1, %2, %cst {dimension_numbers = #tpu.dot_dimension_numbers<[1], [0], [0], [1], [0, 0, 1, 1], [], []>} : vector<8x1024xbf16>, vector<1024x512xbf16>, vector<8x512xf32> -> vector<8x512xf32>
    %c0_3 = arith.constant 0 : index
    %c0_4 = arith.constant 0 : index
    %4 = vector.load %arg4[%c0_3, %c0_4] : memref<1x512xf32, #tpu.memory_space<vmem>>, vector<1x512xf32>
    %5 = vector.broadcast %4 : vector<1x512xf32> to vector<8x512xf32>
    %6 = arith.addf %3, %5 : vector<8x512xf32>
    %cst_5 = arith.constant 0.000000e+00 : f32
    %7 = vector.broadcast %cst_5 : f32 to vector<8x512xf32>
    %8 = arith.maximumf %6, %7 : vector<8x512xf32>
    %9 = arith.truncf %8 : vector<8x512xf32> to vector<8x512xbf16>
    %c0_6 = arith.constant 0 : index
    %c0_7 = arith.constant 0 : index
    %10 = vector.load %arg5[%c0_6, %c0_7] : memref<512x256xbf16, #tpu.memory_space<vmem>>, vector<512x256xbf16>
    %cst_8 = arith.constant dense<0.000000e+00> : vector<8x256xf32>
    %11 = tpu.matmul %9, %10, %cst_8 {dimension_numbers = #tpu.dot_dimension_numbers<[1], [0], [0], [1], [0, 0, 1, 1], [], []>} : vector<8x512xbf16>, vector<512x256xbf16>, vector<8x256xf32> -> vector<8x256xf32>
    %c0_9 = arith.constant 0 : index
    %c0_10 = arith.constant 0 : index
    %12 = vector.load %arg6[%c0_9, %c0_10] : memref<1x256xf32, #tpu.memory_space<vmem>>, vector<1x256xf32>
    %13 = vector.broadcast %12 : vector<1x256xf32> to vector<8x256xf32>
    %14 = arith.addf %11, %13 : vector<8x256xf32>
    %15 = vector.extract_strided_slice %14 {offsets = [0, 0], sizes = [8, 128], strides = [1, 1]} : vector<8x256xf32> to vector<8x128xf32>
    %16 = vector.extract_strided_slice %14 {offsets = [0, 128], sizes = [8, 128], strides = [1, 1]} : vector<8x256xf32> to vector<8x128xf32>
    %cst_11 = arith.constant 5.000000e-01 : f32
    %17 = vector.broadcast %cst_11 : f32 to vector<8x128xf32>
    %18 = arith.mulf %16, %17 : vector<8x128xf32>
    %19 = math.exp %18 : vector<8x128xf32>
    %c0_12 = arith.constant 0 : index
    %c0_13 = arith.constant 0 : index
    %20 = vector.load %arg2[%c0_12, %c0_13] : memref<8x128xf32, #tpu.memory_space<vmem>>, vector<8x128xf32>
    %21 = arith.mulf %20, %19 : vector<8x128xf32>
    %22 = arith.addf %15, %21 : vector<8x128xf32>
    %23 = arith.truncf %22 : vector<8x128xf32> to vector<8x128xbf16>
    %c0_14 = arith.constant 0 : index
    %c0_15 = arith.constant 0 : index
    %24 = vector.load %arg7[%c0_14, %c0_15] : memref<128x512xbf16, #tpu.memory_space<vmem>>, vector<128x512xbf16>
    %cst_16 = arith.constant dense<0.000000e+00> : vector<8x512xf32>
    %25 = tpu.matmul %23, %24, %cst_16 {dimension_numbers = #tpu.dot_dimension_numbers<[1], [0], [0], [1], [0, 0, 1, 1], [], []>} : vector<8x128xbf16>, vector<128x512xbf16>, vector<8x512xf32> -> vector<8x512xf32>
    %c0_17 = arith.constant 0 : index
    %c0_18 = arith.constant 0 : index
    %26 = vector.load %arg8[%c0_17, %c0_18] : memref<1x512xf32, #tpu.memory_space<vmem>>, vector<1x512xf32>
    %27 = vector.broadcast %26 : vector<1x512xf32> to vector<8x512xf32>
    %28 = arith.addf %25, %27 : vector<8x512xf32>
    %cst_19 = arith.constant 0.000000e+00 : f32
    %29 = vector.broadcast %cst_19 : f32 to vector<8x512xf32>
    %30 = arith.maximumf %28, %29 : vector<8x512xf32>
    %31 = arith.truncf %30 : vector<8x512xf32> to vector<8x512xbf16>
    %c0_20 = arith.constant 0 : index
    %c0_21 = arith.constant 0 : index
    %32 = vector.load %arg9[%c0_20, %c0_21] : memref<512x1024xbf16, #tpu.memory_space<vmem>>, vector<512x1024xbf16>
    %cst_22 = arith.constant dense<0.000000e+00> : vector<8x1024xf32>
    %33 = tpu.matmul %31, %32, %cst_22 {dimension_numbers = #tpu.dot_dimension_numbers<[1], [0], [0], [1], [0, 0, 1, 1], [], []>} : vector<8x512xbf16>, vector<512x1024xbf16>, vector<8x1024xf32> -> vector<8x1024xf32>
    %c0_23 = arith.constant 0 : index
    %c0_24 = arith.constant 0 : index
    %34 = vector.load %arg10[%c0_23, %c0_24] : memref<1x1024xf32, #tpu.memory_space<vmem>>, vector<1x1024xf32>
    %35 = vector.broadcast %34 : vector<1x1024xf32> to vector<8x1024xf32>
    %36 = arith.addf %33, %35 : vector<8x1024xf32>
    %cst_25 = arith.constant 0.000000e+00 : f32
    %37 = vector.broadcast %cst_25 : f32 to vector<8x1024xf32>
    %38 = arith.subf %37, %36 : vector<8x1024xf32>
    %39 = math.exp %38 : vector<8x1024xf32>
    %cst_26 = arith.constant 1.000000e+00 : f32
    %40 = vector.broadcast %cst_26 : f32 to vector<8x1024xf32>
    %41 = arith.addf %40, %39 : vector<8x1024xf32>
    %42 = tpu.reciprocal %41 {approx = true} : vector<8x1024xf32> -> vector<8x1024xf32>
    %43 = arith.truncf %42 : vector<8x1024xf32> to vector<8x1024xbf16>
    %c0_27 = arith.constant 0 : index
    %c0_28 = arith.constant 0 : index
    %44 = vector.load %arg11[%c0_27, %c0_28] : memref<8x1024xbf16, #tpu.memory_space<vmem>>, vector<8x1024xbf16>
    tpu.vector_store %arg11[%c0_27, %c0_28], %43 {strides = array<i32>} : memref<8x1024xbf16, #tpu.memory_space<vmem>>, vector<8x1024xbf16>,
    %c0_29 = arith.constant 0 : index
    %c0_30 = arith.constant 0 : index
    %45 = vector.load %arg12[%c0_29, %c0_30] : memref<8x256xf32, #tpu.memory_space<vmem>>, vector<8x256xf32>
    tpu.vector_store %arg12[%c0_29, %c0_30], %14 {strides = array<i32>} : memref<8x256xf32, #tpu.memory_space<vmem>>, vector<8x256xf32>,
    return
  }
  func.func @transform_0(%arg0: i32) -> (i32, i32) {
    %c0_i32 = arith.constant 0 : i32
    %c0_i32_0 = arith.constant 0 : i32
    return %arg0, %c0_i32 : i32, i32
  }
  func.func @transform_1(%arg0: i32) -> (i32, i32) {
    %c0_i32 = arith.constant 0 : i32
    %c0_i32_0 = arith.constant 0 : i32
    return %arg0, %c0_i32 : i32, i32
  }
  func.func @transform_2(%arg0: i32) -> (i32, i32) {
    %c0_i32 = arith.constant 0 : i32
    %c0_i32_0 = arith.constant 0 : i32
    %c0_i32_1 = arith.constant 0 : i32
    return %c0_i32, %c0_i32_0 : i32, i32
  }
  func.func @transform_3(%arg0: i32) -> (i32, i32) {
    %c0_i32 = arith.constant 0 : i32
    %c0_i32_0 = arith.constant 0 : i32
    %c0_i32_1 = arith.constant 0 : i32
    return %c0_i32, %c0_i32_0 : i32, i32
  }
  func.func @transform_4(%arg0: i32) -> (i32, i32) {
    %c0_i32 = arith.constant 0 : i32
    %c0_i32_0 = arith.constant 0 : i32
    %c0_i32_1 = arith.constant 0 : i32
    return %c0_i32, %c0_i32_0 : i32, i32
  }
  func.func @transform_5(%arg0: i32) -> (i32, i32) {
    %c0_i32 = arith.constant 0 : i32
    %c0_i32_0 = arith.constant 0 : i32
    %c0_i32_1 = arith.constant 0 : i32
    return %c0_i32, %c0_i32_0 : i32, i32
  }
  func.func @transform_6(%arg0: i32) -> (i32, i32) {
    %c0_i32 = arith.constant 0 : i32
    %c0_i32_0 = arith.constant 0 : i32
    %c0_i32_1 = arith.constant 0 : i32
    return %c0_i32, %c0_i32_0 : i32, i32
  }
  func.func @transform_7(%arg0: i32) -> (i32, i32) {
    %c0_i32 = arith.constant 0 : i32
    %c0_i32_0 = arith.constant 0 : i32
    %c0_i32_1 = arith.constant 0 : i32
    return %c0_i32, %c0_i32_0 : i32, i32
  }
  func.func @transform_8(%arg0: i32) -> (i32, i32) {
    %c0_i32 = arith.constant 0 : i32
    %c0_i32_0 = arith.constant 0 : i32
    %c0_i32_1 = arith.constant 0 : i32
    return %c0_i32, %c0_i32_0 : i32, i32
  }
  func.func @transform_9(%arg0: i32) -> (i32, i32) {
    %c0_i32 = arith.constant 0 : i32
    %c0_i32_0 = arith.constant 0 : i32
    %c0_i32_1 = arith.constant 0 : i32
    return %c0_i32, %c0_i32_0 : i32, i32
  }
  func.func @transform_10(%arg0: i32) -> (i32, i32) {
    %c0_i32 = arith.constant 0 : i32
    %c0_i32_0 = arith.constant 0 : i32
    return %arg0, %c0_i32 : i32, i32
  }
  func.func @transform_11(%arg0: i32) -> (i32, i32) {
    %c0_i32 = arith.constant 0 : i32
    %c0_i32_0 = arith.constant 0 : i32
    return %arg0, %c0_i32 : i32, i32
  }
}

</mosaic_0001>

<llo_original>
// kernel: vae_forward.1
$region0: #{vae_forward.1}
  #allocation0 [shape = 'u32[]', space=smem, size = 0x4, offset = 0x4, fixed_abs, tag = 'smem constant byte address 0x4 - core index']
  #allocation1 [shape = 'u32[144,128]{1,0:T(1,128)}', space=vmem, size = 0x12000, scoped, tag = 'internal scratch']
  %s0 = inlined_call_operand.vmem [shape: f32[8,1024], index: 0, kind: input, shape index: {}]
  %s1 = inlined_call_operand.vmem [shape: f32[8,128], index: 1, kind: input, shape index: {}]
  %s2 = inlined_call_operand.hbm [shape: bf16[1024,512], index: 2, kind: input, shape index: {}]
  %s3 = inlined_call_operand.vmem [shape: f32[1,512], index: 3, kind: input, shape index: {}]
  %s4 = inlined_call_operand.hbm [shape: bf16[512,256], index: 4, kind: input, shape index: {}]
  %s5 = inlined_call_operand.vmem [shape: f32[1,256], index: 5, kind: input, shape index: {}]
  %s6 = inlined_call_operand.vmem [shape: bf16[128,512], index: 6, kind: input, shape index: {}]
  %s7 = inlined_call_operand.hbm [shape: f32[1,512], index: 7, kind: input, shape index: {}]
  %s8 = inlined_call_operand.hbm [shape: bf16[512,1024], index: 8, kind: input, shape index: {}]
  %s9 = inlined_call_operand.hbm [shape: f32[1,1024], index: 9, kind: input, shape index: {}]
  %s10 = inlined_call_operand.vmem [shape: bf16[8,1024], index: 10, kind: output, shape index: {0}]
  %s11 = inlined_call_operand.vmem [shape: f32[8,256], index: 11, kind: output, shape index: {1}]
  %12 = xla_tuple %s10, %s11
  %s13 = sld [smem:[#allocation0]]
  $region78: #{vae_forward.1} parent=0
    _
  %s15 = ssub.s32 1, %s13
  %s16 = scalar_select 0, %s15, %s13
  $region1: #{vae_forward.1} parent=0
    #allocation2 [shape = 'u8[1048576]{0}', space=vmem, size = 0x100000, scoped, tag = 'input window, operand 2, single buffered']
    #allocation3 [shape = 's32[1]{0}', space=sflag, size = 0x4, scoped, tag = 'scoped memory for vae_forward.1']
    #allocation4 [shape = 'u8[262144]{0}', space=vmem, size = 0x40000, scoped, tag = 'input window, operand 4, single buffered']
    #allocation5 [shape = 's32[1]{0}', space=sflag, size = 0x4, scoped, tag = 'scoped memory for vae_forward.1']
    #allocation6 [shape = 'u8[2048]{0}', space=vmem, size = 0x800, scoped, tag = 'input window, operand 7, single buffered']
    #allocation7 [shape = 'u8[1048576]{0}', space=vmem, size = 0x100000, scoped, tag = 'input window, operand 8, single buffered']
    #allocation8 [shape = 's32[1]{0}', space=sflag, size = 0x4, scoped, tag = 'scoped memory for vae_forward.1']
    #allocation9 [shape = 'u8[4096]{0}', space=vmem, size = 0x1000, scoped, tag = 'input window, operand 9, single buffered']
    %17 = vsyncpa [#allocation3], 0
    %18 = vsyncpa [#allocation5], 0
    %19 = vsyncpa [#allocation8], 0
    // Predicated region
    $region2: #{vae_forward.1} parent=1 // pred_check
      _
    $region3: #{vae_forward.1} parent=1 // pred_check_branch
      %21 = sbr.rel (0) target = $region5
    $region4: #{vae_forward.1} parent=1 // pred_region
      _
    $region5: #{vae_forward.1} parent=1 // pred_fallthru
      _
    // Predicated region
    $region6: #{vae_forward.1} parent=1 // pred_check
      _
    $region7: #{vae_forward.1} parent=1 // pred_check_branch
      %23 = sbr.rel (0) target = $region9
    $region8: #{vae_forward.1} parent=1 // pred_region
      _
    $region9: #{vae_forward.1} parent=1 // pred_fallthru
      _
    // Predicated region
    $region10: #{vae_forward.1} parent=1 // pred_check
      _
    $region11: #{vae_forward.1} parent=1 // pred_check_branch
      %25 = sbr.rel (0) target = $region13
    $region12: #{vae_forward.1} parent=1 // pred_region
      %s27 = ssub.s32 32768, 32768
      %28 = vsyncadd [#allocation3], %s27
      %s29 = sshll.u32 [#allocation2], 4
      %s30 = int_to_ptr.vmem [resolvable:$true] %s29
      %35 = dma.hbm_to_vmem [thread:$0]  %s2, 32768, %s30, [#allocation3], 256, 256, 16
    $region13: #{vae_forward.1} parent=1 // pred_fallthru
      _
    // Predicated region
    $region14: #{vae_forward.1} parent=1 // pred_check
      _
    $region15: #{vae_forward.1} parent=1 // pred_check_branch
      %37 = sbr.rel (0) target = $region17
    $region16: #{vae_forward.1} parent=1 // pred_region
      _
    $region17: #{vae_forward.1} parent=1 // pred_fallthru
      _
    // Predicated region
    $region18: #{vae_forward.1} parent=1 // pred_check
      _
    $region19: #{vae_forward.1} parent=1 // pred_check_branch
      %39 = sbr.rel (0) target = $region21
    $region20: #{vae_forward.1} parent=1 // pred_region
      %s41 = ssub.s32 8192, 8192
      %42 = vsyncadd [#allocation5], %s41
      %s43 = sshll.u32 [#allocation4], 4
      %s44 = int_to_ptr.vmem [resolvable:$true] %s43
      %49 = dma.hbm_to_vmem [thread:$0]  %s4, 8192, %s44, [#allocation5], 128, 128, 8
    $region21: #{vae_forward.1} parent=1 // pred_fallthru
      _
    // Predicated region
    $region22: #{vae_forward.1} parent=1 // pred_check
      _
    $region23: #{vae_forward.1} parent=1 // pred_check_branch
      %51 = sbr.rel (0) target = $region25
    $region24: #{vae_forward.1} parent=1 // pred_region
      _
    $region25: #{vae_forward.1} parent=1 // pred_fallthru
      _
    // Predicated region
    $region26: #{vae_forward.1} parent=1 // pred_check
      _
    $region27: #{vae_forward.1} parent=1 // pred_check_branch
      %53 = sbr.rel (0) target = $region29
    $region28: #{vae_forward.1} parent=1 // pred_region
      _
    $region29: #{vae_forward.1} parent=1 // pred_fallthru
      _
    // Predicated region
    $region30: #{vae_forward.1} parent=1 // pred_check
      _
    $region31: #{vae_forward.1} parent=1 // pred_check_branch
      %55 = sbr.rel (0) target = $region33
    $region32: #{vae_forward.1} parent=1 // pred_region
      %s57 = ssub.s32 64, 64
      %58 = vsyncadd [#allocation5], %s57
      %s60 = sshll.u32 [#allocation6], 4
      %s61 = int_to_ptr.vmem [resolvable:$true] %s60
      %63 = dma.hbm_to_vmem [thread:$0]  %s7, 64, %s61, [#allocation5]
    $region33: #{vae_forward.1} parent=1 // pred_fallthru
      _
    // Predicated region
    $region34: #{vae_forward.1} parent=1 // pred_check
      _
    $region35: #{vae_forward.1} parent=1 // pred_check_branch
      %65 = sbr.rel (0) target = $region37
    $region36: #{vae_forward.1} parent=1 // pred_region
      %s67 = ssub.s32 32768, 32768
      %68 = vsyncadd [#allocation8], %s67
      %s69 = sshll.u32 [#allocation7], 4
      %s70 = int_to_ptr.vmem [resolvable:$true] %s69
      %75 = dma.hbm_to_vmem [thread:$0]  %s8, 32768, %s70, [#allocation8], 512, 512, 32
    $region37: #{vae_forward.1} parent=1 // pred_fallthru
      _
    // Predicated region
    $region38: #{vae_forward.1} parent=1 // pred_check
      _
    $region39: #{vae_forward.1} parent=1 // pred_check_branch
      %77 = sbr.rel (0) target = $region41
    $region40: #{vae_forward.1} parent=1 // pred_region
      %s79 = ssub.s32 128, 128
      %80 = vsyncadd [#allocation8], %s79
      %s82 = sshll.u32 [#allocation9], 4
      %s83 = int_to_ptr.vmem [resolvable:$true] %s82
      %85 = dma.hbm_to_vmem [thread:$0]  %s9, 128, %s83, [#allocation8]
    $region41: #{vae_forward.1} parent=1 // pred_fallthru
      _
    // Predicated region
    $region42: #{vae_forward.1} parent=1 // pred_check
      _
    $region43: #{vae_forward.1} parent=1 // pred_check_branch
      %87 = sbr.rel (0) target = $region45
    $region44: #{vae_forward.1} parent=1 // pred_region
      %88 = dma.done [#allocation3], 32768
    $region45: #{vae_forward.1} parent=1 // pred_fallthru
      _
    // Predicated region
    $region46: #{vae_forward.1} parent=1 // pred_check
      _
    $region47: #{vae_forward.1} parent=1 // pred_check_branch
      %90 = sbr.rel (0) target = $region49
    $region48: #{vae_forward.1} parent=1 // pred_region
      %91 = dma.done [#allocation5], 8192
    $region49: #{vae_forward.1} parent=1 // pred_fallthru
      _
    // Predicated region
    $region50: #{vae_forward.1} parent=1 // pred_check
      _
    $region51: #{vae_forward.1} parent=1 // pred_check_branch
      %93 = sbr.rel (0) target = $region53
    $region52: #{vae_forward.1} parent=1 // pred_region
      %94 = dma.done [#allocation5], 64
    $region53: #{vae_forward.1} parent=1 // pred_fallthru
      _
    // Predicated region
    $region54: #{vae_forward.1} parent=1 // pred_check
      _
    $region55: #{vae_forward.1} parent=1 // pred_check_branch
      %96 = sbr.rel (0) target = $region57
    $region56: #{vae_forward.1} parent=1 // pred_region
      %97 = dma.done [#allocation8], 32768
    $region57: #{vae_forward.1} parent=1 // pred_fallthru
      _
    // Predicated region
    $region58: #{vae_forward.1} parent=1 // pred_check
      _
    $region59: #{vae_forward.1} parent=1 // pred_check_branch
      %99 = sbr.rel (0) target = $region61
    $region60: #{vae_forward.1} parent=1 // pred_region
      %100 = dma.done [#allocation8], 128
    $region61: #{vae_forward.1} parent=1 // pred_fallthru
      _
    %v102 = vld [vmem:[%s0] sm:$0xff]
    %v103 = vld [vmem:[%s0 + $0x8] sm:$0xff]
    %v104 = vld [vmem:[%s0 + $0x10] sm:$0xff]
    %v105 = vld [vmem:[%s0 + $0x18] sm:$0xff]
    %v106 = vld [vmem:[%s0 + $0x20] sm:$0xff]
    %v107 = vld [vmem:[%s0 + $0x28] sm:$0xff]
    %v108 = vld [vmem:[%s0 + $0x30] sm:$0xff]
    %v109 = vld [vmem:[%s0 + $0x38] sm:$0xff]
    %v110 = vpack.c.bf16 %v102, %v102
    %v111 = vpack.c.bf16 %v103, %v103
    %v112 = vpack.c.bf16 %v104, %v104
    %v113 = vpack.c.bf16 %v105, %v105
    %v114 = vpack.c.bf16 %v106, %v106
    %v115 = vpack.c.bf16 %v107, %v107
    %v116 = vpack.c.bf16 %v108, %v108
    %v117 = vpack.c.bf16 %v109, %v109
    %v118 = vld [vmem:[#allocation2] sm:$0xff]
    %v119 = vld [vmem:[#allocation2 + $0x8] sm:$0xff]
    %v120 = vld [vmem:[#allocation2 + $0x10] sm:$0xff]
    %v121 = vld [vmem:[#allocation2 + $0x18] sm:$0xff]
    %v122 = vld [vmem:[#allocation2 + $0x20] sm:$0xff]
    %v123 = vld [vmem:[#allocation2 + $0x28] sm:$0xff]
    %v124 = vld [vmem:[#allocation2 + $0x30] sm:$0xff]
    %v125 = vld [vmem:[#allocation2 + $0x38] sm:$0xff]
    %v126 = vld [vmem:[#allocation2 + $0x40] sm:$0xff]
    %v127 = vld [vmem:[#allocation2 + $0x48] sm:$0xff]
    %v128 = vld [vmem:[#allocation2 + $0x50] sm:$0xff]
    %v129 = vld [vmem:[#allocation2 + $0x58] sm:$0xff]
    %v130 = vld [vmem:[#allocation2 + $0x60] sm:$0xff]
    %v131 = vld [vmem:[#allocation2 + $0x68] sm:$0xff]
    %v132 = vld [vmem:[#allocation2 + $0x70] sm:$0xff]
    %v133 = vld [vmem:[#allocation2 + $0x78] sm:$0xff]
    %v134 = vld [vmem:[#allocation2 + $0x80] sm:$0xff]
    %v135 = vld [vmem:[#allocation2 + $0x88] sm:$0xff]
    %v136 = vld [vmem:[#allocation2 + $0x90] sm:$0xff]
    %v137 = vld [vmem:[#allocation2 + $0x98] sm:$0xff]
    %v138 = vld [vmem:[#allocation2 + $0xa0] sm:$0xff]
    %v139 = vld [vmem:[#allocation2 + $0xa8] sm:$0xff]
    %v140 = vld [vmem:[#allocation2 + $0xb0] sm:$0xff]
    %v141 = vld [vmem:[#allocation2 + $0xb8] sm:$0xff]
    %v142 = vld [vmem:[#allocation2 + $0xc0] sm:$0xff]
    %v143 = vld [vmem:[#allocation2 + $0xc8] sm:$0xff]
    %v144 = vld [vmem:[#allocation2 + $0xd0] sm:$0xff]
    %v145 = vld [vmem:[#allocation2 + $0xd8] sm:$0xff]
    %v146 = vld [vmem:[#allocation2 + $0xe0] sm:$0xff]
    %v147 = vld [vmem:[#allocation2 + $0xe8] sm:$0xff]
    %v148 = vld [vmem:[#allocation2 + $0xf0] sm:$0xff]
    %v149 = vld [vmem:[#allocation2 + $0xf8] sm:$0xff]
    %v150 = vld [vmem:[#allocation2 + $0x100] sm:$0xff]
    %v151 = vld [vmem:[#allocation2 + $0x108] sm:$0xff]
    %v152 = vld [vmem:[#allocation2 + $0x110] sm:$0xff]
    %v153 = vld [vmem:[#allocation2 + $0x118] sm:$0xff]
    %v154 = vld [vmem:[#allocation2 + $0x120] sm:$0xff]
    %v155 = vld [vmem:[#allocation2 + $0x128] sm:$0xff]
    %v156 = vld [vmem:[#allocation2 + $0x130] sm:$0xff]
    %v157 = vld [vmem:[#allocation2 + $0x138] sm:$0xff]
    %v158 = vld [vmem:[#allocation2 + $0x140] sm:$0xff]
    %v159 = vld [vmem:[#allocation2 + $0x148] sm:$0xff]
    %v160 = vld [vmem:[#allocation2 + $0x150] sm:$0xff]
    %v161 = vld [vmem:[#allocation2 + $0x158] sm:$0xff]
    %v162 = vld [vmem:[#allocation2 + $0x160] sm:$0xff]
    %v163 = vld [vmem:[#allocation2 + $0x168] sm:$0xff]
    %v164 = vld [vmem:[#allocation2 + $0x170] sm:$0xff]
    %v165 = vld [vmem:[#allocation2 + $0x178] sm:$0xff]
    %v166 = vld [vmem:[#allocation2 + $0x180] sm:$0xff]
    %v167 = vld [vmem:[#allocation2 + $0x188] sm:$0xff]
    %v168 = vld [vmem:[#allocation2 + $0x190] sm:$0xff]
    %v169 = vld [vmem:[#allocation2 + $0x198] sm:$0xff]
    %v170 = vld [vmem:[#allocation2 + $0x1a0] sm:$0xff]
    %v171 = vld [vmem:[#allocation2 + $0x1a8] sm:$0xff]
    %v172 = vld [vmem:[#allocation2 + $0x1b0] sm:$0xff]
    %v173 = vld [vmem:[#allocation2 + $0x1b8] sm:$0xff]
    %v174 = vld [vmem:[#allocation2 + $0x1c0] sm:$0xff]
    %v175 = vld [vmem:[#allocation2 + $0x1c8] sm:$0xff]
    %v176 = vld [vmem:[#allocation2 + $0x1d0] sm:$0xff]
    %v177 = vld [vmem:[#allocation2 + $0x1d8] sm:$0xff]
    %v178 = vld [vmem:[#allocation2 + $0x1e0] sm:$0xff]
    %v179 = vld [vmem:[#allocation2 + $0x1e8] sm:$0xff]
    %v180 = vld [vmem:[#allocation2 + $0x1f0] sm:$0xff]
    %v181 = vld [vmem:[#allocation2 + $0x1f8] sm:$0xff]
    %v182 = vld [vmem:[#allocation2 + $0x200] sm:$0xff]
    %v183 = vld [vmem:[#allocation2 + $0x208] sm:$0xff]
    %v184 = vld [vmem:[#allocation2 + $0x210] sm:$0xff]
    %v185 = vld [vmem:[#allocation2 + $0x218] sm:$0xff]
    %v186 = vld [vmem:[#allocation2 + $0x220] sm:$0xff]
    %v187 = vld [vmem:[#allocation2 + $0x228] sm:$0xff]
    %v188 = vld [vmem:[#allocation2 + $0x230] sm:$0xff]
    %v189 = vld [vmem:[#allocation2 + $0x238] sm:$0xff]
    %v190 = vld [vmem:[#allocation2 + $0x240] sm:$0xff]
    %v191 = vld [vmem:[#allocation2 + $0x248] sm:$0xff]
    %v192 = vld [vmem:[#allocation2 + $0x250] sm:$0xff]
    %v193 = vld [vmem:[#allocation2 + $0x258] sm:$0xff]
    %v194 = vld [vmem:[#allocation2 + $0x260] sm:$0xff]
    %v195 = vld [vmem:[#allocation2 + $0x268] sm:$0xff]
    %v196 = vld [vmem:[#allocation2 + $0x270] sm:$0xff]
    %v197 = vld [vmem:[#allocation2 + $0x278] sm:$0xff]
    %v198 = vld [vmem:[#allocation2 + $0x280] sm:$0xff]
    %v199 = vld [vmem:[#allocation2 + $0x288] sm:$0xff]
    %v200 = vld [vmem:[#allocation2 + $0x290] sm:$0xff]
    %v201 = vld [vmem:[#allocation2 + $0x298] sm:$0xff]
    %v202 = vld [vmem:[#allocation2 + $0x2a0] sm:$0xff]
    %v203 = vld [vmem:[#allocation2 + $0x2a8] sm:$0xff]
    %v204 = vld [vmem:[#allocation2 + $0x2b0] sm:$0xff]
    %v205 = vld [vmem:[#allocation2 + $0x2b8] sm:$0xff]
    %v206 = vld [vmem:[#allocation2 + $0x2c0] sm:$0xff]
    %v207 = vld [vmem:[#allocation2 + $0x2c8] sm:$0xff]
    %v208 = vld [vmem:[#allocation2 + $0x2d0] sm:$0xff]
    %v209 = vld [vmem:[#allocation2 + $0x2d8] sm:$0xff]
    %v210 = vld [vmem:[#allocation2 + $0x2e0] sm:$0xff]
    %v211 = vld [vmem:[#allocation2 + $0x2e8] sm:$0xff]
    %v212 = vld [vmem:[#allocation2 + $0x2f0] sm:$0xff]
    %v213 = vld [vmem:[#allocation2 + $0x2f8] sm:$0xff]
    %v214 = vld [vmem:[#allocation2 + $0x300] sm:$0xff]
    %v215 = vld [vmem:[#allocation2 + $0x308] sm:$0xff]
    %v216 = vld [vmem:[#allocation2 + $0x310] sm:$0xff]
    %v217 = vld [vmem:[#allocation2 + $0x318] sm:$0xff]
    %v218 = vld [vmem:[#allocation2 + $0x320] sm:$0xff]
    %v219 = vld [vmem:[#allocation2 + $0x328] sm:$0xff]
    %v220 = vld [vmem:[#allocation2 + $0x330] sm:$0xff]
    %v221 = vld [vmem:[#allocation2 + $0x338] sm:$0xff]
    %v222 = vld [vmem:[#allocation2 + $0x340] sm:$0xff]
    %v223 = vld [vmem:[#allocation2 + $0x348] sm:$0xff]
    %v224 = vld [vmem:[#allocation2 + $0x350] sm:$0xff]
    %v225 = vld [vmem:[#allocation2 + $0x358] sm:$0xff]
    %v226 = vld [vmem:[#allocation2 + $0x360] sm:$0xff]
    %v227 = vld [vmem:[#allocation2 + $0x368] sm:$0xff]
    %v228 = vld [vmem:[#allocation2 + $0x370] sm:$0xff]
    %v229 = vld [vmem:[#allocation2 + $0x378] sm:$0xff]
    %v230 = vld [vmem:[#allocation2 + $0x380] sm:$0xff]
    %v231 = vld [vmem:[#allocation2 + $0x388] sm:$0xff]
    %v232 = vld [vmem:[#allocation2 + $0x390] sm:$0xff]
    %v233 = vld [vmem:[#allocation2 + $0x398] sm:$0xff]
    %v234 = vld [vmem:[#allocation2 + $0x3a0] sm:$0xff]
    %v235 = vld [vmem:[#allocation2 + $0x3a8] sm:$0xff]
    %v236 = vld [vmem:[#allocation2 + $0x3b0] sm:$0xff]
    %v237 = vld [vmem:[#allocation2 + $0x3b8] sm:$0xff]
    %v238 = vld [vmem:[#allocation2 + $0x3c0] sm:$0xff]
    %v239 = vld [vmem:[#allocation2 + $0x3c8] sm:$0xff]
    %v240 = vld [vmem:[#allocation2 + $0x3d0] sm:$0xff]
    %v241 = vld [vmem:[#allocation2 + $0x3d8] sm:$0xff]
    %v242 = vld [vmem:[#allocation2 + $0x3e0] sm:$0xff]
    %v243 = vld [vmem:[#allocation2 + $0x3e8] sm:$0xff]
    %v244 = vld [vmem:[#allocation2 + $0x3f0] sm:$0xff]
    %v245 = vld [vmem:[#allocation2 + $0x3f8] sm:$0xff]
    %v246 = vld [vmem:[#allocation2 + $0x400] sm:$0xff]
    %v247 = vld [vmem:[#allocation2 + $0x408] sm:$0xff]
    %v248 = vld [vmem:[#allocation2 + $0x410] sm:$0xff]
    %v249 = vld [vmem:[#allocation2 + $0x418] sm:$0xff]
    %v250 = vld [vmem:[#allocation2 + $0x420] sm:$0xff]
    %v251 = vld [vmem:[#allocation2 + $0x428] sm:$0xff]
    %v252 = vld [vmem:[#allocation2 + $0x430] sm:$0xff]
    %v253 = vld [vmem:[#allocation2 + $0x438] sm:$0xff]
    %v254 = vld [vmem:[#allocation2 + $0x440] sm:$0xff]
    %v255 = vld [vmem:[#allocation2 + $0x448] sm:$0xff]
    %v256 = vld [vmem:[#allocation2 + $0x450] sm:$0xff]
    %v257 = vld [vmem:[#allocation2 + $0x458] sm:$0xff]
    %v258 = vld [vmem:[#allocation2 + $0x460] sm:$0xff]
    %v259 = vld [vmem:[#allocation2 + $0x468] sm:$0xff]
    %v260 = vld [vmem:[#allocation2 + $0x470] sm:$0xff]
    %v261 = vld [vmem:[#allocation2 + $0x478] sm:$0xff]
    %v262 = vld [vmem:[#allocation2 + $0x480] sm:$0xff]
    %v263 = vld [vmem:[#allocation2 + $0x488] sm:$0xff]
    %v264 = vld [vmem:[#allocation2 + $0x490] sm:$0xff]
    %v265 = vld [vmem:[#allocation2 + $0x498] sm:$0xff]
    %v266 = vld [vmem:[#allocation2 + $0x4a0] sm:$0xff]
    %v267 = vld [vmem:[#allocation2 + $0x4a8] sm:$0xff]
    %v268 = vld [vmem:[#allocation2 + $0x4b0] sm:$0xff]
    %v269 = vld [vmem:[#allocation2 + $0x4b8] sm:$0xff]
    %v270 = vld [vmem:[#allocation2 + $0x4c0] sm:$0xff]
    %v271 = vld [vmem:[#allocation2 + $0x4c8] sm:$0xff]
    %v272 = vld [vmem:[#allocation2 + $0x4d0] sm:$0xff]
    %v273 = vld [vmem:[#allocation2 + $0x4d8] sm:$0xff]
    %v274 = vld [vmem:[#allocation2 + $0x4e0] sm:$0xff]
    %v275 = vld [vmem:[#allocation2 + $0x4e8] sm:$0xff]
    %v276 = vld [vmem:[#allocation2 + $0x4f0] sm:$0xff]
    %v277 = vld [vmem:[#allocation2 + $0x4f8] sm:$0xff]
    %v278 = vld [vmem:[#allocation2 + $0x500] sm:$0xff]
    %v279 = vld [vmem:[#allocation2 + $0x508] sm:$0xff]
    %v280 = vld [vmem:[#allocation2 + $0x510] sm:$0xff]
    %v281 = vld [vmem:[#allocation2 + $0x518] sm:$0xff]
    %v282 = vld [vmem:[#allocation2 + $0x520] sm:$0xff]
    %v283 = vld [vmem:[#allocation2 + $0x528] sm:$0xff]
    %v284 = vld [vmem:[#allocation2 + $0x530] sm:$0xff]
    %v285 = vld [vmem:[#allocation2 + $0x538] sm:$0xff]
    %v286 = vld [vmem:[#allocation2 + $0x540] sm:$0xff]
    %v287 = vld [vmem:[#allocation2 + $0x548] sm:$0xff]
    %v288 = vld [vmem:[#allocation2 + $0x550] sm:$0xff]
    %v289 = vld [vmem:[#allocation2 + $0x558] sm:$0xff]
    %v290 = vld [vmem:[#allocation2 + $0x560] sm:$0xff]
    %v291 = vld [vmem:[#allocation2 + $0x568] sm:$0xff]
    %v292 = vld [vmem:[#allocation2 + $0x570] sm:$0xff]
    %v293 = vld [vmem:[#allocation2 + $0x578] sm:$0xff]
    %v294 = vld [vmem:[#allocation2 + $0x580] sm:$0xff]
    %v295 = vld [vmem:[#allocation2 + $0x588] sm:$0xff]
    %v296 = vld [vmem:[#allocation2 + $0x590] sm:$0xff]
    %v297 = vld [vmem:[#allocation2 + $0x598] sm:$0xff]
    %v298 = vld [vmem:[#allocation2 + $0x5a0] sm:$0xff]
    %v299 = vld [vmem:[#allocation2 + $0x5a8] sm:$0xff]
    %v300 = vld [vmem:[#allocation2 + $0x5b0] sm:$0xff]
    %v301 = vld [vmem:[#allocation2 + $0x5b8] sm:$0xff]
    %v302 = vld [vmem:[#allocation2 + $0x5c0] sm:$0xff]
    %v303 = vld [vmem:[#allocation2 + $0x5c8] sm:$0xff]
    %v304 = vld [vmem:[#allocation2 + $0x5d0] sm:$0xff]
    %v305 = vld [vmem:[#allocation2 + $0x5d8] sm:$0xff]
    %v306 = vld [vmem:[#allocation2 + $0x5e0] sm:$0xff]
    %v307 = vld [vmem:[#allocation2 + $0x5e8] sm:$0xff]
    %v308 = vld [vmem:[#allocation2 + $0x5f0] sm:$0xff]
    %v309 = vld [vmem:[#allocation2 + $0x5f8] sm:$0xff]
    %v310 = vld [vmem:[#allocation2 + $0x600] sm:$0xff]
    %v311 = vld [vmem:[#allocation2 + $0x608] sm:$0xff]
    %v312 = vld [vmem:[#allocation2 + $0x610] sm:$0xff]
    %v313 = vld [vmem:[#allocation2 + $0x618] sm:$0xff]
    %v314 = vld [vmem:[#allocation2 + $0x620] sm:$0xff]
    %v315 = vld [vmem:[#allocation2 + $0x628] sm:$0xff]
    %v316 = vld [vmem:[#allocation2 + $0x630] sm:$0xff]
    %v317 = vld [vmem:[#allocation2 + $0x638] sm:$0xff]
    %v318 = vld [vmem:[#allocation2 + $0x640] sm:$0xff]
    %v319 = vld [vmem:[#allocation2 + $0x648] sm:$0xff]
    %v320 = vld [vmem:[#allocation2 + $0x650] sm:$0xff]
    %v321 = vld [vmem:[#allocation2 + $0x658] sm:$0xff]
    %v322 = vld [vmem:[#allocation2 + $0x660] sm:$0xff]
    %v323 = vld [vmem:[#allocation2 + $0x668] sm:$0xff]
    %v324 = vld [vmem:[#allocation2 + $0x670] sm:$0xff]
    %v325 = vld [vmem:[#allocation2 + $0x678] sm:$0xff]
    %v326 = vld [vmem:[#allocation2 + $0x680] sm:$0xff]
    %v327 = vld [vmem:[#allocation2 + $0x688] sm:$0xff]
    %v328 = vld [vmem:[#allocation2 + $0x690] sm:$0xff]
    %v329 = vld [vmem:[#allocation2 + $0x698] sm:$0xff]
    %v330 = vld [vmem:[#allocation2 + $0x6a0] sm:$0xff]
    %v331 = vld [vmem:[#allocation2 + $0x6a8] sm:$0xff]
    %v332 = vld [vmem:[#allocation2 + $0x6b0] sm:$0xff]
    %v333 = vld [vmem:[#allocation2 + $0x6b8] sm:$0xff]
    %v334 = vld [vmem:[#allocation2 + $0x6c0] sm:$0xff]
    %v335 = vld [vmem:[#allocation2 + $0x6c8] sm:$0xff]
    %v336 = vld [vmem:[#allocation2 + $0x6d0] sm:$0xff]
    %v337 = vld [vmem:[#allocation2 + $0x6d8] sm:$0xff]
    %v338 = vld [vmem:[#allocation2 + $0x6e0] sm:$0xff]
    %v339 = vld [vmem:[#allocation2 + $0x6e8] sm:$0xff]
    %v340 = vld [vmem:[#allocation2 + $0x6f0] sm:$0xff]
    %v341 = vld [vmem:[#allocation2 + $0x6f8] sm:$0xff]
    %v342 = vld [vmem:[#allocation2 + $0x700] sm:$0xff]
    %v343 = vld [vmem:[#allocation2 + $0x708] sm:$0xff]
    %v344 = vld [vmem:[#allocation2 + $0x710] sm:$0xff]
    %v345 = vld [vmem:[#allocation2 + $0x718] sm:$0xff]
    %v346 = vld [vmem:[#allocation2 + $0x720] sm:$0xff]
    %v347 = vld [vmem:[#allocation2 + $0x728] sm:$0xff]
    %v348 = vld [vmem:[#allocation2 + $0x730] sm:$0xff]
    %v349 = vld [vmem:[#allocation2 + $0x738] sm:$0xff]
    %v350 = vld [vmem:[#allocation2 + $0x740] sm:$0xff]
    %v351 = vld [vmem:[#allocation2 + $0x748] sm:$0xff]
    %v352 = vld [vmem:[#allocation2 + $0x750] sm:$0xff]
    %v353 = vld [vmem:[#allocation2 + $0x758] sm:$0xff]
    %v354 = vld [vmem:[#allocation2 + $0x760] sm:$0xff]
    %v355 = vld [vmem:[#allocation2 + $0x768] sm:$0xff]
    %v356 = vld [vmem:[#allocation2 + $0x770] sm:$0xff]
    %v357 = vld [vmem:[#allocation2 + $0x778] sm:$0xff]
    %v358 = vld [vmem:[#allocation2 + $0x780] sm:$0xff]
    %v359 = vld [vmem:[#allocation2 + $0x788] sm:$0xff]
    %v360 = vld [vmem:[#allocation2 + $0x790] sm:$0xff]
    %v361 = vld [vmem:[#allocation2 + $0x798] sm:$0xff]
    %v362 = vld [vmem:[#allocation2 + $0x7a0] sm:$0xff]
    %v363 = vld [vmem:[#allocation2 + $0x7a8] sm:$0xff]
    %v364 = vld [vmem:[#allocation2 + $0x7b0] sm:$0xff]
    %v365 = vld [vmem:[#allocation2 + $0x7b8] sm:$0xff]
    %v366 = vld [vmem:[#allocation2 + $0x7c0] sm:$0xff]
    %v367 = vld [vmem:[#allocation2 + $0x7c8] sm:$0xff]
    %v368 = vld [vmem:[#allocation2 + $0x7d0] sm:$0xff]
    %v369 = vld [vmem:[#allocation2 + $0x7d8] sm:$0xff]
    %v370 = vld [vmem:[#allocation2 + $0x7e0] sm:$0xff]
    %v371 = vld [vmem:[#allocation2 + $0x7e8] sm:$0xff]
    %v372 = vld [vmem:[#allocation2 + $0x7f0] sm:$0xff]
    %v373 = vld [vmem:[#allocation2 + $0x7f8] sm:$0xff]
    %v374 = vld [vmem:[%s3] sm:$0xf]
    %v376 = vlaneseq
    %v377 = vshrl.u32 %v376, 7
    %v378 = vsub.s32 0, %v377
    %v379 = vrot.slane %v374, %v378
    %v380 = vlaneseq
    %v381 = vshrl.u32 %v380, 7
    %v382 = vsub.s32 1, %v381
    %v383 = vrot.slane %v374, %v382
    %v384 = vlaneseq
    %v385 = vshrl.u32 %v384, 7
    %v386 = vsub.s32 2, %v385
    %v387 = vrot.slane %v374, %v386
    %v388 = vlaneseq
    %v389 = vshrl.u32 %v388, 7
    %v390 = vsub.s32 3, %v389
    %v391 = vrot.slane %v374, %v390
    %v652 = vunpack.c.l.b16 %v118
    %v653 = vunpack.c.h.b16 %v118
    %v654 = vunpack.c.l.b16 %v119
    %v655 = vunpack.c.h.b16 %v119
    %v656 = vunpack.c.l.b16 %v120
    %v657 = vunpack.c.h.b16 %v120
    %v658 = vunpack.c.l.b16 %v121
    %v659 = vunpack.c.h.b16 %v121
    %v660 = vunpack.c.l.b16 %v122
    %v661 = vunpack.c.h.b16 %v122
    %v662 = vunpack.c.l.b16 %v123
    %v663 = vunpack.c.h.b16 %v123
    %v664 = vunpack.c.l.b16 %v124
    %v665 = vunpack.c.h.b16 %v124
    %v666 = vunpack.c.l.b16 %v125
    %v667 = vunpack.c.h.b16 %v125
    %v668 = vunpack.c.l.b16 %v126
    %v669 = vunpack.c.h.b16 %v126
    %v670 = vunpack.c.l.b16 %v127
    %v671 = vunpack.c.h.b16 %v127
    %v672 = vunpack.c.l.b16 %v128
    %v673 = vunpack.c.h.b16 %v128
    %v674 = vunpack.c.l.b16 %v129
    %v675 = vunpack.c.h.b16 %v129
    %v676 = vunpack.c.l.b16 %v130
    %v677 = vunpack.c.h.b16 %v130
    %v678 = vunpack.c.l.b16 %v131
    %v679 = vunpack.c.h.b16 %v131
    %v680 = vunpack.c.l.b16 %v132
    %v681 = vunpack.c.h.b16 %v132
    %v682 = vunpack.c.l.b16 %v133
    %v683 = vunpack.c.h.b16 %v133
    %v684 = vunpack.c.l.b16 %v134
    %v685 = vunpack.c.h.b16 %v134
    %v686 = vunpack.c.l.b16 %v135
    %v687 = vunpack.c.h.b16 %v135
    %v688 = vunpack.c.l.b16 %v136
    %v689 = vunpack.c.h.b16 %v136
    %v690 = vunpack.c.l.b16 %v137
    %v691 = vunpack.c.h.b16 %v137
    %v692 = vunpack.c.l.b16 %v138
    %v693 = vunpack.c.h.b16 %v138
    %v694 = vunpack.c.l.b16 %v139
    %v695 = vunpack.c.h.b16 %v139
    %v696 = vunpack.c.l.b16 %v140
    %v697 = vunpack.c.h.b16 %v140
    %v698 = vunpack.c.l.b16 %v141
    %v699 = vunpack.c.h.b16 %v141
    %v700 = vunpack.c.l.b16 %v142
    %v701 = vunpack.c.h.b16 %v142
    %v702 = vunpack.c.l.b16 %v143
    %v703 = vunpack.c.h.b16 %v143
    %v704 = vunpack.c.l.b16 %v144
    %v705 = vunpack.c.h.b16 %v144
    %v706 = vunpack.c.l.b16 %v145
    %v707 = vunpack.c.h.b16 %v145
    %v708 = vunpack.c.l.b16 %v146
    %v709 = vunpack.c.h.b16 %v146
    %v710 = vunpack.c.l.b16 %v147
    %v711 = vunpack.c.h.b16 %v147
    %v712 = vunpack.c.l.b16 %v148
    %v713 = vunpack.c.h.b16 %v148
    %v714 = vunpack.c.l.b16 %v149
    %v715 = vunpack.c.h.b16 %v149
    %v716 = vunpack.c.l.b16 %v150
    %v717 = vunpack.c.h.b16 %v150
    %v718 = vunpack.c.l.b16 %v151
    %v719 = vunpack.c.h.b16 %v151
    %v720 = vunpack.c.l.b16 %v152
    %v721 = vunpack.c.h.b16 %v152
    %v722 = vunpack.c.l.b16 %v153
    %v723 = vunpack.c.h.b16 %v153
    %v724 = vunpack.c.l.b16 %v154
    %v725 = vunpack.c.h.b16 %v154
    %v726 = vunpack.c.l.b16 %v155
    %v727 = vunpack.c.h.b16 %v155
    %v728 = vunpack.c.l.b16 %v156
    %v729 = vunpack.c.h.b16 %v156
    %v730 = vunpack.c.l.b16 %v157
    %v731 = vunpack.c.h.b16 %v157
    %v732 = vunpack.c.l.b16 %v158
    %v733 = vunpack.c.h.b16 %v158
    %v734 = vunpack.c.l.b16 %v159
    %v735 = vunpack.c.h.b16 %v159
    %v736 = vunpack.c.l.b16 %v160
    %v737 = vunpack.c.h.b16 %v160
    %v738 = vunpack.c.l.b16 %v161
    %v739 = vunpack.c.h.b16 %v161
    %v740 = vunpack.c.l.b16 %v162
    %v741 = vunpack.c.h.b16 %v162
    %v742 = vunpack.c.l.b16 %v163
    %v743 = vunpack.c.h.b16 %v163
    %v744 = vunpack.c.l.b16 %v164
    %v745 = vunpack.c.h.b16 %v164
    %v746 = vunpack.c.l.b16 %v165
    %v747 = vunpack.c.h.b16 %v165
    %v748 = vunpack.c.l.b16 %v166
    %v749 = vunpack.c.h.b16 %v166
    %v750 = vunpack.c.l.b16 %v167
    %v751 = vunpack.c.h.b16 %v167
    %v752 = vunpack.c.l.b16 %v168
    %v753 = vunpack.c.h.b16 %v168
    %v754 = vunpack.c.l.b16 %v169
    %v755 = vunpack.c.h.b16 %v169
    %v756 = vunpack.c.l.b16 %v170
    %v757 = vunpack.c.h.b16 %v170
    %v758 = vunpack.c.l.b16 %v171
    %v759 = vunpack.c.h.b16 %v171
    %v760 = vunpack.c.l.b16 %v172
    %v761 = vunpack.c.h.b16 %v172
    %v762 = vunpack.c.l.b16 %v173
    %v763 = vunpack.c.h.b16 %v173
    %v764 = vunpack.c.l.b16 %v174
    %v765 = vunpack.c.h.b16 %v174
    %v766 = vunpack.c.l.b16 %v175
    %v767 = vunpack.c.h.b16 %v175
    %v768 = vunpack.c.l.b16 %v176
    %v769 = vunpack.c.h.b16 %v176
    %v770 = vunpack.c.l.b16 %v177
    %v771 = vunpack.c.h.b16 %v177
    %v772 = vunpack.c.l.b16 %v178
    %v773 = vunpack.c.h.b16 %v178
    %v774 = vunpack.c.l.b16 %v179
    %v775 = vunpack.c.h.b16 %v179
    %v776 = vunpack.c.l.b16 %v180
    %v777 = vunpack.c.h.b16 %v180
    %v778 = vunpack.c.l.b16 %v181
    %v779 = vunpack.c.h.b16 %v181
    %v780 = vunpack.c.l.b16 %v182
    %v781 = vunpack.c.h.b16 %v182
    %v782 = vunpack.c.l.b16 %v183
    %v783 = vunpack.c.h.b16 %v183
    %v784 = vunpack.c.l.b16 %v184
    %v785 = vunpack.c.h.b16 %v184
    %v786 = vunpack.c.l.b16 %v185
    %v787 = vunpack.c.h.b16 %v185
    %v788 = vunpack.c.l.b16 %v186
    %v789 = vunpack.c.h.b16 %v186
    %v790 = vunpack.c.l.b16 %v187
    %v791 = vunpack.c.h.b16 %v187
    %v792 = vunpack.c.l.b16 %v188
    %v793 = vunpack.c.h.b16 %v188
    %v794 = vunpack.c.l.b16 %v189
    %v795 = vunpack.c.h.b16 %v189
    %v796 = vunpack.c.l.b16 %v190
    %v797 = vunpack.c.h.b16 %v190
    %v798 = vunpack.c.l.b16 %v191
    %v799 = vunpack.c.h.b16 %v191
    %v800 = vunpack.c.l.b16 %v192
    %v801 = vunpack.c.h.b16 %v192
    %v802 = vunpack.c.l.b16 %v193
    %v803 = vunpack.c.h.b16 %v193
    %v804 = vunpack.c.l.b16 %v194
    %v805 = vunpack.c.h.b16 %v194
    %v806 = vunpack.c.l.b16 %v195
    %v807 = vunpack.c.h.b16 %v195
    %v808 = vunpack.c.l.b16 %v196
    %v809 = vunpack.c.h.b16 %v196
    %v810 = vunpack.c.l.b16 %v197
    %v811 = vunpack.c.h.b16 %v197
    %v812 = vunpack.c.l.b16 %v198
    %v813 = vunpack.c.h.b16 %v198
    %v814 = vunpack.c.l.b16 %v199
    %v815 = vunpack.c.h.b16 %v199
    %v816 = vunpack.c.l.b16 %v200
    %v817 = vunpack.c.h.b16 %v200
    %v818 = vunpack.c.l.b16 %v201
    %v819 = vunpack.c.h.b16 %v201
    %v820 = vunpack.c.l.b16 %v202
    %v821 = vunpack.c.h.b16 %v202
    %v822 = vunpack.c.l.b16 %v203
    %v823 = vunpack.c.h.b16 %v203
    %v824 = vunpack.c.l.b16 %v204
    %v825 = vunpack.c.h.b16 %v204
    %v826 = vunpack.c.l.b16 %v205
    %v827 = vunpack.c.h.b16 %v205
    %v828 = vunpack.c.l.b16 %v206
    %v829 = vunpack.c.h.b16 %v206
    %v830 = vunpack.c.l.b16 %v207
    %v831 = vunpack.c.h.b16 %v207
    %v832 = vunpack.c.l.b16 %v208
    %v833 = vunpack.c.h.b16 %v208
    %v834 = vunpack.c.l.b16 %v209
    %v835 = vunpack.c.h.b16 %v209
    %v836 = vunpack.c.l.b16 %v210
    %v837 = vunpack.c.h.b16 %v210
    %v838 = vunpack.c.l.b16 %v211
    %v839 = vunpack.c.h.b16 %v211
    %v840 = vunpack.c.l.b16 %v212
    %v841 = vunpack.c.h.b16 %v212
    %v842 = vunpack.c.l.b16 %v213
    %v843 = vunpack.c.h.b16 %v213
    %v844 = vunpack.c.l.b16 %v214
    %v845 = vunpack.c.h.b16 %v214
    %v846 = vunpack.c.l.b16 %v215
    %v847 = vunpack.c.h.b16 %v215
    %v848 = vunpack.c.l.b16 %v216
    %v849 = vunpack.c.h.b16 %v216
    %v850 = vunpack.c.l.b16 %v217
    %v851 = vunpack.c.h.b16 %v217
    %v852 = vunpack.c.l.b16 %v218
    %v853 = vunpack.c.h.b16 %v218
    %v854 = vunpack.c.l.b16 %v219
    %v855 = vunpack.c.h.b16 %v219
    %v856 = vunpack.c.l.b16 %v220
    %v857 = vunpack.c.h.b16 %v220
    %v858 = vunpack.c.l.b16 %v221
    %v859 = vunpack.c.h.b16 %v221
    %v860 = vunpack.c.l.b16 %v222
    %v861 = vunpack.c.h.b16 %v222
    %v862 = vunpack.c.l.b16 %v223
    %v863 = vunpack.c.h.b16 %v223
    %v864 = vunpack.c.l.b16 %v224
    %v865 = vunpack.c.h.b16 %v224
    %v866 = vunpack.c.l.b16 %v225
    %v867 = vunpack.c.h.b16 %v225
    %v868 = vunpack.c.l.b16 %v226
    %v869 = vunpack.c.h.b16 %v226
    %v870 = vunpack.c.l.b16 %v227
    %v871 = vunpack.c.h.b16 %v227
    %v872 = vunpack.c.l.b16 %v228
    %v873 = vunpack.c.h.b16 %v228
    %v874 = vunpack.c.l.b16 %v229
    %v875 = vunpack.c.h.b16 %v229
    %v876 = vunpack.c.l.b16 %v230
    %v877 = vunpack.c.h.b16 %v230
    %v878 = vunpack.c.l.b16 %v231
    %v879 = vunpack.c.h.b16 %v231
    %v880 = vunpack.c.l.b16 %v232
    %v881 = vunpack.c.h.b16 %v232
    %v882 = vunpack.c.l.b16 %v233
    %v883 = vunpack.c.h.b16 %v233
    %v884 = vunpack.c.l.b16 %v234
    %v885 = vunpack.c.h.b16 %v234
    %v886 = vunpack.c.l.b16 %v235
    %v887 = vunpack.c.h.b16 %v235
    %v888 = vunpack.c.l.b16 %v236
    %v889 = vunpack.c.h.b16 %v236
    %v890 = vunpack.c.l.b16 %v237
    %v891 = vunpack.c.h.b16 %v237
    %v892 = vunpack.c.l.b16 %v238
    %v893 = vunpack.c.h.b16 %v238
    %v894 = vunpack.c.l.b16 %v239
    %v895 = vunpack.c.h.b16 %v239
    %v896 = vunpack.c.l.b16 %v240
    %v897 = vunpack.c.h.b16 %v240
    %v898 = vunpack.c.l.b16 %v241
    %v899 = vunpack.c.h.b16 %v241
    %v900 = vunpack.c.l.b16 %v242
    %v901 = vunpack.c.h.b16 %v242
    %v902 = vunpack.c.l.b16 %v243
    %v903 = vunpack.c.h.b16 %v243
    %v904 = vunpack.c.l.b16 %v244
    %v905 = vunpack.c.h.b16 %v244
    %v906 = vunpack.c.l.b16 %v245
    %v907 = vunpack.c.h.b16 %v245
    %v908 = vunpack.c.l.b16 %v246
    %v909 = vunpack.c.h.b16 %v246
    %v910 = vunpack.c.l.b16 %v247
    %v911 = vunpack.c.h.b16 %v247
    %v912 = vunpack.c.l.b16 %v248
    %v913 = vunpack.c.h.b16 %v248
    %v914 = vunpack.c.l.b16 %v249
    %v915 = vunpack.c.h.b16 %v249
    %v916 = vunpack.c.l.b16 %v250
    %v917 = vunpack.c.h.b16 %v250
    %v918 = vunpack.c.l.b16 %v251
    %v919 = vunpack.c.h.b16 %v251
    %v920 = vunpack.c.l.b16 %v252
    %v921 = vunpack.c.h.b16 %v252
    %v922 = vunpack.c.l.b16 %v253
    %v923 = vunpack.c.h.b16 %v253
    %v924 = vunpack.c.l.b16 %v254
    %v925 = vunpack.c.h.b16 %v254
    %v926 = vunpack.c.l.b16 %v255
    %v927 = vunpack.c.h.b16 %v255
    %v928 = vunpack.c.l.b16 %v256
    %v929 = vunpack.c.h.b16 %v256
    %v930 = vunpack.c.l.b16 %v257
    %v931 = vunpack.c.h.b16 %v257
    %v932 = vunpack.c.l.b16 %v258
    %v933 = vunpack.c.h.b16 %v258
    %v934 = vunpack.c.l.b16 %v259
    %v935 = vunpack.c.h.b16 %v259
    %v936 = vunpack.c.l.b16 %v260
    %v937 = vunpack.c.h.b16 %v260
    %v938 = vunpack.c.l.b16 %v261
    %v939 = vunpack.c.h.b16 %v261
    %v940 = vunpack.c.l.b16 %v262
    %v941 = vunpack.c.h.b16 %v262
    %v942 = vunpack.c.l.b16 %v263
    %v943 = vunpack.c.h.b16 %v263
    %v944 = vunpack.c.l.b16 %v264
    %v945 = vunpack.c.h.b16 %v264
    %v946 = vunpack.c.l.b16 %v265
    %v947 = vunpack.c.h.b16 %v265
    %v948 = vunpack.c.l.b16 %v266
    %v949 = vunpack.c.h.b16 %v266
    %v950 = vunpack.c.l.b16 %v267
    %v951 = vunpack.c.h.b16 %v267
    %v952 = vunpack.c.l.b16 %v268
    %v953 = vunpack.c.h.b16 %v268
    %v954 = vunpack.c.l.b16 %v269
    %v955 = vunpack.c.h.b16 %v269
    %v956 = vunpack.c.l.b16 %v270
    %v957 = vunpack.c.h.b16 %v270
    %v958 = vunpack.c.l.b16 %v271
    %v959 = vunpack.c.h.b16 %v271
    %v960 = vunpack.c.l.b16 %v272
    %v961 = vunpack.c.h.b16 %v272
    %v962 = vunpack.c.l.b16 %v273
    %v963 = vunpack.c.h.b16 %v273
    %v964 = vunpack.c.l.b16 %v274
    %v965 = vunpack.c.h.b16 %v274
    %v966 = vunpack.c.l.b16 %v275
    %v967 = vunpack.c.h.b16 %v275
    %v968 = vunpack.c.l.b16 %v276
    %v969 = vunpack.c.h.b16 %v276
    %v970 = vunpack.c.l.b16 %v277
    %v971 = vunpack.c.h.b16 %v277
    %v972 = vunpack.c.l.b16 %v278
    %v973 = vunpack.c.h.b16 %v278
    %v974 = vunpack.c.l.b16 %v279
    %v975 = vunpack.c.h.b16 %v279
    %v976 = vunpack.c.l.b16 %v280
    %v977 = vunpack.c.h.b16 %v280
    %v978 = vunpack.c.l.b16 %v281
    %v979 = vunpack.c.h.b16 %v281
    %v980 = vunpack.c.l.b16 %v282
    %v981 = vunpack.c.h.b16 %v282
    %v982 = vunpack.c.l.b16 %v283
    %v983 = vunpack.c.h.b16 %v283
    %v984 = vunpack.c.l.b16 %v284
    %v985 = vunpack.c.h.b16 %v284
    %v986 = vunpack.c.l.b16 %v285
    %v987 = vunpack.c.h.b16 %v285
    %v988 = vunpack.c.l.b16 %v286
    %v989 = vunpack.c.h.b16 %v286
    %v990 = vunpack.c.l.b16 %v287
    %v991 = vunpack.c.h.b16 %v287
    %v992 = vunpack.c.l.b16 %v288
    %v993 = vunpack.c.h.b16 %v288
    %v994 = vunpack.c.l.b16 %v289
    %v995 = vunpack.c.h.b16 %v289
    %v996 = vunpack.c.l.b16 %v290
    %v997 = vunpack.c.h.b16 %v290
    %v998 = vunpack.c.l.b16 %v291
    %v999 = vunpack.c.h.b16 %v291
    %v1000 = vunpack.c.l.b16 %v292
    %v1001 = vunpack.c.h.b16 %v292
    %v1002 = vunpack.c.l.b16 %v293
    %v1003 = vunpack.c.h.b16 %v293
    %v1004 = vunpack.c.l.b16 %v294
    %v1005 = vunpack.c.h.b16 %v294
    %v1006 = vunpack.c.l.b16 %v295
    %v1007 = vunpack.c.h.b16 %v295
    %v1008 = vunpack.c.l.b16 %v296
    %v1009 = vunpack.c.h.b16 %v296
    %v1010 = vunpack.c.l.b16 %v297
    %v1011 = vunpack.c.h.b16 %v297
    %v1012 = vunpack.c.l.b16 %v298
    %v1013 = vunpack.c.h.b16 %v298
    %v1014 = vunpack.c.l.b16 %v299
    %v1015 = vunpack.c.h.b16 %v299
    %v1016 = vunpack.c.l.b16 %v300
    %v1017 = vunpack.c.h.b16 %v300
    %v1018 = vunpack.c.l.b16 %v301
    %v1019 = vunpack.c.h.b16 %v301
    %v1020 = vunpack.c.l.b16 %v302
    %v1021 = vunpack.c.h.b16 %v302
    %v1022 = vunpack.c.l.b16 %v303
    %v1023 = vunpack.c.h.b16 %v303
    %v1024 = vunpack.c.l.b16 %v304
    %v1025 = vunpack.c.h.b16 %v304
    %v1026 = vunpack.c.l.b16 %v305
    %v1027 = vunpack.c.h.b16 %v305
    %v1028 = vunpack.c.l.b16 %v306
    %v1029 = vunpack.c.h.b16 %v306
    %v1030 = vunpack.c.l.b16 %v307
    %v1031 = vunpack.c.h.b16 %v307
    %v1032 = vunpack.c.l.b16 %v308
    %v1033 = vunpack.c.h.b16 %v308
    %v1034 = vunpack.c.l.b16 %v309
    %v1035 = vunpack.c.h.b16 %v309
    %v1036 = vunpack.c.l.b16 %v310
    %v1037 = vunpack.c.h.b16 %v310
    %v1038 = vunpack.c.l.b16 %v311
    %v1039 = vunpack.c.h.b16 %v311
    %v1040 = vunpack.c.l.b16 %v312
    %v1041 = vunpack.c.h.b16 %v312
    %v1042 = vunpack.c.l.b16 %v313
    %v1043 = vunpack.c.h.b16 %v313
    %v1044 = vunpack.c.l.b16 %v314
    %v1045 = vunpack.c.h.b16 %v314
    %v1046 = vunpack.c.l.b16 %v315
    %v1047 = vunpack.c.h.b16 %v315
    %v1048 = vunpack.c.l.b16 %v316
    %v1049 = vunpack.c.h.b16 %v316
    %v1050 = vunpack.c.l.b16 %v317
    %v1051 = vunpack.c.h.b16 %v317
    %v1052 = vunpack.c.l.b16 %v318
    %v1053 = vunpack.c.h.b16 %v318
    %v1054 = vunpack.c.l.b16 %v319
    %v1055 = vunpack.c.h.b16 %v319
    %v1056 = vunpack.c.l.b16 %v320
    %v1057 = vunpack.c.h.b16 %v320
    %v1058 = vunpack.c.l.b16 %v321
    %v1059 = vunpack.c.h.b16 %v321
    %v1060 = vunpack.c.l.b16 %v322
    %v1061 = vunpack.c.h.b16 %v322
    %v1062 = vunpack.c.l.b16 %v323
    %v1063 = vunpack.c.h.b16 %v323
    %v1064 = vunpack.c.l.b16 %v324
    %v1065 = vunpack.c.h.b16 %v324
    %v1066 = vunpack.c.l.b16 %v325
    %v1067 = vunpack.c.h.b16 %v325
    %v1068 = vunpack.c.l.b16 %v326
    %v1069 = vunpack.c.h.b16 %v326
    %v1070 = vunpack.c.l.b16 %v327
    %v1071 = vunpack.c.h.b16 %v327
    %v1072 = vunpack.c.l.b16 %v328
    %v1073 = vunpack.c.h.b16 %v328
    %v1074 = vunpack.c.l.b16 %v329
    %v1075 = vunpack.c.h.b16 %v329
    %v1076 = vunpack.c.l.b16 %v330
    %v1077 = vunpack.c.h.b16 %v330
    %v1078 = vunpack.c.l.b16 %v331
    %v1079 = vunpack.c.h.b16 %v331
    %v1080 = vunpack.c.l.b16 %v332
    %v1081 = vunpack.c.h.b16 %v332
    %v1082 = vunpack.c.l.b16 %v333
    %v1083 = vunpack.c.h.b16 %v333
    %v1084 = vunpack.c.l.b16 %v334
    %v1085 = vunpack.c.h.b16 %v334
    %v1086 = vunpack.c.l.b16 %v335
    %v1087 = vunpack.c.h.b16 %v335
    %v1088 = vunpack.c.l.b16 %v336
    %v1089 = vunpack.c.h.b16 %v336
    %v1090 = vunpack.c.l.b16 %v337
    %v1091 = vunpack.c.h.b16 %v337
    %v1092 = vunpack.c.l.b16 %v338
    %v1093 = vunpack.c.h.b16 %v338
    %v1094 = vunpack.c.l.b16 %v339
    %v1095 = vunpack.c.h.b16 %v339
    %v1096 = vunpack.c.l.b16 %v340
    %v1097 = vunpack.c.h.b16 %v340
    %v1098 = vunpack.c.l.b16 %v341
    %v1099 = vunpack.c.h.b16 %v341
    %v1100 = vunpack.c.l.b16 %v342
    %v1101 = vunpack.c.h.b16 %v342
    %v1102 = vunpack.c.l.b16 %v343
    %v1103 = vunpack.c.h.b16 %v343
    %v1104 = vunpack.c.l.b16 %v344
    %v1105 = vunpack.c.h.b16 %v344
    %v1106 = vunpack.c.l.b16 %v345
    %v1107 = vunpack.c.h.b16 %v345
    %v1108 = vunpack.c.l.b16 %v346
    %v1109 = vunpack.c.h.b16 %v346
    %v1110 = vunpack.c.l.b16 %v347
    %v1111 = vunpack.c.h.b16 %v347
    %v1112 = vunpack.c.l.b16 %v348
    %v1113 = vunpack.c.h.b16 %v348
    %v1114 = vunpack.c.l.b16 %v349
    %v1115 = vunpack.c.h.b16 %v349
    %v1116 = vunpack.c.l.b16 %v350
    %v1117 = vunpack.c.h.b16 %v350
    %v1118 = vunpack.c.l.b16 %v351
    %v1119 = vunpack.c.h.b16 %v351
    %v1120 = vunpack.c.l.b16 %v352
    %v1121 = vunpack.c.h.b16 %v352
    %v1122 = vunpack.c.l.b16 %v353
    %v1123 = vunpack.c.h.b16 %v353
    %v1124 = vunpack.c.l.b16 %v354
    %v1125 = vunpack.c.h.b16 %v354
    %v1126 = vunpack.c.l.b16 %v355
    %v1127 = vunpack.c.h.b16 %v355
    %v1128 = vunpack.c.l.b16 %v356
    %v1129 = vunpack.c.h.b16 %v356
    %v1130 = vunpack.c.l.b16 %v357
    %v1131 = vunpack.c.h.b16 %v357
    %v1132 = vunpack.c.l.b16 %v358
    %v1133 = vunpack.c.h.b16 %v358
    %v1134 = vunpack.c.l.b16 %v359
    %v1135 = vunpack.c.h.b16 %v359
    %v1136 = vunpack.c.l.b16 %v360
    %v1137 = vunpack.c.h.b16 %v360
    %v1138 = vunpack.c.l.b16 %v361
    %v1139 = vunpack.c.h.b16 %v361
    %v1140 = vunpack.c.l.b16 %v362
    %v1141 = vunpack.c.h.b16 %v362
    %v1142 = vunpack.c.l.b16 %v363
    %v1143 = vunpack.c.h.b16 %v363
    %v1144 = vunpack.c.l.b16 %v364
    %v1145 = vunpack.c.h.b16 %v364
    %v1146 = vunpack.c.l.b16 %v365
    %v1147 = vunpack.c.h.b16 %v365
    %v1148 = vunpack.c.l.b16 %v366
    %v1149 = vunpack.c.h.b16 %v366
    %v1150 = vunpack.c.l.b16 %v367
    %v1151 = vunpack.c.h.b16 %v367
    %v1152 = vunpack.c.l.b16 %v368
    %v1153 = vunpack.c.h.b16 %v368
    %v1154 = vunpack.c.l.b16 %v369
    %v1155 = vunpack.c.h.b16 %v369
    %v1156 = vunpack.c.l.b16 %v370
    %v1157 = vunpack.c.h.b16 %v370
    %v1158 = vunpack.c.l.b16 %v371
    %v1159 = vunpack.c.h.b16 %v371
    %v1160 = vunpack.c.l.b16 %v372
    %v1161 = vunpack.c.h.b16 %v372
    %v1162 = vunpack.c.l.b16 %v373
    %v1163 = vunpack.c.h.b16 %v373
    %v1164 = vpack.c.b16 %v656, %v652
    %v1165 = vpack.c.b16 %v657, %v653
    %v1166 = vpack.c.b16 %v658, %v654
    %v1167 = vpack.c.b16 %v659, %v655
    %v1168 = vpack.c.b16 %v664, %v660
    %v1169 = vpack.c.b16 %v665, %v661
    %v1170 = vpack.c.b16 %v666, %v662
    %v1171 = vpack.c.b16 %v667, %v663
    %v1172 = vpack.c.b16 %v672, %v668
    %v1173 = vpack.c.b16 %v673, %v669
    %v1174 = vpack.c.b16 %v674, %v670
    %v1175 = vpack.c.b16 %v675, %v671
    %v1176 = vpack.c.b16 %v680, %v676
    %v1177 = vpack.c.b16 %v681, %v677
    %v1178 = vpack.c.b16 %v682, %v678
    %v1179 = vpack.c.b16 %v683, %v679
    %v1180 = vpack.c.b16 %v688, %v684
    %v1181 = vpack.c.b16 %v689, %v685
    %v1182 = vpack.c.b16 %v690, %v686
    %v1183 = vpack.c.b16 %v691, %v687
    %v1184 = vpack.c.b16 %v696, %v692
    %v1185 = vpack.c.b16 %v697, %v693
    %v1186 = vpack.c.b16 %v698, %v694
    %v1187 = vpack.c.b16 %v699, %v695
    %v1188 = vpack.c.b16 %v704, %v700
    %v1189 = vpack.c.b16 %v705, %v701
    %v1190 = vpack.c.b16 %v706, %v702
    %v1191 = vpack.c.b16 %v707, %v703
    %v1192 = vpack.c.b16 %v712, %v708
    %v1193 = vpack.c.b16 %v713, %v709
    %v1194 = vpack.c.b16 %v714, %v710
    %v1195 = vpack.c.b16 %v715, %v711
    %v1196 = vpack.c.b16 %v720, %v716
    %v1197 = vpack.c.b16 %v721, %v717
    %v1198 = vpack.c.b16 %v722, %v718
    %v1199 = vpack.c.b16 %v723, %v719
    %v1200 = vpack.c.b16 %v728, %v724
    %v1201 = vpack.c.b16 %v729, %v725
    %v1202 = vpack.c.b16 %v730, %v726
    %v1203 = vpack.c.b16 %v731, %v727
    %v1204 = vpack.c.b16 %v736, %v732
    %v1205 = vpack.c.b16 %v737, %v733
    %v1206 = vpack.c.b16 %v738, %v734
    %v1207 = vpack.c.b16 %v739, %v735
    %v1208 = vpack.c.b16 %v744, %v740
    %v1209 = vpack.c.b16 %v745, %v741
    %v1210 = vpack.c.b16 %v746, %v742
    %v1211 = vpack.c.b16 %v747, %v743
    %v1212 = vpack.c.b16 %v752, %v748
    %v1213 = vpack.c.b16 %v753, %v749
    %v1214 = vpack.c.b16 %v754, %v750
    %v1215 = vpack.c.b16 %v755, %v751
    %v1216 = vpack.c.b16 %v760, %v756
    %v1217 = vpack.c.b16 %v761, %v757
    %v1218 = vpack.c.b16 %v762, %v758
    %v1219 = vpack.c.b16 %v763, %v759
    %v1220 = vpack.c.b16 %v768, %v764
    %v1221 = vpack.c.b16 %v769, %v765
    %v1222 = vpack.c.b16 %v770, %v766
    %v1223 = vpack.c.b16 %v771, %v767
    %v1224 = vpack.c.b16 %v776, %v772
    %v1225 = vpack.c.b16 %v777, %v773
    %v1226 = vpack.c.b16 %v778, %v774
    %v1227 = vpack.c.b16 %v779, %v775
    %v1228 = vpack.c.b16 %v784, %v780
    %v1229 = vpack.c.b16 %v785, %v781
    %v1230 = vpack.c.b16 %v786, %v782
    %v1231 = vpack.c.b16 %v787, %v783
    %v1232 = vpack.c.b16 %v792, %v788
    %v1233 = vpack.c.b16 %v793, %v789
    %v1234 = vpack.c.b16 %v794, %v790
    %v1235 = vpack.c.b16 %v795, %v791
    %v1236 = vpack.c.b16 %v800, %v796
    %v1237 = vpack.c.b16 %v801, %v797
    %v1238 = vpack.c.b16 %v802, %v798
    %v1239 = vpack.c.b16 %v803, %v799
    %v1240 = vpack.c.b16 %v808, %v804
    %v1241 = vpack.c.b16 %v809, %v805
    %v1242 = vpack.c.b16 %v810, %v806
    %v1243 = vpack.c.b16 %v811, %v807
    %v1244 = vpack.c.b16 %v816, %v812
    %v1245 = vpack.c.b16 %v817, %v813
    %v1246 = vpack.c.b16 %v818, %v814
    %v1247 = vpack.c.b16 %v819, %v815
    %v1248 = vpack.c.b16 %v824, %v820
    %v1249 = vpack.c.b16 %v825, %v821
    %v1250 = vpack.c.b16 %v826, %v822
    %v1251 = vpack.c.b16 %v827, %v823
    %v1252 = vpack.c.b16 %v832, %v828
    %v1253 = vpack.c.b16 %v833, %v829
    %v1254 = vpack.c.b16 %v834, %v830
    %v1255 = vpack.c.b16 %v835, %v831
    %v1256 = vpack.c.b16 %v840, %v836
    %v1257 = vpack.c.b16 %v841, %v837
    %v1258 = vpack.c.b16 %v842, %v838
    %v1259 = vpack.c.b16 %v843, %v839
    %v1260 = vpack.c.b16 %v848, %v844
    %v1261 = vpack.c.b16 %v849, %v845
    %v1262 = vpack.c.b16 %v850, %v846
    %v1263 = vpack.c.b16 %v851, %v847
    %v1264 = vpack.c.b16 %v856, %v852
    %v1265 = vpack.c.b16 %v857, %v853
    %v1266 = vpack.c.b16 %v858, %v854
    %v1267 = vpack.c.b16 %v859, %v855
    %v1268 = vpack.c.b16 %v864, %v860
    %v1269 = vpack.c.b16 %v865, %v861
    %v1270 = vpack.c.b16 %v866, %v862
    %v1271 = vpack.c.b16 %v867, %v863
    %v1272 = vpack.c.b16 %v872, %v868
    %v1273 = vpack.c.b16 %v873, %v869
    %v1274 = vpack.c.b16 %v874, %v870
    %v1275 = vpack.c.b16 %v875, %v871
    %v1276 = vpack.c.b16 %v880, %v876
    %v1277 = vpack.c.b16 %v881, %v877
    %v1278 = vpack.c.b16 %v882, %v878
    %v1279 = vpack.c.b16 %v883, %v879
    %v1280 = vpack.c.b16 %v888, %v884
    %v1281 = vpack.c.b16 %v889, %v885
    %v1282 = vpack.c.b16 %v890, %v886
    %v1283 = vpack.c.b16 %v891, %v887
    %v1284 = vpack.c.b16 %v896, %v892
    %v1285 = vpack.c.b16 %v897, %v893
    %v1286 = vpack.c.b16 %v898, %v894
    %v1287 = vpack.c.b16 %v899, %v895
    %v1288 = vpack.c.b16 %v904, %v900
    %v1289 = vpack.c.b16 %v905, %v901
    %v1290 = vpack.c.b16 %v906, %v902
    %v1291 = vpack.c.b16 %v907, %v903
    %v1292 = vpack.c.b16 %v912, %v908
    %v1293 = vpack.c.b16 %v913, %v909
    %v1294 = vpack.c.b16 %v914, %v910
    %v1295 = vpack.c.b16 %v915, %v911
    %v1296 = vpack.c.b16 %v920, %v916
    %v1297 = vpack.c.b16 %v921, %v917
    %v1298 = vpack.c.b16 %v922, %v918
    %v1299 = vpack.c.b16 %v923, %v919
    %v1300 = vpack.c.b16 %v928, %v924
    %v1301 = vpack.c.b16 %v929, %v925
    %v1302 = vpack.c.b16 %v930, %v926
    %v1303 = vpack.c.b16 %v931, %v927
    %v1304 = vpack.c.b16 %v936, %v932
    %v1305 = vpack.c.b16 %v937, %v933
    %v1306 = vpack.c.b16 %v938, %v934
    %v1307 = vpack.c.b16 %v939, %v935
    %v1308 = vpack.c.b16 %v944, %v940
    %v1309 = vpack.c.b16 %v945, %v941
    %v1310 = vpack.c.b16 %v946, %v942
    %v1311 = vpack.c.b16 %v947, %v943
    %v1312 = vpack.c.b16 %v952, %v948
    %v1313 = vpack.c.b16 %v953, %v949
    %v1314 = vpack.c.b16 %v954, %v950
    %v1315 = vpack.c.b16 %v955, %v951
    %v1316 = vpack.c.b16 %v960, %v956
    %v1317 = vpack.c.b16 %v961, %v957
    %v1318 = vpack.c.b16 %v962, %v958
    %v1319 = vpack.c.b16 %v963, %v959
    %v1320 = vpack.c.b16 %v968, %v964
    %v1321 = vpack.c.b16 %v969, %v965
    %v1322 = vpack.c.b16 %v970, %v966
    %v1323 = vpack.c.b16 %v971, %v967
    %v1324 = vpack.c.b16 %v976, %v972
    %v1325 = vpack.c.b16 %v977, %v973
    %v1326 = vpack.c.b16 %v978, %v974
    %v1327 = vpack.c.b16 %v979, %v975
    %v1328 = vpack.c.b16 %v984, %v980
    %v1329 = vpack.c.b16 %v985, %v981
    %v1330 = vpack.c.b16 %v986, %v982
    %v1331 = vpack.c.b16 %v987, %v983
    %v1332 = vpack.c.b16 %v992, %v988
    %v1333 = vpack.c.b16 %v993, %v989
    %v1334 = vpack.c.b16 %v994, %v990
    %v1335 = vpack.c.b16 %v995, %v991
    %v1336 = vpack.c.b16 %v1000, %v996
    %v1337 = vpack.c.b16 %v1001, %v997
    %v1338 = vpack.c.b16 %v1002, %v998
    %v1339 = vpack.c.b16 %v1003, %v999
    %v1340 = vpack.c.b16 %v1008, %v1004
    %v1341 = vpack.c.b16 %v1009, %v1005
    %v1342 = vpack.c.b16 %v1010, %v1006
    %v1343 = vpack.c.b16 %v1011, %v1007
    %v1344 = vpack.c.b16 %v1016, %v1012
    %v1345 = vpack.c.b16 %v1017, %v1013
    %v1346 = vpack.c.b16 %v1018, %v1014
    %v1347 = vpack.c.b16 %v1019, %v1015
    %v1348 = vpack.c.b16 %v1024, %v1020
    %v1349 = vpack.c.b16 %v1025, %v1021
    %v1350 = vpack.c.b16 %v1026, %v1022
    %v1351 = vpack.c.b16 %v1027, %v1023
    %v1352 = vpack.c.b16 %v1032, %v1028
    %v1353 = vpack.c.b16 %v1033, %v1029
    %v1354 = vpack.c.b16 %v1034, %v1030
    %v1355 = vpack.c.b16 %v1035, %v1031
    %v1356 = vpack.c.b16 %v1040, %v1036
    %v1357 = vpack.c.b16 %v1041, %v1037
    %v1358 = vpack.c.b16 %v1042, %v1038
    %v1359 = vpack.c.b16 %v1043, %v1039
    %v1360 = vpack.c.b16 %v1048, %v1044
    %v1361 = vpack.c.b16 %v1049, %v1045
    %v1362 = vpack.c.b16 %v1050, %v1046
    %v1363 = vpack.c.b16 %v1051, %v1047
    %v1364 = vpack.c.b16 %v1056, %v1052
    %v1365 = vpack.c.b16 %v1057, %v1053
    %v1366 = vpack.c.b16 %v1058, %v1054
    %v1367 = vpack.c.b16 %v1059, %v1055
    %v1368 = vpack.c.b16 %v1064, %v1060
    %v1369 = vpack.c.b16 %v1065, %v1061
    %v1370 = vpack.c.b16 %v1066, %v1062
    %v1371 = vpack.c.b16 %v1067, %v1063
    %v1372 = vpack.c.b16 %v1072, %v1068
    %v1373 = vpack.c.b16 %v1073, %v1069
    %v1374 = vpack.c.b16 %v1074, %v1070
    %v1375 = vpack.c.b16 %v1075, %v1071
    %v1376 = vpack.c.b16 %v1080, %v1076
    %v1377 = vpack.c.b16 %v1081, %v1077
    %v1378 = vpack.c.b16 %v1082, %v1078
    %v1379 = vpack.c.b16 %v1083, %v1079
    %v1380 = vpack.c.b16 %v1088, %v1084
    %v1381 = vpack.c.b16 %v1089, %v1085
    %v1382 = vpack.c.b16 %v1090, %v1086
    %v1383 = vpack.c.b16 %v1091, %v1087
    %v1384 = vpack.c.b16 %v1096, %v1092
    %v1385 = vpack.c.b16 %v1097, %v1093
    %v1386 = vpack.c.b16 %v1098, %v1094
    %v1387 = vpack.c.b16 %v1099, %v1095
    %v1388 = vpack.c.b16 %v1104, %v1100
    %v1389 = vpack.c.b16 %v1105, %v1101
    %v1390 = vpack.c.b16 %v1106, %v1102
    %v1391 = vpack.c.b16 %v1107, %v1103
    %v1392 = vpack.c.b16 %v1112, %v1108
    %v1393 = vpack.c.b16 %v1113, %v1109
    %v1394 = vpack.c.b16 %v1114, %v1110
    %v1395 = vpack.c.b16 %v1115, %v1111
    %v1396 = vpack.c.b16 %v1120, %v1116
    %v1397 = vpack.c.b16 %v1121, %v1117
    %v1398 = vpack.c.b16 %v1122, %v1118
    %v1399 = vpack.c.b16 %v1123, %v1119
    %v1400 = vpack.c.b16 %v1128, %v1124
    %v1401 = vpack.c.b16 %v1129, %v1125
    %v1402 = vpack.c.b16 %v1130, %v1126
    %v1403 = vpack.c.b16 %v1131, %v1127
    %v1404 = vpack.c.b16 %v1136, %v1132
    %v1405 = vpack.c.b16 %v1137, %v1133
    %v1406 = vpack.c.b16 %v1138, %v1134
    %v1407 = vpack.c.b16 %v1139, %v1135
    %v1408 = vpack.c.b16 %v1144, %v1140
    %v1409 = vpack.c.b16 %v1145, %v1141
    %v1410 = vpack.c.b16 %v1146, %v1142
    %v1411 = vpack.c.b16 %v1147, %v1143
    %v1412 = vpack.c.b16 %v1152, %v1148
    %v1413 = vpack.c.b16 %v1153, %v1149
    %v1414 = vpack.c.b16 %v1154, %v1150
    %v1415 = vpack.c.b16 %v1155, %v1151
    %v1416 = vpack.c.b16 %v1160, %v1156
    %v1417 = vpack.c.b16 %v1161, %v1157
    %v1418 = vpack.c.b16 %v1162, %v1158
    %v1419 = vpack.c.b16 %v1163, %v1159
    %1676 = vmatprep.subr.bf16.mxu0 %v1165
    %1677 = vmatpush1.bf16.msra.mxu0 %v1164
    %1678 = vmatprep.subr.bf16.mxu0 %v1169
    %1679 = vmatpush1.bf16.msra.mxu0 %v1168
    %1680 = vmatprep.subr.bf16.mxu0 %v1173
    %1681 = vmatpush1.bf16.msra.mxu0 %v1172
    %1682 = vmatprep.subr.bf16.mxu0 %v1177
    %1683 = vmatpush1.bf16.msra.mxu0 %v1176
    %1684 = vmatprep.subr.bf16.mxu0 %v1181
    %1685 = vmatpush1.bf16.msra.mxu0 %v1180
    %1686 = vmatprep.subr.bf16.mxu0 %v1185
    %1687 = vmatpush1.bf16.msra.mxu0 %v1184
    %1688 = vmatprep.subr.bf16.mxu0 %v1189
    %1689 = vmatpush1.bf16.msra.mxu0 %v1188
    %1690 = vmatprep.subr.bf16.mxu0 %v1193
    %1691 = vmatpush1.bf16.msra.mxu0 %v1192
    %1692 = vmatprep.subr.bf16.mxu0 %v1197
    %1693 = vmatpush1.bf16.msra.mxu0 %v1196
    %1694 = vmatprep.subr.bf16.mxu0 %v1201
    %1695 = vmatpush1.bf16.msra.mxu0 %v1200
    %1696 = vmatprep.subr.bf16.mxu0 %v1205
    %1697 = vmatpush1.bf16.msra.mxu0 %v1204
    %1698 = vmatprep.subr.bf16.mxu0 %v1209
    %1699 = vmatpush1.bf16.msra.mxu0 %v1208
    %1700 = vmatprep.subr.bf16.mxu0 %v1213
    %1701 = vmatpush1.bf16.msra.mxu0 %v1212
    %1702 = vmatprep.subr.bf16.mxu0 %v1217
    %1703 = vmatpush1.bf16.msra.mxu0 %v1216
    %1704 = vmatprep.subr.bf16.mxu0 %v1221
    %1705 = vmatpush1.bf16.msra.mxu0 %v1220
    %1706 = vmatprep.subr.bf16.mxu0 %v1225
    %1707 = vmatpush1.bf16.msra.mxu0 %v1224
    %1708 = vmatprep.mubr.bf16.mxu0 %v111
    %1709 = vmatmul.mubr.bf16.gmra.mrb[0].mxu0 %v110
    %v1710 = vpop.f32.mrb[0].mxu0
    %v1711 = vadd.f32 %v379, %v1710
    %v1712 = vpop.f32.mrb[0].mxu0
    %v1713 = vadd.f32 %v383, %v1712
    %v1714 = vpop.f32.mrb[0].mxu0
    %v1715 = vpop.f32.mrb[0].mxu0
    %1716 = vdwg.mxu0
    %1717 = vmatprep.subr.bf16.mxu0 %v1229
    %1718 = vmatpush1.bf16.msra.mxu0 %v1228
    %1719 = vmatprep.subr.bf16.mxu0 %v1233
    %1720 = vmatpush1.bf16.msra.mxu0 %v1232
    %1721 = vmatprep.subr.bf16.mxu0 %v1237
    %1722 = vmatpush1.bf16.msra.mxu0 %v1236
    %1723 = vmatprep.subr.bf16.mxu0 %v1241
    %1724 = vmatpush1.bf16.msra.mxu0 %v1240
    %1725 = vmatprep.subr.bf16.mxu0 %v1245
    %1726 = vmatpush1.bf16.msra.mxu0 %v1244
    %1727 = vmatprep.subr.bf16.mxu0 %v1249
    %1728 = vmatpush1.bf16.msra.mxu0 %v1248
    %1729 = vmatprep.subr.bf16.mxu0 %v1253
    %1730 = vmatpush1.bf16.msra.mxu0 %v1252
    %1731 = vmatprep.subr.bf16.mxu0 %v1257
    %1732 = vmatpush1.bf16.msra.mxu0 %v1256
    %1733 = vmatprep.subr.bf16.mxu0 %v1261
    %1734 = vmatpush1.bf16.msra.mxu0 %v1260
    %1735 = vmatprep.subr.bf16.mxu0 %v1265
    %1736 = vmatpush1.bf16.msra.mxu0 %v1264
    %1737 = vmatprep.subr.bf16.mxu0 %v1269
    %1738 = vmatpush1.bf16.msra.mxu0 %v1268
    %1739 = vmatprep.subr.bf16.mxu0 %v1273
    %1740 = vmatpush1.bf16.msra.mxu0 %v1272
    %1741 = vmatprep.subr.bf16.mxu0 %v1277
    %1742 = vmatpush1.bf16.msra.mxu0 %v1276
    %1743 = vmatprep.subr.bf16.mxu0 %v1281
    %1744 = vmatpush1.bf16.msra.mxu0 %v1280
    %1745 = vmatprep.subr.bf16.mxu0 %v1285
    %1746 = vmatpush1.bf16.msra.mxu0 %v1284
    %1747 = vmatprep.subr.bf16.mxu0 %v1289
    %1748 = vmatpush1.bf16.msra.mxu0 %v1288
    %1749 = vmatprep.mubr.bf16.mxu0 %v113
    %1750 = vmatmul.mubr.bf16.gmra.mrb[0].mxu0 %v112
    %v1751 = vpop.f32.mrb[0].mxu0
    %v1752 = vadd.f32 %v1711, %v1751
    %v1753 = vpop.f32.mrb[0].mxu0
    %v1754 = vadd.f32 %v1713, %v1753
    %v1755 = vpop.f32.mrb[0].mxu0
    %v1756 = vpop.f32.mrb[0].mxu0
    %1757 = vdwg.mxu0
    %1758 = vmatprep.subr.bf16.mxu0 %v1293
    %1759 = vmatpush1.bf16.msra.mxu0 %v1292
    %1760 = vmatprep.subr.bf16.mxu0 %v1297
    %1761 = vmatpush1.bf16.msra.mxu0 %v1296
    %1762 = vmatprep.subr.bf16.mxu0 %v1301
    %1763 = vmatpush1.bf16.msra.mxu0 %v1300
    %1764 = vmatprep.subr.bf16.mxu0 %v1305
    %1765 = vmatpush1.bf16.msra.mxu0 %v1304
    %1766 = vmatprep.subr.bf16.mxu0 %v1309
    %1767 = vmatpush1.bf16.msra.mxu0 %v1308
    %1768 = vmatprep.subr.bf16.mxu0 %v1313
    %1769 = vmatpush1.bf16.msra.mxu0 %v1312
    %1770 = vmatprep.subr.bf16.mxu0 %v1317
    %1771 = vmatpush1.bf16.msra.mxu0 %v1316
    %1772 = vmatprep.subr.bf16.mxu0 %v1321
    %1773 = vmatpush1.bf16.msra.mxu0 %v1320
    %1774 = vmatprep.subr.bf16.mxu0 %v1325
    %1775 = vmatpush1.bf16.msra.mxu0 %v1324
    %1776 = vmatprep.subr.bf16.mxu0 %v1329
    %1777 = vmatpush1.bf16.msra.mxu0 %v1328
    %1778 = vmatprep.subr.bf16.mxu0 %v1333
    %1779 = vmatpush1.bf16.msra.mxu0 %v1332
    %1780 = vmatprep.subr.bf16.mxu0 %v1337
    %1781 = vmatpush1.bf16.msra.mxu0 %v1336
    %1782 = vmatprep.subr.bf16.mxu0 %v1341
    %1783 = vmatpush1.bf16.msra.mxu0 %v1340
    %1784 = vmatprep.subr.bf16.mxu0 %v1345
    %1785 = vmatpush1.bf16.msra.mxu0 %v1344
    %1786 = vmatprep.subr.bf16.mxu0 %v1349
    %1787 = vmatpush1.bf16.msra.mxu0 %v1348
    %1788 = vmatprep.subr.bf16.mxu0 %v1353
    %1789 = vmatpush1.bf16.msra.mxu0 %v1352
    %1790 = vmatprep.mubr.bf16.mxu0 %v115
    %1791 = vmatmul.mubr.bf16.gmra.mrb[0].mxu0 %v114
    %v1792 = vpop.f32.mrb[0].mxu0
    %v1793 = vadd.f32 %v1752, %v1792
    %v1794 = vpop.f32.mrb[0].mxu0
    %v1795 = vadd.f32 %v1754, %v1794
    %v1796 = vpop.f32.mrb[0].mxu0
    %v1797 = vpop.f32.mrb[0].mxu0
    %1798 = vdwg.mxu0
    %1799 = vmatprep.subr.bf16.mxu0 %v1357
    %1800 = vmatpush1.bf16.msra.mxu0 %v1356
    %1801 = vmatprep.subr.bf16.mxu0 %v1361
    %1802 = vmatpush1.bf16.msra.mxu0 %v1360
    %1803 = vmatprep.subr.bf16.mxu0 %v1365
    %1804 = vmatpush1.bf16.msra.mxu0 %v1364
    %1805 = vmatprep.subr.bf16.mxu0 %v1369
    %1806 = vmatpush1.bf16.msra.mxu0 %v1368
    %1807 = vmatprep.subr.bf16.mxu0 %v1373
    %1808 = vmatpush1.bf16.msra.mxu0 %v1372
    %1809 = vmatprep.subr.bf16.mxu0 %v1377
    %1810 = vmatpush1.bf16.msra.mxu0 %v1376
    %1811 = vmatprep.subr.bf16.mxu0 %v1381
    %1812 = vmatpush1.bf16.msra.mxu0 %v1380
    %1813 = vmatprep.subr.bf16.mxu0 %v1385
    %1814 = vmatpush1.bf16.msra.mxu0 %v1384
    %1815 = vmatprep.subr.bf16.mxu0 %v1389
    %1816 = vmatpush1.bf16.msra.mxu0 %v1388
    %1817 = vmatprep.subr.bf16.mxu0 %v1393
    %1818 = vmatpush1.bf16.msra.mxu0 %v1392
    %1819 = vmatprep.subr.bf16.mxu0 %v1397
    %1820 = vmatpush1.bf16.msra.mxu0 %v1396
    %1821 = vmatprep.subr.bf16.mxu0 %v1401
    %1822 = vmatpush1.bf16.msra.mxu0 %v1400
    %1823 = vmatprep.subr.bf16.mxu0 %v1405
    %1824 = vmatpush1.bf16.msra.mxu0 %v1404
    %1825 = vmatprep.subr.bf16.mxu0 %v1409
    %1826 = vmatpush1.bf16.msra.mxu0 %v1408
    %1827 = vmatprep.subr.bf16.mxu0 %v1413
    %1828 = vmatpush1.bf16.msra.mxu0 %v1412
    %1829 = vmatprep.subr.bf16.mxu0 %v1417
    %1830 = vmatpush1.bf16.msra.mxu0 %v1416
    %1831 = vmatprep.mubr.bf16.mxu0 %v117
    %1832 = vmatmul.mubr.bf16.gmra.mrb[0].mxu0 %v116
    %v1833 = vpop.f32.mrb[0].mxu0
    %v1834 = vadd.f32 %v1793, %v1833
    %v1835 = vpop.f32.mrb[0].mxu0
    %v1836 = vadd.f32 %v1795, %v1835
    %v1837 = vpop.f32.mrb[0].mxu0
    %v1838 = vpop.f32.mrb[0].mxu0
    %1839 = vdwg.mxu0
    %1840 = vmatprep.subr.bf16.mxu0 %v1167
    %1841 = vmatpush1.bf16.msra.mxu0 %v1166
    %1842 = vmatprep.subr.bf16.mxu0 %v1171
    %1843 = vmatpush1.bf16.msra.mxu0 %v1170
    %1844 = vmatprep.subr.bf16.mxu0 %v1175
    %1845 = vmatpush1.bf16.msra.mxu0 %v1174
    %1846 = vmatprep.subr.bf16.mxu0 %v1179
    %1847 = vmatpush1.bf16.msra.mxu0 %v1178
    %1848 = vmatprep.subr.bf16.mxu0 %v1183
    %1849 = vmatpush1.bf16.msra.mxu0 %v1182
    %1850 = vmatprep.subr.bf16.mxu0 %v1187
    %1851 = vmatpush1.bf16.msra.mxu0 %v1186
    %1852 = vmatprep.subr.bf16.mxu0 %v1191
    %1853 = vmatpush1.bf16.msra.mxu0 %v1190
    %1854 = vmatprep.subr.bf16.mxu0 %v1195
    %1855 = vmatpush1.bf16.msra.mxu0 %v1194
    %1856 = vmatprep.subr.bf16.mxu0 %v1199
    %1857 = vmatpush1.bf16.msra.mxu0 %v1198
    %1858 = vmatprep.subr.bf16.mxu0 %v1203
    %1859 = vmatpush1.bf16.msra.mxu0 %v1202
    %1860 = vmatprep.subr.bf16.mxu0 %v1207
    %1861 = vmatpush1.bf16.msra.mxu0 %v1206
    %1862 = vmatprep.subr.bf16.mxu0 %v1211
    %1863 = vmatpush1.bf16.msra.mxu0 %v1210
    %1864 = vmatprep.subr.bf16.mxu0 %v1215
    %1865 = vmatpush1.bf16.msra.mxu0 %v1214
    %1866 = vmatprep.subr.bf16.mxu0 %v1219
    %1867 = vmatpush1.bf16.msra.mxu0 %v1218
    %1868 = vmatprep.subr.bf16.mxu0 %v1223
    %1869 = vmatpush1.bf16.msra.mxu0 %v1222
    %1870 = vmatprep.subr.bf16.mxu0 %v1227
    %1871 = vmatpush1.bf16.msra.mxu0 %v1226
    %1872 = vmatprep.mubr.bf16.mxu0 %v111
    %1873 = vmatmul.mubr.bf16.gmra.mrb[0].mxu0 %v110
    %v1874 = vpop.f32.mrb[0].mxu0
    %v1875 = vadd.f32 %v387, %v1874
    %v1876 = vpop.f32.mrb[0].mxu0
    %v1877 = vadd.f32 %v391, %v1876
    %v1878 = vpop.f32.mrb[0].mxu0
    %v1879 = vpop.f32.mrb[0].mxu0
    %1880 = vdwg.mxu0
    %1881 = vmatprep.subr.bf16.mxu0 %v1231
    %1882 = vmatpush1.bf16.msra.mxu0 %v1230
    %1883 = vmatprep.subr.bf16.mxu0 %v1235
    %1884 = vmatpush1.bf16.msra.mxu0 %v1234
    %1885 = vmatprep.subr.bf16.mxu0 %v1239
    %1886 = vmatpush1.bf16.msra.mxu0 %v1238
    %1887 = vmatprep.subr.bf16.mxu0 %v1243
    %1888 = vmatpush1.bf16.msra.mxu0 %v1242
    %1889 = vmatprep.subr.bf16.mxu0 %v1247
    %1890 = vmatpush1.bf16.msra.mxu0 %v1246
    %1891 = vmatprep.subr.bf16.mxu0 %v1251
    %1892 = vmatpush1.bf16.msra.mxu0 %v1250
    %1893 = vmatprep.subr.bf16.mxu0 %v1255
    %1894 = vmatpush1.bf16.msra.mxu0 %v1254
    %1895 = vmatprep.subr.bf16.mxu0 %v1259
    %1896 = vmatpush1.bf16.msra.mxu0 %v1258
    %1897 = vmatprep.subr.bf16.mxu0 %v1263
    %1898 = vmatpush1.bf16.msra.mxu0 %v1262
    %1899 = vmatprep.subr.bf16.mxu0 %v1267
    %1900 = vmatpush1.bf16.msra.mxu0 %v1266
    %1901 = vmatprep.subr.bf16.mxu0 %v1271
    %1902 = vmatpush1.bf16.msra.mxu0 %v1270
    %1903 = vmatprep.subr.bf16.mxu0 %v1275
    %1904 = vmatpush1.bf16.msra.mxu0 %v1274
    %1905 = vmatprep.subr.bf16.mxu0 %v1279
    %1906 = vmatpush1.bf16.msra.mxu0 %v1278
    %1907 = vmatprep.subr.bf16.mxu0 %v1283
    %1908 = vmatpush1.bf16.msra.mxu0 %v1282
    %1909 = vmatprep.subr.bf16.mxu0 %v1287
    %1910 = vmatpush1.bf16.msra.mxu0 %v1286
    %1911 = vmatprep.subr.bf16.mxu0 %v1291
    %1912 = vmatpush1.bf16.msra.mxu0 %v1290
    %1913 = vmatprep.mubr.bf16.mxu0 %v113
    %1914 = vmatmul.mubr.bf16.gmra.mrb[0].mxu0 %v112
    %v1915 = vpop.f32.mrb[0].mxu0
    %v1916 = vadd.f32 %v1875, %v1915
    %v1917 = vpop.f32.mrb[0].mxu0
    %v1918 = vadd.f32 %v1877, %v1917
    %v1919 = vpop.f32.mrb[0].mxu0
    %v1920 = vpop.f32.mrb[0].mxu0
    %1921 = vdwg.mxu0
    %1922 = vmatprep.subr.bf16.mxu0 %v1295
    %1923 = vmatpush1.bf16.msra.mxu0 %v1294
    %1924 = vmatprep.subr.bf16.mxu0 %v1299
    %1925 = vmatpush1.bf16.msra.mxu0 %v1298
    %1926 = vmatprep.subr.bf16.mxu0 %v1303
    %1927 = vmatpush1.bf16.msra.mxu0 %v1302
    %1928 = vmatprep.subr.bf16.mxu0 %v1307
    %1929 = vmatpush1.bf16.msra.mxu0 %v1306
    %1930 = vmatprep.subr.bf16.mxu0 %v1311
    %1931 = vmatpush1.bf16.msra.mxu0 %v1310
    %1932 = vmatprep.subr.bf16.mxu0 %v1315
    %1933 = vmatpush1.bf16.msra.mxu0 %v1314
    %1934 = vmatprep.subr.bf16.mxu0 %v1319
    %1935 = vmatpush1.bf16.msra.mxu0 %v1318
    %1936 = vmatprep.subr.bf16.mxu0 %v1323
    %1937 = vmatpush1.bf16.msra.mxu0 %v1322
    %1938 = vmatprep.subr.bf16.mxu0 %v1327
    %1939 = vmatpush1.bf16.msra.mxu0 %v1326
    %1940 = vmatprep.subr.bf16.mxu0 %v1331
    %1941 = vmatpush1.bf16.msra.mxu0 %v1330
    %1942 = vmatprep.subr.bf16.mxu0 %v1335
    %1943 = vmatpush1.bf16.msra.mxu0 %v1334
    %1944 = vmatprep.subr.bf16.mxu0 %v1339
    %1945 = vmatpush1.bf16.msra.mxu0 %v1338
    %1946 = vmatprep.subr.bf16.mxu0 %v1343
    %1947 = vmatpush1.bf16.msra.mxu0 %v1342
    %1948 = vmatprep.subr.bf16.mxu0 %v1347
    %1949 = vmatpush1.bf16.msra.mxu0 %v1346
    %1950 = vmatprep.subr.bf16.mxu0 %v1351
    %1951 = vmatpush1.bf16.msra.mxu0 %v1350
    %1952 = vmatprep.subr.bf16.mxu0 %v1355
    %1953 = vmatpush1.bf16.msra.mxu0 %v1354
    %1954 = vmatprep.mubr.bf16.mxu0 %v115
    %1955 = vmatmul.mubr.bf16.gmra.mrb[0].mxu0 %v114
    %v1956 = vpop.f32.mrb[0].mxu0
    %v1957 = vadd.f32 %v1916, %v1956
    %v1958 = vpop.f32.mrb[0].mxu0
    %v1959 = vadd.f32 %v1918, %v1958
    %v1960 = vpop.f32.mrb[0].mxu0
    %v1961 = vpop.f32.mrb[0].mxu0
    %1962 = vdwg.mxu0
    %1963 = vmatprep.subr.bf16.mxu0 %v1359
    %1964 = vmatpush1.bf16.msra.mxu0 %v1358
    %1965 = vmatprep.subr.bf16.mxu0 %v1363
    %1966 = vmatpush1.bf16.msra.mxu0 %v1362
    %1967 = vmatprep.subr.bf16.mxu0 %v1367
    %1968 = vmatpush1.bf16.msra.mxu0 %v1366
    %1969 = vmatprep.subr.bf16.mxu0 %v1371
    %1970 = vmatpush1.bf16.msra.mxu0 %v1370
    %1971 = vmatprep.subr.bf16.mxu0 %v1375
    %1972 = vmatpush1.bf16.msra.mxu0 %v1374
    %1973 = vmatprep.subr.bf16.mxu0 %v1379
    %1974 = vmatpush1.bf16.msra.mxu0 %v1378
    %1975 = vmatprep.subr.bf16.mxu0 %v1383
    %1976 = vmatpush1.bf16.msra.mxu0 %v1382
    %1977 = vmatprep.subr.bf16.mxu0 %v1387
    %1978 = vmatpush1.bf16.msra.mxu0 %v1386
    %1979 = vmatprep.subr.bf16.mxu0 %v1391
    %1980 = vmatpush1.bf16.msra.mxu0 %v1390
    %1981 = vmatprep.subr.bf16.mxu0 %v1395
    %1982 = vmatpush1.bf16.msra.mxu0 %v1394
    %1983 = vmatprep.subr.bf16.mxu0 %v1399
    %1984 = vmatpush1.bf16.msra.mxu0 %v1398
    %1985 = vmatprep.subr.bf16.mxu0 %v1403
    %1986 = vmatpush1.bf16.msra.mxu0 %v1402
    %1987 = vmatprep.subr.bf16.mxu0 %v1407
    %1988 = vmatpush1.bf16.msra.mxu0 %v1406
    %1989 = vmatprep.subr.bf16.mxu0 %v1411
    %1990 = vmatpush1.bf16.msra.mxu0 %v1410
    %1991 = vmatprep.subr.bf16.mxu0 %v1415
    %1992 = vmatpush1.bf16.msra.mxu0 %v1414
    %1993 = vmatprep.subr.bf16.mxu0 %v1419
    %1994 = vmatpush1.bf16.msra.mxu0 %v1418
    %1995 = vmatprep.mubr.bf16.mxu0 %v117
    %1996 = vmatmul.mubr.bf16.gmra.mrb[0].mxu0 %v116
    %v1997 = vpop.f32.mrb[0].mxu0
    %v1998 = vadd.f32 %v1957, %v1997
    %v1999 = vpop.f32.mrb[0].mxu0
    %v2000 = vadd.f32 %v1959, %v1999
    %v2001 = vpop.f32.mrb[0].mxu0
    %v2002 = vpop.f32.mrb[0].mxu0
    %2003 = vdwg.mxu0
    %v2004 = vmax.f32 %v1834, 0.0
    %v2005 = vmax.f32 %v1836, 0.0
    %v2006 = vmax.f32 %v1998, 0.0
    %v2007 = vmax.f32 %v2000, 0.0
    %v2008 = vpack.c.bf16 %v2004, %v2004
    %v2009 = vpack.c.bf16 %v2005, %v2005
    %v2010 = vpack.c.bf16 %v2006, %v2006
    %v2011 = vpack.c.bf16 %v2007, %v2007
    %v2012 = vld [vmem:[#allocation4] sm:$0xff]
    %v2013 = vld [vmem:[#allocation4 + $0x8] sm:$0xff]
    %v2014 = vld [vmem:[#allocation4 + $0x10] sm:$0xff]
    %v2015 = vld [vmem:[#allocation4 + $0x18] sm:$0xff]
    %v2016 = vld [vmem:[#allocation4 + $0x20] sm:$0xff]
    %v2017 = vld [vmem:[#allocation4 + $0x28] sm:$0xff]
    %v2018 = vld [vmem:[#allocation4 + $0x30] sm:$0xff]
    %v2019 = vld [vmem:[#allocation4 + $0x38] sm:$0xff]
    %v2020 = vld [vmem:[#allocation4 + $0x40] sm:$0xff]
    %v2021 = vld [vmem:[#allocation4 + $0x48] sm:$0xff]
    %v2022 = vld [vmem:[#allocation4 + $0x50] sm:$0xff]
    %v2023 = vld [vmem:[#allocation4 + $0x58] sm:$0xff]
    %v2024 = vld [vmem:[#allocation4 + $0x60] sm:$0xff]
    %v2025 = vld [vmem:[#allocation4 + $0x68] sm:$0xff]
    %v2026 = vld [vmem:[#allocation4 + $0x70] sm:$0xff]
    %v2027 = vld [vmem:[#allocation4 + $0x78] sm:$0xff]
    %v2028 = vld [vmem:[#allocation4 + $0x80] sm:$0xff]
    %v2029 = vld [vmem:[#allocation4 + $0x88] sm:$0xff]
    %v2030 = vld [vmem:[#allocation4 + $0x90] sm:$0xff]
    %v2031 = vld [vmem:[#allocation4 + $0x98] sm:$0xff]
    %v2032 = vld [vmem:[#allocation4 + $0xa0] sm:$0xff]
    %v2033 = vld [vmem:[#allocation4 + $0xa8] sm:$0xff]
    %v2034 = vld [vmem:[#allocation4 + $0xb0] sm:$0xff]
    %v2035 = vld [vmem:[#allocation4 + $0xb8] sm:$0xff]
    %v2036 = vld [vmem:[#allocation4 + $0xc0] sm:$0xff]
    %v2037 = vld [vmem:[#allocation4 + $0xc8] sm:$0xff]
    %v2038 = vld [vmem:[#allocation4 + $0xd0] sm:$0xff]
    %v2039 = vld [vmem:[#allocation4 + $0xd8] sm:$0xff]
    %v2040 = vld [vmem:[#allocation4 + $0xe0] sm:$0xff]
    %v2041 = vld [vmem:[#allocation4 + $0xe8] sm:$0xff]
    %v2042 = vld [vmem:[#allocation4 + $0xf0] sm:$0xff]
    %v2043 = vld [vmem:[#allocation4 + $0xf8] sm:$0xff]
    %v2044 = vld [vmem:[#allocation4 + $0x100] sm:$0xff]
    %v2045 = vld [vmem:[#allocation4 + $0x108] sm:$0xff]
    %v2046 = vld [vmem:[#allocation4 + $0x110] sm:$0xff]
    %v2047 = vld [vmem:[#allocation4 + $0x118] sm:$0xff]
    %v2048 = vld [vmem:[#allocation4 + $0x120] sm:$0xff]
    %v2049 = vld [vmem:[#allocation4 + $0x128] sm:$0xff]
    %v2050 = vld [vmem:[#allocation4 + $0x130] sm:$0xff]
    %v2051 = vld [vmem:[#allocation4 + $0x138] sm:$0xff]
    %v2052 = vld [vmem:[#allocation4 + $0x140] sm:$0xff]
    %v2053 = vld [vmem:[#allocation4 + $0x148] sm:$0xff]
    %v2054 = vld [vmem:[#allocation4 + $0x150] sm:$0xff]
    %v2055 = vld [vmem:[#allocation4 + $0x158] sm:$0xff]
    %v2056 = vld [vmem:[#allocation4 + $0x160] sm:$0xff]
    %v2057 = vld [vmem:[#allocation4 + $0x168] sm:$0xff]
    %v2058 = vld [vmem:[#allocation4 + $0x170] sm:$0xff]
    %v2059 = vld [vmem:[#allocation4 + $0x178] sm:$0xff]
    %v2060 = vld [vmem:[#allocation4 + $0x180] sm:$0xff]
    %v2061 = vld [vmem:[#allocation4 + $0x188] sm:$0xff]
    %v2062 = vld [vmem:[#allocation4 + $0x190] sm:$0xff]
    %v2063 = vld [vmem:[#allocation4 + $0x198] sm:$0xff]
    %v2064 = vld [vmem:[#allocation4 + $0x1a0] sm:$0xff]
    %v2065 = vld [vmem:[#allocation4 + $0x1a8] sm:$0xff]
    %v2066 = vld [vmem:[#allocation4 + $0x1b0] sm:$0xff]
    %v2067 = vld [vmem:[#allocation4 + $0x1b8] sm:$0xff]
    %v2068 = vld [vmem:[#allocation4 + $0x1c0] sm:$0xff]
    %v2069 = vld [vmem:[#allocation4 + $0x1c8] sm:$0xff]
    %v2070 = vld [vmem:[#allocation4 + $0x1d0] sm:$0xff]
    %v2071 = vld [vmem:[#allocation4 + $0x1d8] sm:$0xff]
    %v2072 = vld [vmem:[#allocation4 + $0x1e0] sm:$0xff]
    %v2073 = vld [vmem:[#allocation4 + $0x1e8] sm:$0xff]
    %v2074 = vld [vmem:[#allocation4 + $0x1f0] sm:$0xff]
    %v2075 = vld [vmem:[#allocation4 + $0x1f8] sm:$0xff]
    %v2076 = vld [vmem:[%s5] sm:$0x3]
    %v2078 = vlaneseq
    %v2079 = vshrl.u32 %v2078, 7
    %v2080 = vsub.s32 0, %v2079
    %v2081 = vrot.slane %v2076, %v2080
    %v2082 = vlaneseq
    %v2083 = vshrl.u32 %v2082, 7
    %v2084 = vsub.s32 1, %v2083
    %v2085 = vrot.slane %v2076, %v2084
    %v2152 = vunpack.c.l.b16 %v2012
    %v2153 = vunpack.c.h.b16 %v2012
    %v2154 = vunpack.c.l.b16 %v2013
    %v2155 = vunpack.c.h.b16 %v2013
    %v2156 = vunpack.c.l.b16 %v2014
    %v2157 = vunpack.c.h.b16 %v2014
    %v2158 = vunpack.c.l.b16 %v2015
    %v2159 = vunpack.c.h.b16 %v2015
    %v2160 = vunpack.c.l.b16 %v2016
    %v2161 = vunpack.c.h.b16 %v2016
    %v2162 = vunpack.c.l.b16 %v2017
    %v2163 = vunpack.c.h.b16 %v2017
    %v2164 = vunpack.c.l.b16 %v2018
    %v2165 = vunpack.c.h.b16 %v2018
    %v2166 = vunpack.c.l.b16 %v2019
    %v2167 = vunpack.c.h.b16 %v2019
    %v2168 = vunpack.c.l.b16 %v2020
    %v2169 = vunpack.c.h.b16 %v2020
    %v2170 = vunpack.c.l.b16 %v2021
    %v2171 = vunpack.c.h.b16 %v2021
    %v2172 = vunpack.c.l.b16 %v2022
    %v2173 = vunpack.c.h.b16 %v2022
    %v2174 = vunpack.c.l.b16 %v2023
    %v2175 = vunpack.c.h.b16 %v2023
    %v2176 = vunpack.c.l.b16 %v2024
    %v2177 = vunpack.c.h.b16 %v2024
    %v2178 = vunpack.c.l.b16 %v2025
    %v2179 = vunpack.c.h.b16 %v2025
    %v2180 = vunpack.c.l.b16 %v2026
    %v2181 = vunpack.c.h.b16 %v2026
    %v2182 = vunpack.c.l.b16 %v2027
    %v2183 = vunpack.c.h.b16 %v2027
    %v2184 = vunpack.c.l.b16 %v2028
    %v2185 = vunpack.c.h.b16 %v2028
    %v2186 = vunpack.c.l.b16 %v2029
    %v2187 = vunpack.c.h.b16 %v2029
    %v2188 = vunpack.c.l.b16 %v2030
    %v2189 = vunpack.c.h.b16 %v2030
    %v2190 = vunpack.c.l.b16 %v2031
    %v2191 = vunpack.c.h.b16 %v2031
    %v2192 = vunpack.c.l.b16 %v2032
    %v2193 = vunpack.c.h.b16 %v2032
    %v2194 = vunpack.c.l.b16 %v2033
    %v2195 = vunpack.c.h.b16 %v2033
    %v2196 = vunpack.c.l.b16 %v2034
    %v2197 = vunpack.c.h.b16 %v2034
    %v2198 = vunpack.c.l.b16 %v2035
    %v2199 = vunpack.c.h.b16 %v2035
    %v2200 = vunpack.c.l.b16 %v2036
    %v2201 = vunpack.c.h.b16 %v2036
    %v2202 = vunpack.c.l.b16 %v2037
    %v2203 = vunpack.c.h.b16 %v2037
    %v2204 = vunpack.c.l.b16 %v2038
    %v2205 = vunpack.c.h.b16 %v2038
    %v2206 = vunpack.c.l.b16 %v2039
    %v2207 = vunpack.c.h.b16 %v2039
    %v2208 = vunpack.c.l.b16 %v2040
    %v2209 = vunpack.c.h.b16 %v2040
    %v2210 = vunpack.c.l.b16 %v2041
    %v2211 = vunpack.c.h.b16 %v2041
    %v2212 = vunpack.c.l.b16 %v2042
    %v2213 = vunpack.c.h.b16 %v2042
    %v2214 = vunpack.c.l.b16 %v2043
    %v2215 = vunpack.c.h.b16 %v2043
    %v2216 = vunpack.c.l.b16 %v2044
    %v2217 = vunpack.c.h.b16 %v2044
    %v2218 = vunpack.c.l.b16 %v2045
    %v2219 = vunpack.c.h.b16 %v2045
    %v2220 = vunpack.c.l.b16 %v2046
    %v2221 = vunpack.c.h.b16 %v2046
    %v2222 = vunpack.c.l.b16 %v2047
    %v2223 = vunpack.c.h.b16 %v2047
    %v2224 = vunpack.c.l.b16 %v2048
    %v2225 = vunpack.c.h.b16 %v2048
    %v2226 = vunpack.c.l.b16 %v2049
    %v2227 = vunpack.c.h.b16 %v2049
    %v2228 = vunpack.c.l.b16 %v2050
    %v2229 = vunpack.c.h.b16 %v2050
    %v2230 = vunpack.c.l.b16 %v2051
    %v2231 = vunpack.c.h.b16 %v2051
    %v2232 = vunpack.c.l.b16 %v2052
    %v2233 = vunpack.c.h.b16 %v2052
    %v2234 = vunpack.c.l.b16 %v2053
    %v2235 = vunpack.c.h.b16 %v2053
    %v2236 = vunpack.c.l.b16 %v2054
    %v2237 = vunpack.c.h.b16 %v2054
    %v2238 = vunpack.c.l.b16 %v2055
    %v2239 = vunpack.c.h.b16 %v2055
    %v2240 = vunpack.c.l.b16 %v2056
    %v2241 = vunpack.c.h.b16 %v2056
    %v2242 = vunpack.c.l.b16 %v2057
    %v2243 = vunpack.c.h.b16 %v2057
    %v2244 = vunpack.c.l.b16 %v2058
    %v2245 = vunpack.c.h.b16 %v2058
    %v2246 = vunpack.c.l.b16 %v2059
    %v2247 = vunpack.c.h.b16 %v2059
    %v2248 = vunpack.c.l.b16 %v2060
    %v2249 = vunpack.c.h.b16 %v2060
    %v2250 = vunpack.c.l.b16 %v2061
    %v2251 = vunpack.c.h.b16 %v2061
    %v2252 = vunpack.c.l.b16 %v2062
    %v2253 = vunpack.c.h.b16 %v2062
    %v2254 = vunpack.c.l.b16 %v2063
    %v2255 = vunpack.c.h.b16 %v2063
    %v2256 = vunpack.c.l.b16 %v2064
    %v2257 = vunpack.c.h.b16 %v2064
    %v2258 = vunpack.c.l.b16 %v2065
    %v2259 = vunpack.c.h.b16 %v2065
    %v2260 = vunpack.c.l.b16 %v2066
    %v2261 = vunpack.c.h.b16 %v2066
    %v2262 = vunpack.c.l.b16 %v2067
    %v2263 = vunpack.c.h.b16 %v2067
    %v2264 = vunpack.c.l.b16 %v2068
    %v2265 = vunpack.c.h.b16 %v2068
    %v2266 = vunpack.c.l.b16 %v2069
    %v2267 = vunpack.c.h.b16 %v2069
    %v2268 = vunpack.c.l.b16 %v2070
    %v2269 = vunpack.c.h.b16 %v2070
    %v2270 = vunpack.c.l.b16 %v2071
    %v2271 = vunpack.c.h.b16 %v2071
    %v2272 = vunpack.c.l.b16 %v2072
    %v2273 = vunpack.c.h.b16 %v2072
    %v2274 = vunpack.c.l.b16 %v2073
    %v2275 = vunpack.c.h.b16 %v2073
    %v2276 = vunpack.c.l.b16 %v2074
    %v2277 = vunpack.c.h.b16 %v2074
    %v2278 = vunpack.c.l.b16 %v2075
    %v2279 = vunpack.c.h.b16 %v2075
    %v2280 = vpack.c.b16 %v2154, %v2152
    %v2281 = vpack.c.b16 %v2155, %v2153
    %v2282 = vpack.c.b16 %v2158, %v2156
    %v2283 = vpack.c.b16 %v2159, %v2157
    %v2284 = vpack.c.b16 %v2162, %v2160
    %v2285 = vpack.c.b16 %v2163, %v2161
    %v2286 = vpack.c.b16 %v2166, %v2164
    %v2287 = vpack.c.b16 %v2167, %v2165
    %v2288 = vpack.c.b16 %v2170, %v2168
    %v2289 = vpack.c.b16 %v2171, %v2169
    %v2290 = vpack.c.b16 %v2174, %v2172
    %v2291 = vpack.c.b16 %v2175, %v2173
    %v2292 = vpack.c.b16 %v2178, %v2176
    %v2293 = vpack.c.b16 %v2179, %v2177
    %v2294 = vpack.c.b16 %v2182, %v2180
    %v2295 = vpack.c.b16 %v2183, %v2181
    %v2296 = vpack.c.b16 %v2186, %v2184
    %v2297 = vpack.c.b16 %v2187, %v2185
    %v2298 = vpack.c.b16 %v2190, %v2188
    %v2299 = vpack.c.b16 %v2191, %v2189
    %v2300 = vpack.c.b16 %v2194, %v2192
    %v2301 = vpack.c.b16 %v2195, %v2193
    %v2302 = vpack.c.b16 %v2198, %v2196
    %v2303 = vpack.c.b16 %v2199, %v2197
    %v2304 = vpack.c.b16 %v2202, %v2200
    %v2305 = vpack.c.b16 %v2203, %v2201
    %v2306 = vpack.c.b16 %v2206, %v2204
    %v2307 = vpack.c.b16 %v2207, %v2205
    %v2308 = vpack.c.b16 %v2210, %v2208
    %v2309 = vpack.c.b16 %v2211, %v2209
    %v2310 = vpack.c.b16 %v2214, %v2212
    %v2311 = vpack.c.b16 %v2215, %v2213
    %v2312 = vpack.c.b16 %v2218, %v2216
    %v2313 = vpack.c.b16 %v2219, %v2217
    %v2314 = vpack.c.b16 %v2222, %v2220
    %v2315 = vpack.c.b16 %v2223, %v2221
    %v2316 = vpack.c.b16 %v2226, %v2224
    %v2317 = vpack.c.b16 %v2227, %v2225
    %v2318 = vpack.c.b16 %v2230, %v2228
    %v2319 = vpack.c.b16 %v2231, %v2229
    %v2320 = vpack.c.b16 %v2234, %v2232
    %v2321 = vpack.c.b16 %v2235, %v2233
    %v2322 = vpack.c.b16 %v2238, %v2236
    %v2323 = vpack.c.b16 %v2239, %v2237
    %v2324 = vpack.c.b16 %v2242, %v2240
    %v2325 = vpack.c.b16 %v2243, %v2241
    %v2326 = vpack.c.b16 %v2246, %v2244
    %v2327 = vpack.c.b16 %v2247, %v2245
    %v2328 = vpack.c.b16 %v2250, %v2248
    %v2329 = vpack.c.b16 %v2251, %v2249
    %v2330 = vpack.c.b16 %v2254, %v2252
    %v2331 = vpack.c.b16 %v2255, %v2253
    %v2332 = vpack.c.b16 %v2258, %v2256
    %v2333 = vpack.c.b16 %v2259, %v2257
    %v2334 = vpack.c.b16 %v2262, %v2260
    %v2335 = vpack.c.b16 %v2263, %v2261
    %v2336 = vpack.c.b16 %v2266, %v2264
    %v2337 = vpack.c.b16 %v2267, %v2265
    %v2338 = vpack.c.b16 %v2270, %v2268
    %v2339 = vpack.c.b16 %v2271, %v2269
    %v2340 = vpack.c.b16 %v2274, %v2272
    %v2341 = vpack.c.b16 %v2275, %v2273
    %v2342 = vpack.c.b16 %v2278, %v2276
    %v2343 = vpack.c.b16 %v2279, %v2277
    %2408 = vmatprep.subr.bf16.mxu0 %v2281
    %2409 = vmatpush1.bf16.msra.mxu0 %v2280
    %2410 = vmatprep.subr.bf16.mxu0 %v2283
    %2411 = vmatpush1.bf16.msra.mxu0 %v2282
    %2412 = vmatprep.subr.bf16.mxu0 %v2285
    %2413 = vmatpush1.bf16.msra.mxu0 %v2284
    %2414 = vmatprep.subr.bf16.mxu0 %v2287
    %2415 = vmatpush1.bf16.msra.mxu0 %v2286
    %2416 = vmatprep.subr.bf16.mxu0 %v2289
    %2417 = vmatpush1.bf16.msra.mxu0 %v2288
    %2418 = vmatprep.subr.bf16.mxu0 %v2291
    %2419 = vmatpush1.bf16.msra.mxu0 %v2290
    %2420 = vmatprep.subr.bf16.mxu0 %v2293
    %2421 = vmatpush1.bf16.msra.mxu0 %v2292
    %2422 = vmatprep.subr.bf16.mxu0 %v2295
    %2423 = vmatpush1.bf16.msra.mxu0 %v2294
    %2424 = vmatprep.subr.bf16.mxu0 %v2297
    %2425 = vmatpush1.bf16.msra.mxu0 %v2296
    %2426 = vmatprep.subr.bf16.mxu0 %v2299
    %2427 = vmatpush1.bf16.msra.mxu0 %v2298
    %2428 = vmatprep.subr.bf16.mxu0 %v2301
    %2429 = vmatpush1.bf16.msra.mxu0 %v2300
    %2430 = vmatprep.subr.bf16.mxu0 %v2303
    %2431 = vmatpush1.bf16.msra.mxu0 %v2302
    %2432 = vmatprep.subr.bf16.mxu0 %v2305
    %2433 = vmatpush1.bf16.msra.mxu0 %v2304
    %2434 = vmatprep.subr.bf16.mxu0 %v2307
    %2435 = vmatpush1.bf16.msra.mxu0 %v2306
    %2436 = vmatprep.subr.bf16.mxu0 %v2309
    %2437 = vmatpush1.bf16.msra.mxu0 %v2308
    %2438 = vmatprep.subr.bf16.mxu0 %v2311
    %2439 = vmatpush1.bf16.msra.mxu0 %v2310
    %2440 = vmatprep.mubr.bf16.mxu0 %v2009
    %2441 = vmatmul.mubr.bf16.gmra.mrb[0].mxu0 %v2008
    %v2442 = vpop.f32.mrb[0].mxu0
    %v2443 = vadd.f32 %v2081, %v2442
    %v2444 = vpop.f32.mrb[0].mxu0
    %v2445 = vadd.f32 %v2085, %v2444
    %v2446 = vpop.f32.mrb[0].mxu0
    %v2447 = vpop.f32.mrb[0].mxu0
    %2448 = vdwg.mxu0
    %2449 = vmatprep.subr.bf16.mxu0 %v2313
    %2450 = vmatpush1.bf16.msra.mxu0 %v2312
    %2451 = vmatprep.subr.bf16.mxu0 %v2315
    %2452 = vmatpush1.bf16.msra.mxu0 %v2314
    %2453 = vmatprep.subr.bf16.mxu0 %v2317
    %2454 = vmatpush1.bf16.msra.mxu0 %v2316
    %2455 = vmatprep.subr.bf16.mxu0 %v2319
    %2456 = vmatpush1.bf16.msra.mxu0 %v2318
    %2457 = vmatprep.subr.bf16.mxu0 %v2321
    %2458 = vmatpush1.bf16.msra.mxu0 %v2320
    %2459 = vmatprep.subr.bf16.mxu0 %v2323
    %2460 = vmatpush1.bf16.msra.mxu0 %v2322
    %2461 = vmatprep.subr.bf16.mxu0 %v2325
    %2462 = vmatpush1.bf16.msra.mxu0 %v2324
    %2463 = vmatprep.subr.bf16.mxu0 %v2327
    %2464 = vmatpush1.bf16.msra.mxu0 %v2326
    %2465 = vmatprep.subr.bf16.mxu0 %v2329
    %2466 = vmatpush1.bf16.msra.mxu0 %v2328
    %2467 = vmatprep.subr.bf16.mxu0 %v2331
    %2468 = vmatpush1.bf16.msra.mxu0 %v2330
    %2469 = vmatprep.subr.bf16.mxu0 %v2333
    %2470 = vmatpush1.bf16.msra.mxu0 %v2332
    %2471 = vmatprep.subr.bf16.mxu0 %v2335
    %2472 = vmatpush1.bf16.msra.mxu0 %v2334
    %2473 = vmatprep.subr.bf16.mxu0 %v2337
    %2474 = vmatpush1.bf16.msra.mxu0 %v2336
    %2475 = vmatprep.subr.bf16.mxu0 %v2339
    %2476 = vmatpush1.bf16.msra.mxu0 %v2338
    %2477 = vmatprep.subr.bf16.mxu0 %v2341
    %2478 = vmatpush1.bf16.msra.mxu0 %v2340
    %2479 = vmatprep.subr.bf16.mxu0 %v2343
    %2480 = vmatpush1.bf16.msra.mxu0 %v2342
    %2481 = vmatprep.mubr.bf16.mxu0 %v2011
    %2482 = vmatmul.mubr.bf16.gmra.mrb[0].mxu0 %v2010
    %v2483 = vpop.f32.mrb[0].mxu0
    %v2484 = vadd.f32 %v2443, %v2483
    %v2485 = vpop.f32.mrb[0].mxu0
    %v2486 = vadd.f32 %v2445, %v2485
    %v2487 = vpop.f32.mrb[0].mxu0
    %v2488 = vpop.f32.mrb[0].mxu0
    %2489 = vdwg.mxu0
    %v2490 = vmul.f32 %v2486, 0.5
    %v2491 = vmul.f32 %v2490, 1.442695
    %v2492 = vpow.pop %v2491
    %v2493 = vld [vmem:[%s1] sm:$0xff]
    %v2494 = vmul.f32 %v2493, %v2492
    %v2495 = vadd.f32 %v2484, %v2494
    %v2496 = vpack.c.bf16 %v2495, %v2495
    %v2497 = vld [vmem:[%s6] sm:$0xff]
    %v2498 = vld [vmem:[%s6 + $0x8] sm:$0xff]
    %v2499 = vld [vmem:[%s6 + $0x10] sm:$0xff]
    %v2500 = vld [vmem:[%s6 + $0x18] sm:$0xff]
    %v2501 = vld [vmem:[%s6 + $0x20] sm:$0xff]
    %v2502 = vld [vmem:[%s6 + $0x28] sm:$0xff]
    %v2503 = vld [vmem:[%s6 + $0x30] sm:$0xff]
    %v2504 = vld [vmem:[%s6 + $0x38] sm:$0xff]
    %v2505 = vld [vmem:[%s6 + $0x40] sm:$0xff]
    %v2506 = vld [vmem:[%s6 + $0x48] sm:$0xff]
    %v2507 = vld [vmem:[%s6 + $0x50] sm:$0xff]
    %v2508 = vld [vmem:[%s6 + $0x58] sm:$0xff]
    %v2509 = vld [vmem:[%s6 + $0x60] sm:$0xff]
    %v2510 = vld [vmem:[%s6 + $0x68] sm:$0xff]
    %v2511 = vld [vmem:[%s6 + $0x70] sm:$0xff]
    %v2512 = vld [vmem:[%s6 + $0x78] sm:$0xff]
    %v2513 = vld [vmem:[%s6 + $0x80] sm:$0xff]
    %v2514 = vld [vmem:[%s6 + $0x88] sm:$0xff]
    %v2515 = vld [vmem:[%s6 + $0x90] sm:$0xff]
    %v2516 = vld [vmem:[%s6 + $0x98] sm:$0xff]
    %v2517 = vld [vmem:[%s6 + $0xa0] sm:$0xff]
    %v2518 = vld [vmem:[%s6 + $0xa8] sm:$0xff]
    %v2519 = vld [vmem:[%s6 + $0xb0] sm:$0xff]
    %v2520 = vld [vmem:[%s6 + $0xb8] sm:$0xff]
    %v2521 = vld [vmem:[%s6 + $0xc0] sm:$0xff]
    %v2522 = vld [vmem:[%s6 + $0xc8] sm:$0xff]
    %v2523 = vld [vmem:[%s6 + $0xd0] sm:$0xff]
    %v2524 = vld [vmem:[%s6 + $0xd8] sm:$0xff]
    %v2525 = vld [vmem:[%s6 + $0xe0] sm:$0xff]
    %v2526 = vld [vmem:[%s6 + $0xe8] sm:$0xff]
    %v2527 = vld [vmem:[%s6 + $0xf0] sm:$0xff]
    %v2528 = vld [vmem:[%s6 + $0xf8] sm:$0xff]
    %v2529 = vld [vmem:[#allocation6] sm:$0xf]
    %v2531 = vlaneseq
    %v2532 = vshrl.u32 %v2531, 7
    %v2533 = vsub.s32 0, %v2532
    %v2534 = vrot.slane %v2529, %v2533
    %v2535 = vlaneseq
    %v2536 = vshrl.u32 %v2535, 7
    %v2537 = vsub.s32 1, %v2536
    %v2538 = vrot.slane %v2529, %v2537
    %v2539 = vlaneseq
    %v2540 = vshrl.u32 %v2539, 7
    %v2541 = vsub.s32 2, %v2540
    %v2542 = vrot.slane %v2529, %v2541
    %v2543 = vlaneseq
    %v2544 = vshrl.u32 %v2543, 7
    %v2545 = vsub.s32 3, %v2544
    %v2546 = vrot.slane %v2529, %v2545
    %v2583 = vunpack.c.l.b16 %v2497
    %v2584 = vunpack.c.h.b16 %v2497
    %v2585 = vunpack.c.l.b16 %v2498
    %v2586 = vunpack.c.h.b16 %v2498
    %v2587 = vunpack.c.l.b16 %v2499
    %v2588 = vunpack.c.h.b16 %v2499
    %v2589 = vunpack.c.l.b16 %v2500
    %v2590 = vunpack.c.h.b16 %v2500
    %v2591 = vunpack.c.l.b16 %v2501
    %v2592 = vunpack.c.h.b16 %v2501
    %v2593 = vunpack.c.l.b16 %v2502
    %v2594 = vunpack.c.h.b16 %v2502
    %v2595 = vunpack.c.l.b16 %v2503
    %v2596 = vunpack.c.h.b16 %v2503
    %v2597 = vunpack.c.l.b16 %v2504
    %v2598 = vunpack.c.h.b16 %v2504
    %v2599 = vunpack.c.l.b16 %v2505
    %v2600 = vunpack.c.h.b16 %v2505
    %v2601 = vunpack.c.l.b16 %v2506
    %v2602 = vunpack.c.h.b16 %v2506
    %v2603 = vunpack.c.l.b16 %v2507
    %v2604 = vunpack.c.h.b16 %v2507
    %v2605 = vunpack.c.l.b16 %v2508
    %v2606 = vunpack.c.h.b16 %v2508
    %v2607 = vunpack.c.l.b16 %v2509
    %v2608 = vunpack.c.h.b16 %v2509
    %v2609 = vunpack.c.l.b16 %v2510
    %v2610 = vunpack.c.h.b16 %v2510
    %v2611 = vunpack.c.l.b16 %v2511
    %v2612 = vunpack.c.h.b16 %v2511
    %v2613 = vunpack.c.l.b16 %v2512
    %v2614 = vunpack.c.h.b16 %v2512
    %v2615 = vunpack.c.l.b16 %v2513
    %v2616 = vunpack.c.h.b16 %v2513
    %v2617 = vunpack.c.l.b16 %v2514
    %v2618 = vunpack.c.h.b16 %v2514
    %v2619 = vunpack.c.l.b16 %v2515
    %v2620 = vunpack.c.h.b16 %v2515
    %v2621 = vunpack.c.l.b16 %v2516
    %v2622 = vunpack.c.h.b16 %v2516
    %v2623 = vunpack.c.l.b16 %v2517
    %v2624 = vunpack.c.h.b16 %v2517
    %v2625 = vunpack.c.l.b16 %v2518
    %v2626 = vunpack.c.h.b16 %v2518
    %v2627 = vunpack.c.l.b16 %v2519
    %v2628 = vunpack.c.h.b16 %v2519
    %v2629 = vunpack.c.l.b16 %v2520
    %v2630 = vunpack.c.h.b16 %v2520
    %v2631 = vunpack.c.l.b16 %v2521
    %v2632 = vunpack.c.h.b16 %v2521
    %v2633 = vunpack.c.l.b16 %v2522
    %v2634 = vunpack.c.h.b16 %v2522
    %v2635 = vunpack.c.l.b16 %v2523
    %v2636 = vunpack.c.h.b16 %v2523
    %v2637 = vunpack.c.l.b16 %v2524
    %v2638 = vunpack.c.h.b16 %v2524
    %v2639 = vunpack.c.l.b16 %v2525
    %v2640 = vunpack.c.h.b16 %v2525
    %v2641 = vunpack.c.l.b16 %v2526
    %v2642 = vunpack.c.h.b16 %v2526
    %v2643 = vunpack.c.l.b16 %v2527
    %v2644 = vunpack.c.h.b16 %v2527
    %v2645 = vunpack.c.l.b16 %v2528
    %v2646 = vunpack.c.h.b16 %v2528
    %v2647 = vpack.c.b16 %v2587, %v2583
    %v2648 = vpack.c.b16 %v2588, %v2584
    %v2649 = vpack.c.b16 %v2589, %v2585
    %v2650 = vpack.c.b16 %v2590, %v2586
    %v2651 = vpack.c.b16 %v2595, %v2591
    %v2652 = vpack.c.b16 %v2596, %v2592
    %v2653 = vpack.c.b16 %v2597, %v2593
    %v2654 = vpack.c.b16 %v2598, %v2594
    %v2655 = vpack.c.b16 %v2603, %v2599
    %v2656 = vpack.c.b16 %v2604, %v2600
    %v2657 = vpack.c.b16 %v2605, %v2601
    %v2658 = vpack.c.b16 %v2606, %v2602
    %v2659 = vpack.c.b16 %v2611, %v2607
    %v2660 = vpack.c.b16 %v2612, %v2608
    %v2661 = vpack.c.b16 %v2613, %v2609
    %v2662 = vpack.c.b16 %v2614, %v2610
    %v2663 = vpack.c.b16 %v2619, %v2615
    %v2664 = vpack.c.b16 %v2620, %v2616
    %v2665 = vpack.c.b16 %v2621, %v2617
    %v2666 = vpack.c.b16 %v2622, %v2618
    %v2667 = vpack.c.b16 %v2627, %v2623
    %v2668 = vpack.c.b16 %v2628, %v2624
    %v2669 = vpack.c.b16 %v2629, %v2625
    %v2670 = vpack.c.b16 %v2630, %v2626
    %v2671 = vpack.c.b16 %v2635, %v2631
    %v2672 = vpack.c.b16 %v2636, %v2632
    %v2673 = vpack.c.b16 %v2637, %v2633
    %v2674 = vpack.c.b16 %v2638, %v2634
    %v2675 = vpack.c.b16 %v2643, %v2639
    %v2676 = vpack.c.b16 %v2644, %v2640
    %v2677 = vpack.c.b16 %v2645, %v2641
    %v2678 = vpack.c.b16 %v2646, %v2642
    %2711 = vmatprep.subr.bf16.mxu0 %v2648
    %2712 = vmatpush1.bf16.msra.mxu0 %v2647
    %2713 = vmatprep.subr.bf16.mxu0 %v2652
    %2714 = vmatpush1.bf16.msra.mxu0 %v2651
    %2715 = vmatprep.subr.bf16.mxu0 %v2656
    %2716 = vmatpush1.bf16.msra.mxu0 %v2655
    %2717 = vmatprep.subr.bf16.mxu0 %v2660
    %2718 = vmatpush1.bf16.msra.mxu0 %v2659
    %2719 = vmatprep.subr.bf16.mxu0 %v2664
    %2720 = vmatpush1.bf16.msra.mxu0 %v2663
    %2721 = vmatprep.subr.bf16.mxu0 %v2668
    %2722 = vmatpush1.bf16.msra.mxu0 %v2667
    %2723 = vmatprep.subr.bf16.mxu0 %v2672
    %2724 = vmatpush1.bf16.msra.mxu0 %v2671
    %2725 = vmatprep.subr.bf16.mxu0 %v2676
    %2726 = vmatpush1.bf16.msra.mxu0 %v2675
    %2727 = vmatprep.subr.bf16.mxu0 0
    %2728 = vmatpush1.bf16.msra.mxu0 0
    %2729 = vmatprep.subr.bf16.mxu0 0
    %2730 = vmatpush1.bf16.msra.mxu0 0
    %2731 = vmatprep.subr.bf16.mxu0 0
    %2732 = vmatpush1.bf16.msra.mxu0 0
    %2733 = vmatprep.subr.bf16.mxu0 0
    %2734 = vmatpush1.bf16.msra.mxu0 0
    %2735 = vmatprep.subr.bf16.mxu0 0
    %2736 = vmatpush1.bf16.msra.mxu0 0
    %2737 = vmatprep.subr.bf16.mxu0 0
    %2738 = vmatpush1.bf16.msra.mxu0 0
    %2739 = vmatprep.subr.bf16.mxu0 0
    %2740 = vmatpush1.bf16.msra.mxu0 0
    %2741 = vmatprep.subr.bf16.mxu0 0
    %2742 = vmatpush1.bf16.msra.mxu0 0
    %2743 = vmatprep.mubr.bf16.mxu0 0
    %2744 = vmatmul.mubr.bf16.gmra.mrb[0].mxu0 %v2496
    %v2745 = vpop.f32.mrb[0].mxu0
    %v2746 = vadd.f32 %v2534, %v2745
    %v2747 = vpop.f32.mrb[0].mxu0
    %v2748 = vadd.f32 %v2538, %v2747
    %v2749 = vpop.f32.mrb[0].mxu0
    %v2750 = vpop.f32.mrb[0].mxu0
    %2751 = vdwg.mxu0
    %2752 = vmatprep.subr.bf16.mxu0 %v2650
    %2753 = vmatpush1.bf16.msra.mxu0 %v2649
    %2754 = vmatprep.subr.bf16.mxu0 %v2654
    %2755 = vmatpush1.bf16.msra.mxu0 %v2653
    %2756 = vmatprep.subr.bf16.mxu0 %v2658
    %2757 = vmatpush1.bf16.msra.mxu0 %v2657
    %2758 = vmatprep.subr.bf16.mxu0 %v2662
    %2759 = vmatpush1.bf16.msra.mxu0 %v2661
    %2760 = vmatprep.subr.bf16.mxu0 %v2666
    %2761 = vmatpush1.bf16.msra.mxu0 %v2665
    %2762 = vmatprep.subr.bf16.mxu0 %v2670
    %2763 = vmatpush1.bf16.msra.mxu0 %v2669
    %2764 = vmatprep.subr.bf16.mxu0 %v2674
    %2765 = vmatpush1.bf16.msra.mxu0 %v2673
    %2766 = vmatprep.subr.bf16.mxu0 %v2678
    %2767 = vmatpush1.bf16.msra.mxu0 %v2677
    %2768 = vmatprep.subr.bf16.mxu0 0
    %2769 = vmatpush1.bf16.msra.mxu0 0
    %2770 = vmatprep.subr.bf16.mxu0 0
    %2771 = vmatpush1.bf16.msra.mxu0 0
    %2772 = vmatprep.subr.bf16.mxu0 0
    %2773 = vmatpush1.bf16.msra.mxu0 0
    %2774 = vmatprep.subr.bf16.mxu0 0
    %2775 = vmatpush1.bf16.msra.mxu0 0
    %2776 = vmatprep.subr.bf16.mxu0 0
    %2777 = vmatpush1.bf16.msra.mxu0 0
    %2778 = vmatprep.subr.bf16.mxu0 0
    %2779 = vmatpush1.bf16.msra.mxu0 0
    %2780 = vmatprep.subr.bf16.mxu0 0
    %2781 = vmatpush1.bf16.msra.mxu0 0
    %2782 = vmatprep.subr.bf16.mxu0 0
    %2783 = vmatpush1.bf16.msra.mxu0 0
    %2784 = vmatprep.mubr.bf16.mxu0 0
    %2785 = vmatmul.mubr.bf16.gmra.mrb[0].mxu0 %v2496
    %v2786 = vpop.f32.mrb[0].mxu0
    %v2787 = vadd.f32 %v2542, %v2786
    %v2788 = vpop.f32.mrb[0].mxu0
    %v2789 = vadd.f32 %v2546, %v2788
    %v2790 = vpop.f32.mrb[0].mxu0
    %v2791 = vpop.f32.mrb[0].mxu0
    %2792 = vdwg.mxu0
    %v2793 = vmax.f32 %v2746, 0.0
    %v2794 = vmax.f32 %v2748, 0.0
    %v2795 = vmax.f32 %v2787, 0.0
    %v2796 = vmax.f32 %v2789, 0.0
    %v2797 = vpack.c.bf16 %v2793, %v2793
    %v2798 = vpack.c.bf16 %v2794, %v2794
    %v2799 = vpack.c.bf16 %v2795, %v2795
    %v2800 = vpack.c.bf16 %v2796, %v2796
    %v2801 = vld [vmem:[#allocation7] sm:$0xff]
    %v2802 = vld [vmem:[#allocation7 + $0x8] sm:$0xff]
    %v2803 = vld [vmem:[#allocation7 + $0x10] sm:$0xff]
    %v2804 = vld [vmem:[#allocation7 + $0x18] sm:$0xff]
    %v2805 = vld [vmem:[#allocation7 + $0x20] sm:$0xff]
    %v2806 = vld [vmem:[#allocation7 + $0x28] sm:$0xff]
    %v2807 = vld [vmem:[#allocation7 + $0x30] sm:$0xff]
    %v2808 = vld [vmem:[#allocation7 + $0x38] sm:$0xff]
    %v2809 = vld [vmem:[#allocation7 + $0x40] sm:$0xff]
    %v2810 = vld [vmem:[#allocation7 + $0x48] sm:$0xff]
    %v2811 = vld [vmem:[#allocation7 + $0x50] sm:$0xff]
    %v2812 = vld [vmem:[#allocation7 + $0x58] sm:$0xff]
    %v2813 = vld [vmem:[#allocation7 + $0x60] sm:$0xff]
    %v2814 = vld [vmem:[#allocation7 + $0x68] sm:$0xff]
    %v2815 = vld [vmem:[#allocation7 + $0x70] sm:$0xff]
    %v2816 = vld [vmem:[#allocation7 + $0x78] sm:$0xff]
    %v2817 = vld [vmem:[#allocation7 + $0x80] sm:$0xff]
    %v2818 = vld [vmem:[#allocation7 + $0x88] sm:$0xff]
    %v2819 = vld [vmem:[#allocation7 + $0x90] sm:$0xff]
    %v2820 = vld [vmem:[#allocation7 + $0x98] sm:$0xff]
    %v2821 = vld [vmem:[#allocation7 + $0xa0] sm:$0xff]
    %v2822 = vld [vmem:[#allocation7 + $0xa8] sm:$0xff]
    %v2823 = vld [vmem:[#allocation7 + $0xb0] sm:$0xff]
    %v2824 = vld [vmem:[#allocation7 + $0xb8] sm:$0xff]
    %v2825 = vld [vmem:[#allocation7 + $0xc0] sm:$0xff]
    %v2826 = vld [vmem:[#allocation7 + $0xc8] sm:$0xff]
    %v2827 = vld [vmem:[#allocation7 + $0xd0] sm:$0xff]
    %v2828 = vld [vmem:[#allocation7 + $0xd8] sm:$0xff]
    %v2829 = vld [vmem:[#allocation7 + $0xe0] sm:$0xff]
    %v2830 = vld [vmem:[#allocation7 + $0xe8] sm:$0xff]
    %v2831 = vld [vmem:[#allocation7 + $0xf0] sm:$0xff]
    %v2832 = vld [vmem:[#allocation7 + $0xf8] sm:$0xff]
    %v2833 = vld [vmem:[#allocation7 + $0x100] sm:$0xff]
    %v2834 = vld [vmem:[#allocation7 + $0x108] sm:$0xff]
    %v2835 = vld [vmem:[#allocation7 + $0x110] sm:$0xff]
    %v2836 = vld [vmem:[#allocation7 + $0x118] sm:$0xff]
    %v2837 = vld [vmem:[#allocation7 + $0x120] sm:$0xff]
    %v2838 = vld [vmem:[#allocation7 + $0x128] sm:$0xff]
    %v2839 = vld [vmem:[#allocation7 + $0x130] sm:$0xff]
    %v2840 = vld [vmem:[#allocation7 + $0x138] sm:$0xff]
    %v2841 = vld [vmem:[#allocation7 + $0x140] sm:$0xff]
    %v2842 = vld [vmem:[#allocation7 + $0x148] sm:$0xff]
    %v2843 = vld [vmem:[#allocation7 + $0x150] sm:$0xff]
    %v2844 = vld [vmem:[#allocation7 + $0x158] sm:$0xff]
    %v2845 = vld [vmem:[#allocation7 + $0x160] sm:$0xff]
    %v2846 = vld [vmem:[#allocation7 + $0x168] sm:$0xff]
    %v2847 = vld [vmem:[#allocation7 + $0x170] sm:$0xff]
    %v2848 = vld [vmem:[#allocation7 + $0x178] sm:$0xff]
    %v2849 = vld [vmem:[#allocation7 + $0x180] sm:$0xff]
    %v2850 = vld [vmem:[#allocation7 + $0x188] sm:$0xff]
    %v2851 = vld [vmem:[#allocation7 + $0x190] sm:$0xff]
    %v2852 = vld [vmem:[#allocation7 + $0x198] sm:$0xff]
    %v2853 = vld [vmem:[#allocation7 + $0x1a0] sm:$0xff]
    %v2854 = vld [vmem:[#allocation7 + $0x1a8] sm:$0xff]
    %v2855 = vld [vmem:[#allocation7 + $0x1b0] sm:$0xff]
    %v2856 = vld [vmem:[#allocation7 + $0x1b8] sm:$0xff]
    %v2857 = vld [vmem:[#allocation7 + $0x1c0] sm:$0xff]
    %v2858 = vld [vmem:[#allocation7 + $0x1c8] sm:$0xff]
    %v2859 = vld [vmem:[#allocation7 + $0x1d0] sm:$0xff]
    %v2860 = vld [vmem:[#allocation7 + $0x1d8] sm:$0xff]
    %v2861 = vld [vmem:[#allocation7 + $0x1e0] sm:$0xff]
    %v2862 = vld [vmem:[#allocation7 + $0x1e8] sm:$0xff]
    %v2863 = vld [vmem:[#allocation7 + $0x1f0] sm:$0xff]
    %v2864 = vld [vmem:[#allocation7 + $0x1f8] sm:$0xff]
    %v2865 = vld [vmem:[#allocation7 + $0x200] sm:$0xff]
    %v2866 = vld [vmem:[#allocation7 + $0x208] sm:$0xff]
    %v2867 = vld [vmem:[#allocation7 + $0x210] sm:$0xff]
    %v2868 = vld [vmem:[#allocation7 + $0x218] sm:$0xff]
    %v2869 = vld [vmem:[#allocation7 + $0x220] sm:$0xff]
    %v2870 = vld [vmem:[#allocation7 + $0x228] sm:$0xff]
    %v2871 = vld [vmem:[#allocation7 + $0x230] sm:$0xff]
    %v2872 = vld [vmem:[#allocation7 + $0x238] sm:$0xff]
    %v2873 = vld [vmem:[#allocation7 + $0x240] sm:$0xff]
    %v2874 = vld [vmem:[#allocation7 + $0x248] sm:$0xff]
    %v2875 = vld [vmem:[#allocation7 + $0x250] sm:$0xff]
    %v2876 = vld [vmem:[#allocation7 + $0x258] sm:$0xff]
    %v2877 = vld [vmem:[#allocation7 + $0x260] sm:$0xff]
    %v2878 = vld [vmem:[#allocation7 + $0x268] sm:$0xff]
    %v2879 = vld [vmem:[#allocation7 + $0x270] sm:$0xff]
    %v2880 = vld [vmem:[#allocation7 + $0x278] sm:$0xff]
    %v2881 = vld [vmem:[#allocation7 + $0x280] sm:$0xff]
    %v2882 = vld [vmem:[#allocation7 + $0x288] sm:$0xff]
    %v2883 = vld [vmem:[#allocation7 + $0x290] sm:$0xff]
    %v2884 = vld [vmem:[#allocation7 + $0x298] sm:$0xff]
    %v2885 = vld [vmem:[#allocation7 + $0x2a0] sm:$0xff]
    %v2886 = vld [vmem:[#allocation7 + $0x2a8] sm:$0xff]
    %v2887 = vld [vmem:[#allocation7 + $0x2b0] sm:$0xff]
    %v2888 = vld [vmem:[#allocation7 + $0x2b8] sm:$0xff]
    %v2889 = vld [vmem:[#allocation7 + $0x2c0] sm:$0xff]
    %v2890 = vld [vmem:[#allocation7 + $0x2c8] sm:$0xff]
    %v2891 = vld [vmem:[#allocation7 + $0x2d0] sm:$0xff]
    %v2892 = vld [vmem:[#allocation7 + $0x2d8] sm:$0xff]
    %v2893 = vld [vmem:[#allocation7 + $0x2e0] sm:$0xff]
    %v2894 = vld [vmem:[#allocation7 + $0x2e8] sm:$0xff]
    %v2895 = vld [vmem:[#allocation7 + $0x2f0] sm:$0xff]
    %v2896 = vld [vmem:[#allocation7 + $0x2f8] sm:$0xff]
    %v2897 = vld [vmem:[#allocation7 + $0x300] sm:$0xff]
    %v2898 = vld [vmem:[#allocation7 + $0x308] sm:$0xff]
    %v2899 = vld [vmem:[#allocation7 + $0x310] sm:$0xff]
    %v2900 = vld [vmem:[#allocation7 + $0x318] sm:$0xff]
    %v2901 = vld [vmem:[#allocation7 + $0x320] sm:$0xff]
    %v2902 = vld [vmem:[#allocation7 + $0x328] sm:$0xff]
    %v2903 = vld [vmem:[#allocation7 + $0x330] sm:$0xff]
    %v2904 = vld [vmem:[#allocation7 + $0x338] sm:$0xff]
    %v2905 = vld [vmem:[#allocation7 + $0x340] sm:$0xff]
    %v2906 = vld [vmem:[#allocation7 + $0x348] sm:$0xff]
    %v2907 = vld [vmem:[#allocation7 + $0x350] sm:$0xff]
    %v2908 = vld [vmem:[#allocation7 + $0x358] sm:$0xff]
    %v2909 = vld [vmem:[#allocation7 + $0x360] sm:$0xff]
    %v2910 = vld [vmem:[#allocation7 + $0x368] sm:$0xff]
    %v2911 = vld [vmem:[#allocation7 + $0x370] sm:$0xff]
    %v2912 = vld [vmem:[#allocation7 + $0x378] sm:$0xff]
    %v2913 = vld [vmem:[#allocation7 + $0x380] sm:$0xff]
    %v2914 = vld [vmem:[#allocation7 + $0x388] sm:$0xff]
    %v2915 = vld [vmem:[#allocation7 + $0x390] sm:$0xff]
    %v2916 = vld [vmem:[#allocation7 + $0x398] sm:$0xff]
    %v2917 = vld [vmem:[#allocation7 + $0x3a0] sm:$0xff]
    %v2918 = vld [vmem:[#allocation7 + $0x3a8] sm:$0xff]
    %v2919 = vld [vmem:[#allocation7 + $0x3b0] sm:$0xff]
    %v2920 = vld [vmem:[#allocation7 + $0x3b8] sm:$0xff]
    %v2921 = vld [vmem:[#allocation7 + $0x3c0] sm:$0xff]
    %v2922 = vld [vmem:[#allocation7 + $0x3c8] sm:$0xff]
    %v2923 = vld [vmem:[#allocation7 + $0x3d0] sm:$0xff]
    %v2924 = vld [vmem:[#allocation7 + $0x3d8] sm:$0xff]
    %v2925 = vld [vmem:[#allocation7 + $0x3e0] sm:$0xff]
    %v2926 = vld [vmem:[#allocation7 + $0x3e8] sm:$0xff]
    %v2927 = vld [vmem:[#allocation7 + $0x3f0] sm:$0xff]
    %v2928 = vld [vmem:[#allocation7 + $0x3f8] sm:$0xff]
    %v2929 = vld [vmem:[#allocation7 + $0x400] sm:$0xff]
    %v2930 = vld [vmem:[#allocation7 + $0x408] sm:$0xff]
    %v2931 = vld [vmem:[#allocation7 + $0x410] sm:$0xff]
    %v2932 = vld [vmem:[#allocation7 + $0x418] sm:$0xff]
    %v2933 = vld [vmem:[#allocation7 + $0x420] sm:$0xff]
    %v2934 = vld [vmem:[#allocation7 + $0x428] sm:$0xff]
    %v2935 = vld [vmem:[#allocation7 + $0x430] sm:$0xff]
    %v2936 = vld [vmem:[#allocation7 + $0x438] sm:$0xff]
    %v2937 = vld [vmem:[#allocation7 + $0x440] sm:$0xff]
    %v2938 = vld [vmem:[#allocation7 + $0x448] sm:$0xff]
    %v2939 = vld [vmem:[#allocation7 + $0x450] sm:$0xff]
    %v2940 = vld [vmem:[#allocation7 + $0x458] sm:$0xff]
    %v2941 = vld [vmem:[#allocation7 + $0x460] sm:$0xff]
    %v2942 = vld [vmem:[#allocation7 + $0x468] sm:$0xff]
    %v2943 = vld [vmem:[#allocation7 + $0x470] sm:$0xff]
    %v2944 = vld [vmem:[#allocation7 + $0x478] sm:$0xff]
    %v2945 = vld [vmem:[#allocation7 + $0x480] sm:$0xff]
    %v2946 = vld [vmem:[#allocation7 + $0x488] sm:$0xff]
    %v2947 = vld [vmem:[#allocation7 + $0x490] sm:$0xff]
    %v2948 = vld [vmem:[#allocation7 + $0x498] sm:$0xff]
    %v2949 = vld [vmem:[#allocation7 + $0x4a0] sm:$0xff]
    %v2950 = vld [vmem:[#allocation7 + $0x4a8] sm:$0xff]
    %v2951 = vld [vmem:[#allocation7 + $0x4b0] sm:$0xff]
    %v2952 = vld [vmem:[#allocation7 + $0x4b8] sm:$0xff]
    %v2953 = vld [vmem:[#allocation7 + $0x4c0] sm:$0xff]
    %v2954 = vld [vmem:[#allocation7 + $0x4c8] sm:$0xff]
    %v2955 = vld [vmem:[#allocation7 + $0x4d0] sm:$0xff]
    %v2956 = vld [vmem:[#allocation7 + $0x4d8] sm:$0xff]
    %v2957 = vld [vmem:[#allocation7 + $0x4e0] sm:$0xff]
    %v2958 = vld [vmem:[#allocation7 + $0x4e8] sm:$0xff]
    %v2959 = vld [vmem:[#allocation7 + $0x4f0] sm:$0xff]
    %v2960 = vld [vmem:[#allocation7 + $0x4f8] sm:$0xff]
    %v2961 = vld [vmem:[#allocation7 + $0x500] sm:$0xff]
    %v2962 = vld [vmem:[#allocation7 + $0x508] sm:$0xff]
    %v2963 = vld [vmem:[#allocation7 + $0x510] sm:$0xff]
    %v2964 = vld [vmem:[#allocation7 + $0x518] sm:$0xff]
    %v2965 = vld [vmem:[#allocation7 + $0x520] sm:$0xff]
    %v2966 = vld [vmem:[#allocation7 + $0x528] sm:$0xff]
    %v2967 = vld [vmem:[#allocation7 + $0x530] sm:$0xff]
    %v2968 = vld [vmem:[#allocation7 + $0x538] sm:$0xff]
    %v2969 = vld [vmem:[#allocation7 + $0x540] sm:$0xff]
    %v2970 = vld [vmem:[#allocation7 + $0x548] sm:$0xff]
    %v2971 = vld [vmem:[#allocation7 + $0x550] sm:$0xff]
    %v2972 = vld [vmem:[#allocation7 + $0x558] sm:$0xff]
    %v2973 = vld [vmem:[#allocation7 + $0x560] sm:$0xff]
    %v2974 = vld [vmem:[#allocation7 + $0x568] sm:$0xff]
    %v2975 = vld [vmem:[#allocation7 + $0x570] sm:$0xff]
    %v2976 = vld [vmem:[#allocation7 + $0x578] sm:$0xff]
    %v2977 = vld [vmem:[#allocation7 + $0x580] sm:$0xff]
    %v2978 = vld [vmem:[#allocation7 + $0x588] sm:$0xff]
    %v2979 = vld [vmem:[#allocation7 + $0x590] sm:$0xff]
    %v2980 = vld [vmem:[#allocation7 + $0x598] sm:$0xff]
    %v2981 = vld [vmem:[#allocation7 + $0x5a0] sm:$0xff]
    %v2982 = vld [vmem:[#allocation7 + $0x5a8] sm:$0xff]
    %v2983 = vld [vmem:[#allocation7 + $0x5b0] sm:$0xff]
    %v2984 = vld [vmem:[#allocation7 + $0x5b8] sm:$0xff]
    %v2985 = vld [vmem:[#allocation7 + $0x5c0] sm:$0xff]
    %v2986 = vld [vmem:[#allocation7 + $0x5c8] sm:$0xff]
    %v2987 = vld [vmem:[#allocation7 + $0x5d0] sm:$0xff]
    %v2988 = vld [vmem:[#allocation7 + $0x5d8] sm:$0xff]
    %v2989 = vld [vmem:[#allocation7 + $0x5e0] sm:$0xff]
    %v2990 = vld [vmem:[#allocation7 + $0x5e8] sm:$0xff]
    %v2991 = vld [vmem:[#allocation7 + $0x5f0] sm:$0xff]
    %v2992 = vld [vmem:[#allocation7 + $0x5f8] sm:$0xff]
    %v2993 = vld [vmem:[#allocation7 + $0x600] sm:$0xff]
    %v2994 = vld [vmem:[#allocation7 + $0x608] sm:$0xff]
    %v2995 = vld [vmem:[#allocation7 + $0x610] sm:$0xff]
    %v2996 = vld [vmem:[#allocation7 + $0x618] sm:$0xff]
    %v2997 = vld [vmem:[#allocation7 + $0x620] sm:$0xff]
    %v2998 = vld [vmem:[#allocation7 + $0x628] sm:$0xff]
    %v2999 = vld [vmem:[#allocation7 + $0x630] sm:$0xff]
    %v3000 = vld [vmem:[#allocation7 + $0x638] sm:$0xff]
    %v3001 = vld [vmem:[#allocation7 + $0x640] sm:$0xff]
    %v3002 = vld [vmem:[#allocation7 + $0x648] sm:$0xff]
    %v3003 = vld [vmem:[#allocation7 + $0x650] sm:$0xff]
    %v3004 = vld [vmem:[#allocation7 + $0x658] sm:$0xff]
    %v3005 = vld [vmem:[#allocation7 + $0x660] sm:$0xff]
    %v3006 = vld [vmem:[#allocation7 + $0x668] sm:$0xff]
    %v3007 = vld [vmem:[#allocation7 + $0x670] sm:$0xff]
    %v3008 = vld [vmem:[#allocation7 + $0x678] sm:$0xff]
    %v3009 = vld [vmem:[#allocation7 + $0x680] sm:$0xff]
    %v3010 = vld [vmem:[#allocation7 + $0x688] sm:$0xff]
    %v3011 = vld [vmem:[#allocation7 + $0x690] sm:$0xff]
    %v3012 = vld [vmem:[#allocation7 + $0x698] sm:$0xff]
    %v3013 = vld [vmem:[#allocation7 + $0x6a0] sm:$0xff]
    %v3014 = vld [vmem:[#allocation7 + $0x6a8] sm:$0xff]
    %v3015 = vld [vmem:[#allocation7 + $0x6b0] sm:$0xff]
    %v3016 = vld [vmem:[#allocation7 + $0x6b8] sm:$0xff]
    %v3017 = vld [vmem:[#allocation7 + $0x6c0] sm:$0xff]
    %v3018 = vld [vmem:[#allocation7 + $0x6c8] sm:$0xff]
    %v3019 = vld [vmem:[#allocation7 + $0x6d0] sm:$0xff]
    %v3020 = vld [vmem:[#allocation7 + $0x6d8] sm:$0xff]
    %v3021 = vld [vmem:[#allocation7 + $0x6e0] sm:$0xff]
    %v3022 = vld [vmem:[#allocation7 + $0x6e8] sm:$0xff]
    %v3023 = vld [vmem:[#allocation7 + $0x6f0] sm:$0xff]
    %v3024 = vld [vmem:[#allocation7 + $0x6f8] sm:$0xff]
    %v3025 = vld [vmem:[#allocation7 + $0x700] sm:$0xff]
    %v3026 = vld [vmem:[#allocation7 + $0x708] sm:$0xff]
    %v3027 = vld [vmem:[#allocation7 + $0x710] sm:$0xff]
    %v3028 = vld [vmem:[#allocation7 + $0x718] sm:$0xff]
    %v3029 = vld [vmem:[#allocation7 + $0x720] sm:$0xff]
    %v3030 = vld [vmem:[#allocation7 + $0x728] sm:$0xff]
    %v3031 = vld [vmem:[#allocation7 + $0x730] sm:$0xff]
    %v3032 = vld [vmem:[#allocation7 + $0x738] sm:$0xff]
    %v3033 = vld [vmem:[#allocation7 + $0x740] sm:$0xff]
    %v3034 = vld [vmem:[#allocation7 + $0x748] sm:$0xff]
    %v3035 = vld [vmem:[#allocation7 + $0x750] sm:$0xff]
    %v3036 = vld [vmem:[#allocation7 + $0x758] sm:$0xff]
    %v3037 = vld [vmem:[#allocation7 + $0x760] sm:$0xff]
    %v3038 = vld [vmem:[#allocation7 + $0x768] sm:$0xff]
    %v3039 = vld [vmem:[#allocation7 + $0x770] sm:$0xff]
    %v3040 = vld [vmem:[#allocation7 + $0x778] sm:$0xff]
    %v3041 = vld [vmem:[#allocation7 + $0x780] sm:$0xff]
    %v3042 = vld [vmem:[#allocation7 + $0x788] sm:$0xff]
    %v3043 = vld [vmem:[#allocation7 + $0x790] sm:$0xff]
    %v3044 = vld [vmem:[#allocation7 + $0x798] sm:$0xff]
    %v3045 = vld [vmem:[#allocation7 + $0x7a0] sm:$0xff]
    %v3046 = vld [vmem:[#allocation7 + $0x7a8] sm:$0xff]
    %v3047 = vld [vmem:[#allocation7 + $0x7b0] sm:$0xff]
    %v3048 = vld [vmem:[#allocation7 + $0x7b8] sm:$0xff]
    %v3049 = vld [vmem:[#allocation7 + $0x7c0] sm:$0xff]
    %v3050 = vld [vmem:[#allocation7 + $0x7c8] sm:$0xff]
    %v3051 = vld [vmem:[#allocation7 + $0x7d0] sm:$0xff]
    %v3052 = vld [vmem:[#allocation7 + $0x7d8] sm:$0xff]
    %v3053 = vld [vmem:[#allocation7 + $0x7e0] sm:$0xff]
    %v3054 = vld [vmem:[#allocation7 + $0x7e8] sm:$0xff]
    %v3055 = vld [vmem:[#allocation7 + $0x7f0] sm:$0xff]
    %v3056 = vld [vmem:[#allocation7 + $0x7f8] sm:$0xff]
    %v3057 = vld [vmem:[#allocation9] sm:$0xff]
    %v3059 = vlaneseq
    %v3060 = vshrl.u32 %v3059, 7
    %v3061 = vsub.s32 0, %v3060
    %v3062 = vrot.slane %v3057, %v3061
    %v3063 = vlaneseq
    %v3064 = vshrl.u32 %v3063, 7
    %v3065 = vsub.s32 1, %v3064
    %v3066 = vrot.slane %v3057, %v3065
    %v3067 = vlaneseq
    %v3068 = vshrl.u32 %v3067, 7
    %v3069 = vsub.s32 2, %v3068
    %v3070 = vrot.slane %v3057, %v3069
    %v3071 = vlaneseq
    %v3072 = vshrl.u32 %v3071, 7
    %v3073 = vsub.s32 3, %v3072
    %v3074 = vrot.slane %v3057, %v3073
    %v3075 = vlaneseq
    %v3076 = vshrl.u32 %v3075, 7
    %v3077 = vsub.s32 4, %v3076
    %v3078 = vrot.slane %v3057, %v3077
    %v3079 = vlaneseq
    %v3080 = vshrl.u32 %v3079, 7
    %v3081 = vsub.s32 5, %v3080
    %v3082 = vrot.slane %v3057, %v3081
    %v3083 = vlaneseq
    %v3084 = vshrl.u32 %v3083, 7
    %v3085 = vsub.s32 6, %v3084
    %v3086 = vrot.slane %v3057, %v3085
    %v3087 = vlaneseq
    %v3088 = vshrl.u32 %v3087, 7
    %v3089 = vsub.s32 7, %v3088
    %v3090 = vrot.slane %v3057, %v3089
    %v3355 = vunpack.c.l.b16 %v2801
    %v3356 = vunpack.c.h.b16 %v2801
    %v3357 = vunpack.c.l.b16 %v2802
    %v3358 = vunpack.c.h.b16 %v2802
    %v3359 = vunpack.c.l.b16 %v2803
    %v3360 = vunpack.c.h.b16 %v2803
    %v3361 = vunpack.c.l.b16 %v2804
    %v3362 = vunpack.c.h.b16 %v2804
    %v3363 = vunpack.c.l.b16 %v2805
    %v3364 = vunpack.c.h.b16 %v2805
    %v3365 = vunpack.c.l.b16 %v2806
    %v3366 = vunpack.c.h.b16 %v2806
    %v3367 = vunpack.c.l.b16 %v2807
    %v3368 = vunpack.c.h.b16 %v2807
    %v3369 = vunpack.c.l.b16 %v2808
    %v3370 = vunpack.c.h.b16 %v2808
    %v3371 = vunpack.c.l.b16 %v2809
    %v3372 = vunpack.c.h.b16 %v2809
    %v3373 = vunpack.c.l.b16 %v2810
    %v3374 = vunpack.c.h.b16 %v2810
    %v3375 = vunpack.c.l.b16 %v2811
    %v3376 = vunpack.c.h.b16 %v2811
    %v3377 = vunpack.c.l.b16 %v2812
    %v3378 = vunpack.c.h.b16 %v2812
    %v3379 = vunpack.c.l.b16 %v2813
    %v3380 = vunpack.c.h.b16 %v2813
    %v3381 = vunpack.c.l.b16 %v2814
    %v3382 = vunpack.c.h.b16 %v2814
    %v3383 = vunpack.c.l.b16 %v2815
    %v3384 = vunpack.c.h.b16 %v2815
    %v3385 = vunpack.c.l.b16 %v2816
    %v3386 = vunpack.c.h.b16 %v2816
    %v3387 = vunpack.c.l.b16 %v2817
    %v3388 = vunpack.c.h.b16 %v2817
    %v3389 = vunpack.c.l.b16 %v2818
    %v3390 = vunpack.c.h.b16 %v2818
    %v3391 = vunpack.c.l.b16 %v2819
    %v3392 = vunpack.c.h.b16 %v2819
    %v3393 = vunpack.c.l.b16 %v2820
    %v3394 = vunpack.c.h.b16 %v2820
    %v3395 = vunpack.c.l.b16 %v2821
    %v3396 = vunpack.c.h.b16 %v2821
    %v3397 = vunpack.c.l.b16 %v2822
    %v3398 = vunpack.c.h.b16 %v2822
    %v3399 = vunpack.c.l.b16 %v2823
    %v3400 = vunpack.c.h.b16 %v2823
    %v3401 = vunpack.c.l.b16 %v2824
    %v3402 = vunpack.c.h.b16 %v2824
    %v3403 = vunpack.c.l.b16 %v2825
    %v3404 = vunpack.c.h.b16 %v2825
    %v3405 = vunpack.c.l.b16 %v2826
    %v3406 = vunpack.c.h.b16 %v2826
    %v3407 = vunpack.c.l.b16 %v2827
    %v3408 = vunpack.c.h.b16 %v2827
    %v3409 = vunpack.c.l.b16 %v2828
    %v3410 = vunpack.c.h.b16 %v2828
    %v3411 = vunpack.c.l.b16 %v2829
    %v3412 = vunpack.c.h.b16 %v2829
    %v3413 = vunpack.c.l.b16 %v2830
    %v3414 = vunpack.c.h.b16 %v2830
    %v3415 = vunpack.c.l.b16 %v2831
    %v3416 = vunpack.c.h.b16 %v2831
    %v3417 = vunpack.c.l.b16 %v2832
    %v3418 = vunpack.c.h.b16 %v2832
    %v3419 = vunpack.c.l.b16 %v2833
    %v3420 = vunpack.c.h.b16 %v2833
    %v3421 = vunpack.c.l.b16 %v2834
    %v3422 = vunpack.c.h.b16 %v2834
    %v3423 = vunpack.c.l.b16 %v2835
    %v3424 = vunpack.c.h.b16 %v2835
    %v3425 = vunpack.c.l.b16 %v2836
    %v3426 = vunpack.c.h.b16 %v2836
    %v3427 = vunpack.c.l.b16 %v2837
    %v3428 = vunpack.c.h.b16 %v2837
    %v3429 = vunpack.c.l.b16 %v2838
    %v3430 = vunpack.c.h.b16 %v2838
    %v3431 = vunpack.c.l.b16 %v2839
    %v3432 = vunpack.c.h.b16 %v2839
    %v3433 = vunpack.c.l.b16 %v2840
    %v3434 = vunpack.c.h.b16 %v2840
    %v3435 = vunpack.c.l.b16 %v2841
    %v3436 = vunpack.c.h.b16 %v2841
    %v3437 = vunpack.c.l.b16 %v2842
    %v3438 = vunpack.c.h.b16 %v2842
    %v3439 = vunpack.c.l.b16 %v2843
    %v3440 = vunpack.c.h.b16 %v2843
    %v3441 = vunpack.c.l.b16 %v2844
    %v3442 = vunpack.c.h.b16 %v2844
    %v3443 = vunpack.c.l.b16 %v2845
    %v3444 = vunpack.c.h.b16 %v2845
    %v3445 = vunpack.c.l.b16 %v2846
    %v3446 = vunpack.c.h.b16 %v2846
    %v3447 = vunpack.c.l.b16 %v2847
    %v3448 = vunpack.c.h.b16 %v2847
    %v3449 = vunpack.c.l.b16 %v2848
    %v3450 = vunpack.c.h.b16 %v2848
    %v3451 = vunpack.c.l.b16 %v2849
    %v3452 = vunpack.c.h.b16 %v2849
    %v3453 = vunpack.c.l.b16 %v2850
    %v3454 = vunpack.c.h.b16 %v2850
    %v3455 = vunpack.c.l.b16 %v2851
    %v3456 = vunpack.c.h.b16 %v2851
    %v3457 = vunpack.c.l.b16 %v2852
    %v3458 = vunpack.c.h.b16 %v2852
    %v3459 = vunpack.c.l.b16 %v2853
    %v3460 = vunpack.c.h.b16 %v2853
    %v3461 = vunpack.c.l.b16 %v2854
    %v3462 = vunpack.c.h.b16 %v2854
    %v3463 = vunpack.c.l.b16 %v2855
    %v3464 = vunpack.c.h.b16 %v2855
    %v3465 = vunpack.c.l.b16 %v2856
    %v3466 = vunpack.c.h.b16 %v2856
    %v3467 = vunpack.c.l.b16 %v2857
    %v3468 = vunpack.c.h.b16 %v2857
    %v3469 = vunpack.c.l.b16 %v2858
    %v3470 = vunpack.c.h.b16 %v2858
    %v3471 = vunpack.c.l.b16 %v2859
    %v3472 = vunpack.c.h.b16 %v2859
    %v3473 = vunpack.c.l.b16 %v2860
    %v3474 = vunpack.c.h.b16 %v2860
    %v3475 = vunpack.c.l.b16 %v2861
    %v3476 = vunpack.c.h.b16 %v2861
    %v3477 = vunpack.c.l.b16 %v2862
    %v3478 = vunpack.c.h.b16 %v2862
    %v3479 = vunpack.c.l.b16 %v2863
    %v3480 = vunpack.c.h.b16 %v2863
    %v3481 = vunpack.c.l.b16 %v2864
    %v3482 = vunpack.c.h.b16 %v2864
    %v3483 = vunpack.c.l.b16 %v2865
    %v3484 = vunpack.c.h.b16 %v2865
    %v3485 = vunpack.c.l.b16 %v2866
    %v3486 = vunpack.c.h.b16 %v2866
    %v3487 = vunpack.c.l.b16 %v2867
    %v3488 = vunpack.c.h.b16 %v2867
    %v3489 = vunpack.c.l.b16 %v2868
    %v3490 = vunpack.c.h.b16 %v2868
    %v3491 = vunpack.c.l.b16 %v2869
    %v3492 = vunpack.c.h.b16 %v2869
    %v3493 = vunpack.c.l.b16 %v2870
    %v3494 = vunpack.c.h.b16 %v2870
    %v3495 = vunpack.c.l.b16 %v2871
    %v3496 = vunpack.c.h.b16 %v2871
    %v3497 = vunpack.c.l.b16 %v2872
    %v3498 = vunpack.c.h.b16 %v2872
    %v3499 = vunpack.c.l.b16 %v2873
    %v3500 = vunpack.c.h.b16 %v2873
    %v3501 = vunpack.c.l.b16 %v2874
    %v3502 = vunpack.c.h.b16 %v2874
    %v3503 = vunpack.c.l.b16 %v2875
    %v3504 = vunpack.c.h.b16 %v2875
    %v3505 = vunpack.c.l.b16 %v2876
    %v3506 = vunpack.c.h.b16 %v2876
    %v3507 = vunpack.c.l.b16 %v2877
    %v3508 = vunpack.c.h.b16 %v2877
    %v3509 = vunpack.c.l.b16 %v2878
    %v3510 = vunpack.c.h.b16 %v2878
    %v3511 = vunpack.c.l.b16 %v2879
    %v3512 = vunpack.c.h.b16 %v2879
    %v3513 = vunpack.c.l.b16 %v2880
    %v3514 = vunpack.c.h.b16 %v2880
    %v3515 = vunpack.c.l.b16 %v2881
    %v3516 = vunpack.c.h.b16 %v2881
    %v3517 = vunpack.c.l.b16 %v2882
    %v3518 = vunpack.c.h.b16 %v2882
    %v3519 = vunpack.c.l.b16 %v2883
    %v3520 = vunpack.c.h.b16 %v2883
    %v3521 = vunpack.c.l.b16 %v2884
    %v3522 = vunpack.c.h.b16 %v2884
    %v3523 = vunpack.c.l.b16 %v2885
    %v3524 = vunpack.c.h.b16 %v2885
    %v3525 = vunpack.c.l.b16 %v2886
    %v3526 = vunpack.c.h.b16 %v2886
    %v3527 = vunpack.c.l.b16 %v2887
    %v3528 = vunpack.c.h.b16 %v2887
    %v3529 = vunpack.c.l.b16 %v2888
    %v3530 = vunpack.c.h.b16 %v2888
    %v3531 = vunpack.c.l.b16 %v2889
    %v3532 = vunpack.c.h.b16 %v2889
    %v3533 = vunpack.c.l.b16 %v2890
    %v3534 = vunpack.c.h.b16 %v2890
    %v3535 = vunpack.c.l.b16 %v2891
    %v3536 = vunpack.c.h.b16 %v2891
    %v3537 = vunpack.c.l.b16 %v2892
    %v3538 = vunpack.c.h.b16 %v2892
    %v3539 = vunpack.c.l.b16 %v2893
    %v3540 = vunpack.c.h.b16 %v2893
    %v3541 = vunpack.c.l.b16 %v2894
    %v3542 = vunpack.c.h.b16 %v2894
    %v3543 = vunpack.c.l.b16 %v2895
    %v3544 = vunpack.c.h.b16 %v2895
    %v3545 = vunpack.c.l.b16 %v2896
    %v3546 = vunpack.c.h.b16 %v2896
    %v3547 = vunpack.c.l.b16 %v2897
    %v3548 = vunpack.c.h.b16 %v2897
    %v3549 = vunpack.c.l.b16 %v2898
    %v3550 = vunpack.c.h.b16 %v2898
    %v3551 = vunpack.c.l.b16 %v2899
    %v3552 = vunpack.c.h.b16 %v2899
    %v3553 = vunpack.c.l.b16 %v2900
    %v3554 = vunpack.c.h.b16 %v2900
    %v3555 = vunpack.c.l.b16 %v2901
    %v3556 = vunpack.c.h.b16 %v2901
    %v3557 = vunpack.c.l.b16 %v2902
    %v3558 = vunpack.c.h.b16 %v2902
    %v3559 = vunpack.c.l.b16 %v2903
    %v3560 = vunpack.c.h.b16 %v2903
    %v3561 = vunpack.c.l.b16 %v2904
    %v3562 = vunpack.c.h.b16 %v2904
    %v3563 = vunpack.c.l.b16 %v2905
    %v3564 = vunpack.c.h.b16 %v2905
    %v3565 = vunpack.c.l.b16 %v2906
    %v3566 = vunpack.c.h.b16 %v2906
    %v3567 = vunpack.c.l.b16 %v2907
    %v3568 = vunpack.c.h.b16 %v2907
    %v3569 = vunpack.c.l.b16 %v2908
    %v3570 = vunpack.c.h.b16 %v2908
    %v3571 = vunpack.c.l.b16 %v2909
    %v3572 = vunpack.c.h.b16 %v2909
    %v3573 = vunpack.c.l.b16 %v2910
    %v3574 = vunpack.c.h.b16 %v2910
    %v3575 = vunpack.c.l.b16 %v2911
    %v3576 = vunpack.c.h.b16 %v2911
    %v3577 = vunpack.c.l.b16 %v2912
    %v3578 = vunpack.c.h.b16 %v2912
    %v3579 = vunpack.c.l.b16 %v2913
    %v3580 = vunpack.c.h.b16 %v2913
    %v3581 = vunpack.c.l.b16 %v2914
    %v3582 = vunpack.c.h.b16 %v2914
    %v3583 = vunpack.c.l.b16 %v2915
    %v3584 = vunpack.c.h.b16 %v2915
    %v3585 = vunpack.c.l.b16 %v2916
    %v3586 = vunpack.c.h.b16 %v2916
    %v3587 = vunpack.c.l.b16 %v2917
    %v3588 = vunpack.c.h.b16 %v2917
    %v3589 = vunpack.c.l.b16 %v2918
    %v3590 = vunpack.c.h.b16 %v2918
    %v3591 = vunpack.c.l.b16 %v2919
    %v3592 = vunpack.c.h.b16 %v2919
    %v3593 = vunpack.c.l.b16 %v2920
    %v3594 = vunpack.c.h.b16 %v2920
    %v3595 = vunpack.c.l.b16 %v2921
    %v3596 = vunpack.c.h.b16 %v2921
    %v3597 = vunpack.c.l.b16 %v2922
    %v3598 = vunpack.c.h.b16 %v2922
    %v3599 = vunpack.c.l.b16 %v2923
    %v3600 = vunpack.c.h.b16 %v2923
    %v3601 = vunpack.c.l.b16 %v2924
    %v3602 = vunpack.c.h.b16 %v2924
    %v3603 = vunpack.c.l.b16 %v2925
    %v3604 = vunpack.c.h.b16 %v2925
    %v3605 = vunpack.c.l.b16 %v2926
    %v3606 = vunpack.c.h.b16 %v2926
    %v3607 = vunpack.c.l.b16 %v2927
    %v3608 = vunpack.c.h.b16 %v2927
    %v3609 = vunpack.c.l.b16 %v2928
    %v3610 = vunpack.c.h.b16 %v2928
    %v3611 = vunpack.c.l.b16 %v2929
    %v3612 = vunpack.c.h.b16 %v2929
    %v3613 = vunpack.c.l.b16 %v2930
    %v3614 = vunpack.c.h.b16 %v2930
    %v3615 = vunpack.c.l.b16 %v2931
    %v3616 = vunpack.c.h.b16 %v2931
    %v3617 = vunpack.c.l.b16 %v2932
    %v3618 = vunpack.c.h.b16 %v2932
    %v3619 = vunpack.c.l.b16 %v2933
    %v3620 = vunpack.c.h.b16 %v2933
    %v3621 = vunpack.c.l.b16 %v2934
    %v3622 = vunpack.c.h.b16 %v2934
    %v3623 = vunpack.c.l.b16 %v2935
    %v3624 = vunpack.c.h.b16 %v2935
    %v3625 = vunpack.c.l.b16 %v2936
    %v3626 = vunpack.c.h.b16 %v2936
    %v3627 = vunpack.c.l.b16 %v2937
    %v3628 = vunpack.c.h.b16 %v2937
    %v3629 = vunpack.c.l.b16 %v2938
    %v3630 = vunpack.c.h.b16 %v2938
    %v3631 = vunpack.c.l.b16 %v2939
    %v3632 = vunpack.c.h.b16 %v2939
    %v3633 = vunpack.c.l.b16 %v2940
    %v3634 = vunpack.c.h.b16 %v2940
    %v3635 = vunpack.c.l.b16 %v2941
    %v3636 = vunpack.c.h.b16 %v2941
    %v3637 = vunpack.c.l.b16 %v2942
    %v3638 = vunpack.c.h.b16 %v2942
    %v3639 = vunpack.c.l.b16 %v2943
    %v3640 = vunpack.c.h.b16 %v2943
    %v3641 = vunpack.c.l.b16 %v2944
    %v3642 = vunpack.c.h.b16 %v2944
    %v3643 = vunpack.c.l.b16 %v2945
    %v3644 = vunpack.c.h.b16 %v2945
    %v3645 = vunpack.c.l.b16 %v2946
    %v3646 = vunpack.c.h.b16 %v2946
    %v3647 = vunpack.c.l.b16 %v2947
    %v3648 = vunpack.c.h.b16 %v2947
    %v3649 = vunpack.c.l.b16 %v2948
    %v3650 = vunpack.c.h.b16 %v2948
    %v3651 = vunpack.c.l.b16 %v2949
    %v3652 = vunpack.c.h.b16 %v2949
    %v3653 = vunpack.c.l.b16 %v2950
    %v3654 = vunpack.c.h.b16 %v2950
    %v3655 = vunpack.c.l.b16 %v2951
    %v3656 = vunpack.c.h.b16 %v2951
    %v3657 = vunpack.c.l.b16 %v2952
    %v3658 = vunpack.c.h.b16 %v2952
    %v3659 = vunpack.c.l.b16 %v2953
    %v3660 = vunpack.c.h.b16 %v2953
    %v3661 = vunpack.c.l.b16 %v2954
    %v3662 = vunpack.c.h.b16 %v2954
    %v3663 = vunpack.c.l.b16 %v2955
    %v3664 = vunpack.c.h.b16 %v2955
    %v3665 = vunpack.c.l.b16 %v2956
    %v3666 = vunpack.c.h.b16 %v2956
    %v3667 = vunpack.c.l.b16 %v2957
    %v3668 = vunpack.c.h.b16 %v2957
    %v3669 = vunpack.c.l.b16 %v2958
    %v3670 = vunpack.c.h.b16 %v2958
    %v3671 = vunpack.c.l.b16 %v2959
    %v3672 = vunpack.c.h.b16 %v2959
    %v3673 = vunpack.c.l.b16 %v2960
    %v3674 = vunpack.c.h.b16 %v2960
    %v3675 = vunpack.c.l.b16 %v2961
    %v3676 = vunpack.c.h.b16 %v2961
    %v3677 = vunpack.c.l.b16 %v2962
    %v3678 = vunpack.c.h.b16 %v2962
    %v3679 = vunpack.c.l.b16 %v2963
    %v3680 = vunpack.c.h.b16 %v2963
    %v3681 = vunpack.c.l.b16 %v2964
    %v3682 = vunpack.c.h.b16 %v2964
    %v3683 = vunpack.c.l.b16 %v2965
    %v3684 = vunpack.c.h.b16 %v2965
    %v3685 = vunpack.c.l.b16 %v2966
    %v3686 = vunpack.c.h.b16 %v2966
    %v3687 = vunpack.c.l.b16 %v2967
    %v3688 = vunpack.c.h.b16 %v2967
    %v3689 = vunpack.c.l.b16 %v2968
    %v3690 = vunpack.c.h.b16 %v2968
    %v3691 = vunpack.c.l.b16 %v2969
    %v3692 = vunpack.c.h.b16 %v2969
    %v3693 = vunpack.c.l.b16 %v2970
    %v3694 = vunpack.c.h.b16 %v2970
    %v3695 = vunpack.c.l.b16 %v2971
    %v3696 = vunpack.c.h.b16 %v2971
    %v3697 = vunpack.c.l.b16 %v2972
    %v3698 = vunpack.c.h.b16 %v2972
    %v3699 = vunpack.c.l.b16 %v2973
    %v3700 = vunpack.c.h.b16 %v2973
    %v3701 = vunpack.c.l.b16 %v2974
    %v3702 = vunpack.c.h.b16 %v2974
    %v3703 = vunpack.c.l.b16 %v2975
    %v3704 = vunpack.c.h.b16 %v2975
    %v3705 = vunpack.c.l.b16 %v2976
    %v3706 = vunpack.c.h.b16 %v2976
    %v3707 = vunpack.c.l.b16 %v2977
    %v3708 = vunpack.c.h.b16 %v2977
    %v3709 = vunpack.c.l.b16 %v2978
    %v3710 = vunpack.c.h.b16 %v2978
    %v3711 = vunpack.c.l.b16 %v2979
    %v3712 = vunpack.c.h.b16 %v2979
    %v3713 = vunpack.c.l.b16 %v2980
    %v3714 = vunpack.c.h.b16 %v2980
    %v3715 = vunpack.c.l.b16 %v2981
    %v3716 = vunpack.c.h.b16 %v2981
    %v3717 = vunpack.c.l.b16 %v2982
    %v3718 = vunpack.c.h.b16 %v2982
    %v3719 = vunpack.c.l.b16 %v2983
    %v3720 = vunpack.c.h.b16 %v2983
    %v3721 = vunpack.c.l.b16 %v2984
    %v3722 = vunpack.c.h.b16 %v2984
    %v3723 = vunpack.c.l.b16 %v2985
    %v3724 = vunpack.c.h.b16 %v2985
    %v3725 = vunpack.c.l.b16 %v2986
    %v3726 = vunpack.c.h.b16 %v2986
    %v3727 = vunpack.c.l.b16 %v2987
    %v3728 = vunpack.c.h.b16 %v2987
    %v3729 = vunpack.c.l.b16 %v2988
    %v3730 = vunpack.c.h.b16 %v2988
    %v3731 = vunpack.c.l.b16 %v2989
    %v3732 = vunpack.c.h.b16 %v2989
    %v3733 = vunpack.c.l.b16 %v2990
    %v3734 = vunpack.c.h.b16 %v2990
    %v3735 = vunpack.c.l.b16 %v2991
    %v3736 = vunpack.c.h.b16 %v2991
    %v3737 = vunpack.c.l.b16 %v2992
    %v3738 = vunpack.c.h.b16 %v2992
    %v3739 = vunpack.c.l.b16 %v2993
    %v3740 = vunpack.c.h.b16 %v2993
    %v3741 = vunpack.c.l.b16 %v2994
    %v3742 = vunpack.c.h.b16 %v2994
    %v3743 = vunpack.c.l.b16 %v2995
    %v3744 = vunpack.c.h.b16 %v2995
    %v3745 = vunpack.c.l.b16 %v2996
    %v3746 = vunpack.c.h.b16 %v2996
    %v3747 = vunpack.c.l.b16 %v2997
    %v3748 = vunpack.c.h.b16 %v2997
    %v3749 = vunpack.c.l.b16 %v2998
    %v3750 = vunpack.c.h.b16 %v2998
    %v3751 = vunpack.c.l.b16 %v2999
    %v3752 = vunpack.c.h.b16 %v2999
    %v3753 = vunpack.c.l.b16 %v3000
    %v3754 = vunpack.c.h.b16 %v3000
    %v3755 = vunpack.c.l.b16 %v3001
    %v3756 = vunpack.c.h.b16 %v3001
    %v3757 = vunpack.c.l.b16 %v3002
    %v3758 = vunpack.c.h.b16 %v3002
    %v3759 = vunpack.c.l.b16 %v3003
    %v3760 = vunpack.c.h.b16 %v3003
    %v3761 = vunpack.c.l.b16 %v3004
    %v3762 = vunpack.c.h.b16 %v3004
    %v3763 = vunpack.c.l.b16 %v3005
    %v3764 = vunpack.c.h.b16 %v3005
    %v3765 = vunpack.c.l.b16 %v3006
    %v3766 = vunpack.c.h.b16 %v3006
    %v3767 = vunpack.c.l.b16 %v3007
    %v3768 = vunpack.c.h.b16 %v3007
    %v3769 = vunpack.c.l.b16 %v3008
    %v3770 = vunpack.c.h.b16 %v3008
    %v3771 = vunpack.c.l.b16 %v3009
    %v3772 = vunpack.c.h.b16 %v3009
    %v3773 = vunpack.c.l.b16 %v3010
    %v3774 = vunpack.c.h.b16 %v3010
    %v3775 = vunpack.c.l.b16 %v3011
    %v3776 = vunpack.c.h.b16 %v3011
    %v3777 = vunpack.c.l.b16 %v3012
    %v3778 = vunpack.c.h.b16 %v3012
    %v3779 = vunpack.c.l.b16 %v3013
    %v3780 = vunpack.c.h.b16 %v3013
    %v3781 = vunpack.c.l.b16 %v3014
    %v3782 = vunpack.c.h.b16 %v3014
    %v3783 = vunpack.c.l.b16 %v3015
    %v3784 = vunpack.c.h.b16 %v3015
    %v3785 = vunpack.c.l.b16 %v3016
    %v3786 = vunpack.c.h.b16 %v3016
    %v3787 = vunpack.c.l.b16 %v3017
    %v3788 = vunpack.c.h.b16 %v3017
    %v3789 = vunpack.c.l.b16 %v3018
    %v3790 = vunpack.c.h.b16 %v3018
    %v3791 = vunpack.c.l.b16 %v3019
    %v3792 = vunpack.c.h.b16 %v3019
    %v3793 = vunpack.c.l.b16 %v3020
    %v3794 = vunpack.c.h.b16 %v3020
    %v3795 = vunpack.c.l.b16 %v3021
    %v3796 = vunpack.c.h.b16 %v3021
    %v3797 = vunpack.c.l.b16 %v3022
    %v3798 = vunpack.c.h.b16 %v3022
    %v3799 = vunpack.c.l.b16 %v3023
    %v3800 = vunpack.c.h.b16 %v3023
    %v3801 = vunpack.c.l.b16 %v3024
    %v3802 = vunpack.c.h.b16 %v3024
    %v3803 = vunpack.c.l.b16 %v3025
    %v3804 = vunpack.c.h.b16 %v3025
    %v3805 = vunpack.c.l.b16 %v3026
    %v3806 = vunpack.c.h.b16 %v3026
    %v3807 = vunpack.c.l.b16 %v3027
    %v3808 = vunpack.c.h.b16 %v3027
    %v3809 = vunpack.c.l.b16 %v3028
    %v3810 = vunpack.c.h.b16 %v3028
    %v3811 = vunpack.c.l.b16 %v3029
    %v3812 = vunpack.c.h.b16 %v3029
    %v3813 = vunpack.c.l.b16 %v3030
    %v3814 = vunpack.c.h.b16 %v3030
    %v3815 = vunpack.c.l.b16 %v3031
    %v3816 = vunpack.c.h.b16 %v3031
    %v3817 = vunpack.c.l.b16 %v3032
    %v3818 = vunpack.c.h.b16 %v3032
    %v3819 = vunpack.c.l.b16 %v3033
    %v3820 = vunpack.c.h.b16 %v3033
    %v3821 = vunpack.c.l.b16 %v3034
    %v3822 = vunpack.c.h.b16 %v3034
    %v3823 = vunpack.c.l.b16 %v3035
    %v3824 = vunpack.c.h.b16 %v3035
    %v3825 = vunpack.c.l.b16 %v3036
    %v3826 = vunpack.c.h.b16 %v3036
    %v3827 = vunpack.c.l.b16 %v3037
    %v3828 = vunpack.c.h.b16 %v3037
    %v3829 = vunpack.c.l.b16 %v3038
    %v3830 = vunpack.c.h.b16 %v3038
    %v3831 = vunpack.c.l.b16 %v3039
    %v3832 = vunpack.c.h.b16 %v3039
    %v3833 = vunpack.c.l.b16 %v3040
    %v3834 = vunpack.c.h.b16 %v3040
    %v3835 = vunpack.c.l.b16 %v3041
    %v3836 = vunpack.c.h.b16 %v3041
    %v3837 = vunpack.c.l.b16 %v3042
    %v3838 = vunpack.c.h.b16 %v3042
    %v3839 = vunpack.c.l.b16 %v3043
    %v3840 = vunpack.c.h.b16 %v3043
    %v3841 = vunpack.c.l.b16 %v3044
    %v3842 = vunpack.c.h.b16 %v3044
    %v3843 = vunpack.c.l.b16 %v3045
    %v3844 = vunpack.c.h.b16 %v3045
    %v3845 = vunpack.c.l.b16 %v3046
    %v3846 = vunpack.c.h.b16 %v3046
    %v3847 = vunpack.c.l.b16 %v3047
    %v3848 = vunpack.c.h.b16 %v3047
    %v3849 = vunpack.c.l.b16 %v3048
    %v3850 = vunpack.c.h.b16 %v3048
    %v3851 = vunpack.c.l.b16 %v3049
    %v3852 = vunpack.c.h.b16 %v3049
    %v3853 = vunpack.c.l.b16 %v3050
    %v3854 = vunpack.c.h.b16 %v3050
    %v3855 = vunpack.c.l.b16 %v3051
    %v3856 = vunpack.c.h.b16 %v3051
    %v3857 = vunpack.c.l.b16 %v3052
    %v3858 = vunpack.c.h.b16 %v3052
    %v3859 = vunpack.c.l.b16 %v3053
    %v3860 = vunpack.c.h.b16 %v3053
    %v3861 = vunpack.c.l.b16 %v3054
    %v3862 = vunpack.c.h.b16 %v3054
    %v3863 = vunpack.c.l.b16 %v3055
    %v3864 = vunpack.c.h.b16 %v3055
    %v3865 = vunpack.c.l.b16 %v3056
    %v3866 = vunpack.c.h.b16 %v3056
    %v3867 = vpack.c.b16 %v3363, %v3355
    %v3868 = vpack.c.b16 %v3364, %v3356
    %v3869 = vpack.c.b16 %v3365, %v3357
    %v3870 = vpack.c.b16 %v3366, %v3358
    %v3871 = vpack.c.b16 %v3367, %v3359
    %v3872 = vpack.c.b16 %v3368, %v3360
    %v3873 = vpack.c.b16 %v3369, %v3361
    %v3874 = vpack.c.b16 %v3370, %v3362
    %v3875 = vpack.c.b16 %v3379, %v3371
    %v3876 = vpack.c.b16 %v3380, %v3372
    %v3877 = vpack.c.b16 %v3381, %v3373
    %v3878 = vpack.c.b16 %v3382, %v3374
    %v3879 = vpack.c.b16 %v3383, %v3375
    %v3880 = vpack.c.b16 %v3384, %v3376
    %v3881 = vpack.c.b16 %v3385, %v3377
    %v3882 = vpack.c.b16 %v3386, %v3378
    %v3883 = vpack.c.b16 %v3395, %v3387
    %v3884 = vpack.c.b16 %v3396, %v3388
    %v3885 = vpack.c.b16 %v3397, %v3389
    %v3886 = vpack.c.b16 %v3398, %v3390
    %v3887 = vpack.c.b16 %v3399, %v3391
    %v3888 = vpack.c.b16 %v3400, %v3392
    %v3889 = vpack.c.b16 %v3401, %v3393
    %v3890 = vpack.c.b16 %v3402, %v3394
    %v3891 = vpack.c.b16 %v3411, %v3403
    %v3892 = vpack.c.b16 %v3412, %v3404
    %v3893 = vpack.c.b16 %v3413, %v3405
    %v3894 = vpack.c.b16 %v3414, %v3406
    %v3895 = vpack.c.b16 %v3415, %v3407
    %v3896 = vpack.c.b16 %v3416, %v3408
    %v3897 = vpack.c.b16 %v3417, %v3409
    %v3898 = vpack.c.b16 %v3418, %v3410
    %v3899 = vpack.c.b16 %v3427, %v3419
    %v3900 = vpack.c.b16 %v3428, %v3420
    %v3901 = vpack.c.b16 %v3429, %v3421
    %v3902 = vpack.c.b16 %v3430, %v3422
    %v3903 = vpack.c.b16 %v3431, %v3423
    %v3904 = vpack.c.b16 %v3432, %v3424
    %v3905 = vpack.c.b16 %v3433, %v3425
    %v3906 = vpack.c.b16 %v3434, %v3426
    %v3907 = vpack.c.b16 %v3443, %v3435
    %v3908 = vpack.c.b16 %v3444, %v3436
    %v3909 = vpack.c.b16 %v3445, %v3437
    %v3910 = vpack.c.b16 %v3446, %v3438
    %v3911 = vpack.c.b16 %v3447, %v3439
    %v3912 = vpack.c.b16 %v3448, %v3440
    %v3913 = vpack.c.b16 %v3449, %v3441
    %v3914 = vpack.c.b16 %v3450, %v3442
    %v3915 = vpack.c.b16 %v3459, %v3451
    %v3916 = vpack.c.b16 %v3460, %v3452
    %v3917 = vpack.c.b16 %v3461, %v3453
    %v3918 = vpack.c.b16 %v3462, %v3454
    %v3919 = vpack.c.b16 %v3463, %v3455
    %v3920 = vpack.c.b16 %v3464, %v3456
    %v3921 = vpack.c.b16 %v3465, %v3457
    %v3922 = vpack.c.b16 %v3466, %v3458
    %v3923 = vpack.c.b16 %v3475, %v3467
    %v3924 = vpack.c.b16 %v3476, %v3468
    %v3925 = vpack.c.b16 %v3477, %v3469
    %v3926 = vpack.c.b16 %v3478, %v3470
    %v3927 = vpack.c.b16 %v3479, %v3471
    %v3928 = vpack.c.b16 %v3480, %v3472
    %v3929 = vpack.c.b16 %v3481, %v3473
    %v3930 = vpack.c.b16 %v3482, %v3474
    %v3931 = vpack.c.b16 %v3491, %v3483
    %v3932 = vpack.c.b16 %v3492, %v3484
    %v3933 = vpack.c.b16 %v3493, %v3485
    %v3934 = vpack.c.b16 %v3494, %v3486
    %v3935 = vpack.c.b16 %v3495, %v3487
    %v3936 = vpack.c.b16 %v3496, %v3488
    %v3937 = vpack.c.b16 %v3497, %v3489
    %v3938 = vpack.c.b16 %v3498, %v3490
    %v3939 = vpack.c.b16 %v3507, %v3499
    %v3940 = vpack.c.b16 %v3508, %v3500
    %v3941 = vpack.c.b16 %v3509, %v3501
    %v3942 = vpack.c.b16 %v3510, %v3502
    %v3943 = vpack.c.b16 %v3511, %v3503
    %v3944 = vpack.c.b16 %v3512, %v3504
    %v3945 = vpack.c.b16 %v3513, %v3505
    %v3946 = vpack.c.b16 %v3514, %v3506
    %v3947 = vpack.c.b16 %v3523, %v3515
    %v3948 = vpack.c.b16 %v3524, %v3516
    %v3949 = vpack.c.b16 %v3525, %v3517
    %v3950 = vpack.c.b16 %v3526, %v3518
    %v3951 = vpack.c.b16 %v3527, %v3519
    %v3952 = vpack.c.b16 %v3528, %v3520
    %v3953 = vpack.c.b16 %v3529, %v3521
    %v3954 = vpack.c.b16 %v3530, %v3522
    %v3955 = vpack.c.b16 %v3539, %v3531
    %v3956 = vpack.c.b16 %v3540, %v3532
    %v3957 = vpack.c.b16 %v3541, %v3533
    %v3958 = vpack.c.b16 %v3542, %v3534
    %v3959 = vpack.c.b16 %v3543, %v3535
    %v3960 = vpack.c.b16 %v3544, %v3536
    %v3961 = vpack.c.b16 %v3545, %v3537
    %v3962 = vpack.c.b16 %v3546, %v3538
    %v3963 = vpack.c.b16 %v3555, %v3547
    %v3964 = vpack.c.b16 %v3556, %v3548
    %v3965 = vpack.c.b16 %v3557, %v3549
    %v3966 = vpack.c.b16 %v3558, %v3550
    %v3967 = vpack.c.b16 %v3559, %v3551
    %v3968 = vpack.c.b16 %v3560, %v3552
    %v3969 = vpack.c.b16 %v3561, %v3553
    %v3970 = vpack.c.b16 %v3562, %v3554
    %v3971 = vpack.c.b16 %v3571, %v3563
    %v3972 = vpack.c.b16 %v3572, %v3564
    %v3973 = vpack.c.b16 %v3573, %v3565
    %v3974 = vpack.c.b16 %v3574, %v3566
    %v3975 = vpack.c.b16 %v3575, %v3567
    %v3976 = vpack.c.b16 %v3576, %v3568
    %v3977 = vpack.c.b16 %v3577, %v3569
    %v3978 = vpack.c.b16 %v3578, %v3570
    %v3979 = vpack.c.b16 %v3587, %v3579
    %v3980 = vpack.c.b16 %v3588, %v3580
    %v3981 = vpack.c.b16 %v3589, %v3581
    %v3982 = vpack.c.b16 %v3590, %v3582
    %v3983 = vpack.c.b16 %v3591, %v3583
    %v3984 = vpack.c.b16 %v3592, %v3584
    %v3985 = vpack.c.b16 %v3593, %v3585
    %v3986 = vpack.c.b16 %v3594, %v3586
    %v3987 = vpack.c.b16 %v3603, %v3595
    %v3988 = vpack.c.b16 %v3604, %v3596
    %v3989 = vpack.c.b16 %v3605, %v3597
    %v3990 = vpack.c.b16 %v3606, %v3598
    %v3991 = vpack.c.b16 %v3607, %v3599
    %v3992 = vpack.c.b16 %v3608, %v3600
    %v3993 = vpack.c.b16 %v3609, %v3601
    %v3994 = vpack.c.b16 %v3610, %v3602
    %v3995 = vpack.c.b16 %v3619, %v3611
    %v3996 = vpack.c.b16 %v3620, %v3612
    %v3997 = vpack.c.b16 %v3621, %v3613
    %v3998 = vpack.c.b16 %v3622, %v3614
    %v3999 = vpack.c.b16 %v3623, %v3615
    %v4000 = vpack.c.b16 %v3624, %v3616
    %v4001 = vpack.c.b16 %v3625, %v3617
    %v4002 = vpack.c.b16 %v3626, %v3618
    %v4003 = vpack.c.b16 %v3635, %v3627
    %v4004 = vpack.c.b16 %v3636, %v3628
    %v4005 = vpack.c.b16 %v3637, %v3629
    %v4006 = vpack.c.b16 %v3638, %v3630
    %v4007 = vpack.c.b16 %v3639, %v3631
    %v4008 = vpack.c.b16 %v3640, %v3632
    %v4009 = vpack.c.b16 %v3641, %v3633
    %v4010 = vpack.c.b16 %v3642, %v3634
    %v4011 = vpack.c.b16 %v3651, %v3643
    %v4012 = vpack.c.b16 %v3652, %v3644
    %v4013 = vpack.c.b16 %v3653, %v3645
    %v4014 = vpack.c.b16 %v3654, %v3646
    %v4015 = vpack.c.b16 %v3655, %v3647
    %v4016 = vpack.c.b16 %v3656, %v3648
    %v4017 = vpack.c.b16 %v3657, %v3649
    %v4018 = vpack.c.b16 %v3658, %v3650
    %v4019 = vpack.c.b16 %v3667, %v3659
    %v4020 = vpack.c.b16 %v3668, %v3660
    %v4021 = vpack.c.b16 %v3669, %v3661
    %v4022 = vpack.c.b16 %v3670, %v3662
    %v4023 = vpack.c.b16 %v3671, %v3663
    %v4024 = vpack.c.b16 %v3672, %v3664
    %v4025 = vpack.c.b16 %v3673, %v3665
    %v4026 = vpack.c.b16 %v3674, %v3666
    %v4027 = vpack.c.b16 %v3683, %v3675
    %v4028 = vpack.c.b16 %v3684, %v3676
    %v4029 = vpack.c.b16 %v3685, %v3677
    %v4030 = vpack.c.b16 %v3686, %v3678
    %v4031 = vpack.c.b16 %v3687, %v3679
    %v4032 = vpack.c.b16 %v3688, %v3680
    %v4033 = vpack.c.b16 %v3689, %v3681
    %v4034 = vpack.c.b16 %v3690, %v3682
    %v4035 = vpack.c.b16 %v3699, %v3691
    %v4036 = vpack.c.b16 %v3700, %v3692
    %v4037 = vpack.c.b16 %v3701, %v3693
    %v4038 = vpack.c.b16 %v3702, %v3694
    %v4039 = vpack.c.b16 %v3703, %v3695
    %v4040 = vpack.c.b16 %v3704, %v3696
    %v4041 = vpack.c.b16 %v3705, %v3697
    %v4042 = vpack.c.b16 %v3706, %v3698
    %v4043 = vpack.c.b16 %v3715, %v3707
    %v4044 = vpack.c.b16 %v3716, %v3708
    %v4045 = vpack.c.b16 %v3717, %v3709
    %v4046 = vpack.c.b16 %v3718, %v3710
    %v4047 = vpack.c.b16 %v3719, %v3711
    %v4048 = vpack.c.b16 %v3720, %v3712
    %v4049 = vpack.c.b16 %v3721, %v3713
    %v4050 = vpack.c.b16 %v3722, %v3714
    %v4051 = vpack.c.b16 %v3731, %v3723
    %v4052 = vpack.c.b16 %v3732, %v3724
    %v4053 = vpack.c.b16 %v3733, %v3725
    %v4054 = vpack.c.b16 %v3734, %v3726
    %v4055 = vpack.c.b16 %v3735, %v3727
    %v4056 = vpack.c.b16 %v3736, %v3728
    %v4057 = vpack.c.b16 %v3737, %v3729
    %v4058 = vpack.c.b16 %v3738, %v3730
    %v4059 = vpack.c.b16 %v3747, %v3739
    %v4060 = vpack.c.b16 %v3748, %v3740
    %v4061 = vpack.c.b16 %v3749, %v3741
    %v4062 = vpack.c.b16 %v3750, %v3742
    %v4063 = vpack.c.b16 %v3751, %v3743
    %v4064 = vpack.c.b16 %v3752, %v3744
    %v4065 = vpack.c.b16 %v3753, %v3745
    %v4066 = vpack.c.b16 %v3754, %v3746
    %v4067 = vpack.c.b16 %v3763, %v3755
    %v4068 = vpack.c.b16 %v3764, %v3756
    %v4069 = vpack.c.b16 %v3765, %v3757
    %v4070 = vpack.c.b16 %v3766, %v3758
    %v4071 = vpack.c.b16 %v3767, %v3759
    %v4072 = vpack.c.b16 %v3768, %v3760
    %v4073 = vpack.c.b16 %v3769, %v3761
    %v4074 = vpack.c.b16 %v3770, %v3762
    %v4075 = vpack.c.b16 %v3779, %v3771
    %v4076 = vpack.c.b16 %v3780, %v3772
    %v4077 = vpack.c.b16 %v3781, %v3773
    %v4078 = vpack.c.b16 %v3782, %v3774
    %v4079 = vpack.c.b16 %v3783, %v3775
    %v4080 = vpack.c.b16 %v3784, %v3776
    %v4081 = vpack.c.b16 %v3785, %v3777
    %v4082 = vpack.c.b16 %v3786, %v3778
    %v4083 = vpack.c.b16 %v3795, %v3787
    %v4084 = vpack.c.b16 %v3796, %v3788
    %v4085 = vpack.c.b16 %v3797, %v3789
    %v4086 = vpack.c.b16 %v3798, %v3790
    %v4087 = vpack.c.b16 %v3799, %v3791
    %v4088 = vpack.c.b16 %v3800, %v3792
    %v4089 = vpack.c.b16 %v3801, %v3793
    %v4090 = vpack.c.b16 %v3802, %v3794
    %v4091 = vpack.c.b16 %v3811, %v3803
    %v4092 = vpack.c.b16 %v3812, %v3804
    %v4093 = vpack.c.b16 %v3813, %v3805
    %v4094 = vpack.c.b16 %v3814, %v3806
    %v4095 = vpack.c.b16 %v3815, %v3807
    %v4096 = vpack.c.b16 %v3816, %v3808
    %v4097 = vpack.c.b16 %v3817, %v3809
    %v4098 = vpack.c.b16 %v3818, %v3810
    %v4099 = vpack.c.b16 %v3827, %v3819
    %v4100 = vpack.c.b16 %v3828, %v3820
    %v4101 = vpack.c.b16 %v3829, %v3821
    %v4102 = vpack.c.b16 %v3830, %v3822
    %v4103 = vpack.c.b16 %v3831, %v3823
    %v4104 = vpack.c.b16 %v3832, %v3824
    %v4105 = vpack.c.b16 %v3833, %v3825
    %v4106 = vpack.c.b16 %v3834, %v3826
    %v4107 = vpack.c.b16 %v3843, %v3835
    %v4108 = vpack.c.b16 %v3844, %v3836
    %v4109 = vpack.c.b16 %v3845, %v3837
    %v4110 = vpack.c.b16 %v3846, %v3838
    %v4111 = vpack.c.b16 %v3847, %v3839
    %v4112 = vpack.c.b16 %v3848, %v3840
    %v4113 = vpack.c.b16 %v3849, %v3841
    %v4114 = vpack.c.b16 %v3850, %v3842
    %v4115 = vpack.c.b16 %v3859, %v3851
    %v4116 = vpack.c.b16 %v3860, %v3852
    %v4117 = vpack.c.b16 %v3861, %v3853
    %v4118 = vpack.c.b16 %v3862, %v3854
    %v4119 = vpack.c.b16 %v3863, %v3855
    %v4120 = vpack.c.b16 %v3864, %v3856
    %v4121 = vpack.c.b16 %v3865, %v3857
    %v4122 = vpack.c.b16 %v3866, %v3858
    %4379 = vmatprep.subr.bf16.mxu0 %v3868
    %4380 = vmatpush1.bf16.msra.mxu0 %v3867
    %4381 = vmatprep.subr.bf16.mxu0 %v3876
    %4382 = vmatpush1.bf16.msra.mxu0 %v3875
    %4383 = vmatprep.subr.bf16.mxu0 %v3884
    %4384 = vmatpush1.bf16.msra.mxu0 %v3883
    %4385 = vmatprep.subr.bf16.mxu0 %v3892
    %4386 = vmatpush1.bf16.msra.mxu0 %v3891
    %4387 = vmatprep.subr.bf16.mxu0 %v3900
    %4388 = vmatpush1.bf16.msra.mxu0 %v3899
    %4389 = vmatprep.subr.bf16.mxu0 %v3908
    %4390 = vmatpush1.bf16.msra.mxu0 %v3907
    %4391 = vmatprep.subr.bf16.mxu0 %v3916
    %4392 = vmatpush1.bf16.msra.mxu0 %v3915
    %4393 = vmatprep.subr.bf16.mxu0 %v3924
    %4394 = vmatpush1.bf16.msra.mxu0 %v3923
    %4395 = vmatprep.subr.bf16.mxu0 %v3932
    %4396 = vmatpush1.bf16.msra.mxu0 %v3931
    %4397 = vmatprep.subr.bf16.mxu0 %v3940
    %4398 = vmatpush1.bf16.msra.mxu0 %v3939
    %4399 = vmatprep.subr.bf16.mxu0 %v3948
    %4400 = vmatpush1.bf16.msra.mxu0 %v3947
    %4401 = vmatprep.subr.bf16.mxu0 %v3956
    %4402 = vmatpush1.bf16.msra.mxu0 %v3955
    %4403 = vmatprep.subr.bf16.mxu0 %v3964
    %4404 = vmatpush1.bf16.msra.mxu0 %v3963
    %4405 = vmatprep.subr.bf16.mxu0 %v3972
    %4406 = vmatpush1.bf16.msra.mxu0 %v3971
    %4407 = vmatprep.subr.bf16.mxu0 %v3980
    %4408 = vmatpush1.bf16.msra.mxu0 %v3979
    %4409 = vmatprep.subr.bf16.mxu0 %v3988
    %4410 = vmatpush1.bf16.msra.mxu0 %v3987
    %4411 = vmatprep.mubr.bf16.mxu0 %v2798
    %4412 = vmatmul.mubr.bf16.gmra.mrb[0].mxu0 %v2797
    %v4413 = vpop.f32.mrb[0].mxu0
    %v4414 = vadd.f32 %v3062, %v4413
    %v4415 = vpop.f32.mrb[0].mxu0
    %v4416 = vadd.f32 %v3066, %v4415
    %v4417 = vpop.f32.mrb[0].mxu0
    %v4418 = vpop.f32.mrb[0].mxu0
    %4419 = vdwg.mxu0
    %4420 = vmatprep.subr.bf16.mxu0 %v3996
    %4421 = vmatpush1.bf16.msra.mxu0 %v3995
    %4422 = vmatprep.subr.bf16.mxu0 %v4004
    %4423 = vmatpush1.bf16.msra.mxu0 %v4003
    %4424 = vmatprep.subr.bf16.mxu0 %v4012
    %4425 = vmatpush1.bf16.msra.mxu0 %v4011
    %4426 = vmatprep.subr.bf16.mxu0 %v4020
    %4427 = vmatpush1.bf16.msra.mxu0 %v4019
    %4428 = vmatprep.subr.bf16.mxu0 %v4028
    %4429 = vmatpush1.bf16.msra.mxu0 %v4027
    %4430 = vmatprep.subr.bf16.mxu0 %v4036
    %4431 = vmatpush1.bf16.msra.mxu0 %v4035
    %4432 = vmatprep.subr.bf16.mxu0 %v4044
    %4433 = vmatpush1.bf16.msra.mxu0 %v4043
    %4434 = vmatprep.subr.bf16.mxu0 %v4052
    %4435 = vmatpush1.bf16.msra.mxu0 %v4051
    %4436 = vmatprep.subr.bf16.mxu0 %v4060
    %4437 = vmatpush1.bf16.msra.mxu0 %v4059
    %4438 = vmatprep.subr.bf16.mxu0 %v4068
    %4439 = vmatpush1.bf16.msra.mxu0 %v4067
    %4440 = vmatprep.subr.bf16.mxu0 %v4076
    %4441 = vmatpush1.bf16.msra.mxu0 %v4075
    %4442 = vmatprep.subr.bf16.mxu0 %v4084
    %4443 = vmatpush1.bf16.msra.mxu0 %v4083
    %4444 = vmatprep.subr.bf16.mxu0 %v4092
    %4445 = vmatpush1.bf16.msra.mxu0 %v4091
    %4446 = vmatprep.subr.bf16.mxu0 %v4100
    %4447 = vmatpush1.bf16.msra.mxu0 %v4099
    %4448 = vmatprep.subr.bf16.mxu0 %v4108
    %4449 = vmatpush1.bf16.msra.mxu0 %v4107
    %4450 = vmatprep.subr.bf16.mxu0 %v4116
    %4451 = vmatpush1.bf16.msra.mxu0 %v4115
    %4452 = vmatprep.mubr.bf16.mxu0 %v2800
    %4453 = vmatmul.mubr.bf16.gmra.mrb[0].mxu0 %v2799
    %v4454 = vpop.f32.mrb[0].mxu0
    %v4455 = vadd.f32 %v4414, %v4454
    %v4456 = vpop.f32.mrb[0].mxu0
    %v4457 = vadd.f32 %v4416, %v4456
    %v4458 = vpop.f32.mrb[0].mxu0
    %v4459 = vpop.f32.mrb[0].mxu0
    %4460 = vdwg.mxu0
    %4461 = vmatprep.subr.bf16.mxu0 %v3870
    %4462 = vmatpush1.bf16.msra.mxu0 %v3869
    %4463 = vmatprep.subr.bf16.mxu0 %v3878
    %4464 = vmatpush1.bf16.msra.mxu0 %v3877
    %4465 = vmatprep.subr.bf16.mxu0 %v3886
    %4466 = vmatpush1.bf16.msra.mxu0 %v3885
    %4467 = vmatprep.subr.bf16.mxu0 %v3894
    %4468 = vmatpush1.bf16.msra.mxu0 %v3893
    %4469 = vmatprep.subr.bf16.mxu0 %v3902
    %4470 = vmatpush1.bf16.msra.mxu0 %v3901
    %4471 = vmatprep.subr.bf16.mxu0 %v3910
    %4472 = vmatpush1.bf16.msra.mxu0 %v3909
    %4473 = vmatprep.subr.bf16.mxu0 %v3918
    %4474 = vmatpush1.bf16.msra.mxu0 %v3917
    %4475 = vmatprep.subr.bf16.mxu0 %v3926
    %4476 = vmatpush1.bf16.msra.mxu0 %v3925
    %4477 = vmatprep.subr.bf16.mxu0 %v3934
    %4478 = vmatpush1.bf16.msra.mxu0 %v3933
    %4479 = vmatprep.subr.bf16.mxu0 %v3942
    %4480 = vmatpush1.bf16.msra.mxu0 %v3941
    %4481 = vmatprep.subr.bf16.mxu0 %v3950
    %4482 = vmatpush1.bf16.msra.mxu0 %v3949
    %4483 = vmatprep.subr.bf16.mxu0 %v3958
    %4484 = vmatpush1.bf16.msra.mxu0 %v3957
    %4485 = vmatprep.subr.bf16.mxu0 %v3966
    %4486 = vmatpush1.bf16.msra.mxu0 %v3965
    %4487 = vmatprep.subr.bf16.mxu0 %v3974
    %4488 = vmatpush1.bf16.msra.mxu0 %v3973
    %4489 = vmatprep.subr.bf16.mxu0 %v3982
    %4490 = vmatpush1.bf16.msra.mxu0 %v3981
    %4491 = vmatprep.subr.bf16.mxu0 %v3990
    %4492 = vmatpush1.bf16.msra.mxu0 %v3989
    %4493 = vmatprep.mubr.bf16.mxu0 %v2798
    %4494 = vmatmul.mubr.bf16.gmra.mrb[0].mxu0 %v2797
    %v4495 = vpop.f32.mrb[0].mxu0
    %v4496 = vadd.f32 %v3070, %v4495
    %v4497 = vpop.f32.mrb[0].mxu0
    %v4498 = vadd.f32 %v3074, %v4497
    %v4499 = vpop.f32.mrb[0].mxu0
    %v4500 = vpop.f32.mrb[0].mxu0
    %4501 = vdwg.mxu0
    %4502 = vmatprep.subr.bf16.mxu0 %v3998
    %4503 = vmatpush1.bf16.msra.mxu0 %v3997
    %4504 = vmatprep.subr.bf16.mxu0 %v4006
    %4505 = vmatpush1.bf16.msra.mxu0 %v4005
    %4506 = vmatprep.subr.bf16.mxu0 %v4014
    %4507 = vmatpush1.bf16.msra.mxu0 %v4013
    %4508 = vmatprep.subr.bf16.mxu0 %v4022
    %4509 = vmatpush1.bf16.msra.mxu0 %v4021
    %4510 = vmatprep.subr.bf16.mxu0 %v4030
    %4511 = vmatpush1.bf16.msra.mxu0 %v4029
    %4512 = vmatprep.subr.bf16.mxu0 %v4038
    %4513 = vmatpush1.bf16.msra.mxu0 %v4037
    %4514 = vmatprep.subr.bf16.mxu0 %v4046
    %4515 = vmatpush1.bf16.msra.mxu0 %v4045
    %4516 = vmatprep.subr.bf16.mxu0 %v4054
    %4517 = vmatpush1.bf16.msra.mxu0 %v4053
    %4518 = vmatprep.subr.bf16.mxu0 %v4062
    %4519 = vmatpush1.bf16.msra.mxu0 %v4061
    %4520 = vmatprep.subr.bf16.mxu0 %v4070
    %4521 = vmatpush1.bf16.msra.mxu0 %v4069
    %4522 = vmatprep.subr.bf16.mxu0 %v4078
    %4523 = vmatpush1.bf16.msra.mxu0 %v4077
    %4524 = vmatprep.subr.bf16.mxu0 %v4086
    %4525 = vmatpush1.bf16.msra.mxu0 %v4085
    %4526 = vmatprep.subr.bf16.mxu0 %v4094
    %4527 = vmatpush1.bf16.msra.mxu0 %v4093
    %4528 = vmatprep.subr.bf16.mxu0 %v4102
    %4529 = vmatpush1.bf16.msra.mxu0 %v4101
    %4530 = vmatprep.subr.bf16.mxu0 %v4110
    %4531 = vmatpush1.bf16.msra.mxu0 %v4109
    %4532 = vmatprep.subr.bf16.mxu0 %v4118
    %4533 = vmatpush1.bf16.msra.mxu0 %v4117
    %4534 = vmatprep.mubr.bf16.mxu0 %v2800
    %4535 = vmatmul.mubr.bf16.gmra.mrb[0].mxu0 %v2799
    %v4536 = vpop.f32.mrb[0].mxu0
    %v4537 = vadd.f32 %v4496, %v4536
    %v4538 = vpop.f32.mrb[0].mxu0
    %v4539 = vadd.f32 %v4498, %v4538
    %v4540 = vpop.f32.mrb[0].mxu0
    %v4541 = vpop.f32.mrb[0].mxu0
    %4542 = vdwg.mxu0
    %4543 = vmatprep.subr.bf16.mxu0 %v3872
    %4544 = vmatpush1.bf16.msra.mxu0 %v3871
    %4545 = vmatprep.subr.bf16.mxu0 %v3880
    %4546 = vmatpush1.bf16.msra.mxu0 %v3879
    %4547 = vmatprep.subr.bf16.mxu0 %v3888
    %4548 = vmatpush1.bf16.msra.mxu0 %v3887
    %4549 = vmatprep.subr.bf16.mxu0 %v3896
    %4550 = vmatpush1.bf16.msra.mxu0 %v3895
    %4551 = vmatprep.subr.bf16.mxu0 %v3904
    %4552 = vmatpush1.bf16.msra.mxu0 %v3903
    %4553 = vmatprep.subr.bf16.mxu0 %v3912
    %4554 = vmatpush1.bf16.msra.mxu0 %v3911
    %4555 = vmatprep.subr.bf16.mxu0 %v3920
    %4556 = vmatpush1.bf16.msra.mxu0 %v3919
    %4557 = vmatprep.subr.bf16.mxu0 %v3928
    %4558 = vmatpush1.bf16.msra.mxu0 %v3927
    %4559 = vmatprep.subr.bf16.mxu0 %v3936
    %4560 = vmatpush1.bf16.msra.mxu0 %v3935
    %4561 = vmatprep.subr.bf16.mxu0 %v3944
    %4562 = vmatpush1.bf16.msra.mxu0 %v3943
    %4563 = vmatprep.subr.bf16.mxu0 %v3952
    %4564 = vmatpush1.bf16.msra.mxu0 %v3951
    %4565 = vmatprep.subr.bf16.mxu0 %v3960
    %4566 = vmatpush1.bf16.msra.mxu0 %v3959
    %4567 = vmatprep.subr.bf16.mxu0 %v3968
    %4568 = vmatpush1.bf16.msra.mxu0 %v3967
    %4569 = vmatprep.subr.bf16.mxu0 %v3976
    %4570 = vmatpush1.bf16.msra.mxu0 %v3975
    %4571 = vmatprep.subr.bf16.mxu0 %v3984
    %4572 = vmatpush1.bf16.msra.mxu0 %v3983
    %4573 = vmatprep.subr.bf16.mxu0 %v3992
    %4574 = vmatpush1.bf16.msra.mxu0 %v3991
    %4575 = vmatprep.mubr.bf16.mxu0 %v2798
    %4576 = vmatmul.mubr.bf16.gmra.mrb[0].mxu0 %v2797
    %v4577 = vpop.f32.mrb[0].mxu0
    %v4578 = vadd.f32 %v3078, %v4577
    %v4579 = vpop.f32.mrb[0].mxu0
    %v4580 = vadd.f32 %v3082, %v4579
    %v4581 = vpop.f32.mrb[0].mxu0
    %v4582 = vpop.f32.mrb[0].mxu0
    %4583 = vdwg.mxu0
    %4584 = vmatprep.subr.bf16.mxu0 %v4000
    %4585 = vmatpush1.bf16.msra.mxu0 %v3999
    %4586 = vmatprep.subr.bf16.mxu0 %v4008
    %4587 = vmatpush1.bf16.msra.mxu0 %v4007
    %4588 = vmatprep.subr.bf16.mxu0 %v4016
    %4589 = vmatpush1.bf16.msra.mxu0 %v4015
    %4590 = vmatprep.subr.bf16.mxu0 %v4024
    %4591 = vmatpush1.bf16.msra.mxu0 %v4023
    %4592 = vmatprep.subr.bf16.mxu0 %v4032
    %4593 = vmatpush1.bf16.msra.mxu0 %v4031
    %4594 = vmatprep.subr.bf16.mxu0 %v4040
    %4595 = vmatpush1.bf16.msra.mxu0 %v4039
    %4596 = vmatprep.subr.bf16.mxu0 %v4048
    %4597 = vmatpush1.bf16.msra.mxu0 %v4047
    %4598 = vmatprep.subr.bf16.mxu0 %v4056
    %4599 = vmatpush1.bf16.msra.mxu0 %v4055
    %4600 = vmatprep.subr.bf16.mxu0 %v4064
    %4601 = vmatpush1.bf16.msra.mxu0 %v4063
    %4602 = vmatprep.subr.bf16.mxu0 %v4072
    %4603 = vmatpush1.bf16.msra.mxu0 %v4071
    %4604 = vmatprep.subr.bf16.mxu0 %v4080
    %4605 = vmatpush1.bf16.msra.mxu0 %v4079
    %4606 = vmatprep.subr.bf16.mxu0 %v4088
    %4607 = vmatpush1.bf16.msra.mxu0 %v4087
    %4608 = vmatprep.subr.bf16.mxu0 %v4096
    %4609 = vmatpush1.bf16.msra.mxu0 %v4095
    %4610 = vmatprep.subr.bf16.mxu0 %v4104
    %4611 = vmatpush1.bf16.msra.mxu0 %v4103
    %4612 = vmatprep.subr.bf16.mxu0 %v4112
    %4613 = vmatpush1.bf16.msra.mxu0 %v4111
    %4614 = vmatprep.subr.bf16.mxu0 %v4120
    %4615 = vmatpush1.bf16.msra.mxu0 %v4119
    %4616 = vmatprep.mubr.bf16.mxu0 %v2800
    %4617 = vmatmul.mubr.bf16.gmra.mrb[0].mxu0 %v2799
    %v4618 = vpop.f32.mrb[0].mxu0
    %v4619 = vadd.f32 %v4578, %v4618
    %v4620 = vpop.f32.mrb[0].mxu0
    %v4621 = vadd.f32 %v4580, %v4620
    %v4622 = vpop.f32.mrb[0].mxu0
    %v4623 = vpop.f32.mrb[0].mxu0
    %4624 = vdwg.mxu0
    %4625 = vmatprep.subr.bf16.mxu0 %v3874
    %4626 = vmatpush1.bf16.msra.mxu0 %v3873
    %4627 = vmatprep.subr.bf16.mxu0 %v3882
    %4628 = vmatpush1.bf16.msra.mxu0 %v3881
    %4629 = vmatprep.subr.bf16.mxu0 %v3890
    %4630 = vmatpush1.bf16.msra.mxu0 %v3889
    %4631 = vmatprep.subr.bf16.mxu0 %v3898
    %4632 = vmatpush1.bf16.msra.mxu0 %v3897
    %4633 = vmatprep.subr.bf16.mxu0 %v3906
    %4634 = vmatpush1.bf16.msra.mxu0 %v3905
    %4635 = vmatprep.subr.bf16.mxu0 %v3914
    %4636 = vmatpush1.bf16.msra.mxu0 %v3913
    %4637 = vmatprep.subr.bf16.mxu0 %v3922
    %4638 = vmatpush1.bf16.msra.mxu0 %v3921
    %4639 = vmatprep.subr.bf16.mxu0 %v3930
    %4640 = vmatpush1.bf16.msra.mxu0 %v3929
    %4641 = vmatprep.subr.bf16.mxu0 %v3938
    %4642 = vmatpush1.bf16.msra.mxu0 %v3937
    %4643 = vmatprep.subr.bf16.mxu0 %v3946
    %4644 = vmatpush1.bf16.msra.mxu0 %v3945
    %4645 = vmatprep.subr.bf16.mxu0 %v3954
    %4646 = vmatpush1.bf16.msra.mxu0 %v3953
    %4647 = vmatprep.subr.bf16.mxu0 %v3962
    %4648 = vmatpush1.bf16.msra.mxu0 %v3961
    %4649 = vmatprep.subr.bf16.mxu0 %v3970
    %4650 = vmatpush1.bf16.msra.mxu0 %v3969
    %4651 = vmatprep.subr.bf16.mxu0 %v3978
    %4652 = vmatpush1.bf16.msra.mxu0 %v3977
    %4653 = vmatprep.subr.bf16.mxu0 %v3986
    %4654 = vmatpush1.bf16.msra.mxu0 %v3985
    %4655 = vmatprep.subr.bf16.mxu0 %v3994
    %4656 = vmatpush1.bf16.msra.mxu0 %v3993
    %4657 = vmatprep.mubr.bf16.mxu0 %v2798
    %4658 = vmatmul.mubr.bf16.gmra.mrb[0].mxu0 %v2797
    %v4659 = vpop.f32.mrb[0].mxu0
    %v4660 = vadd.f32 %v3086, %v4659
    %v4661 = vpop.f32.mrb[0].mxu0
    %v4662 = vadd.f32 %v3090, %v4661
    %v4663 = vpop.f32.mrb[0].mxu0
    %v4664 = vpop.f32.mrb[0].mxu0
    %4665 = vdwg.mxu0
    %4666 = vmatprep.subr.bf16.mxu0 %v4002
    %4667 = vmatpush1.bf16.msra.mxu0 %v4001
    %4668 = vmatprep.subr.bf16.mxu0 %v4010
    %4669 = vmatpush1.bf16.msra.mxu0 %v4009
    %4670 = vmatprep.subr.bf16.mxu0 %v4018
    %4671 = vmatpush1.bf16.msra.mxu0 %v4017
    %4672 = vmatprep.subr.bf16.mxu0 %v4026
    %4673 = vmatpush1.bf16.msra.mxu0 %v4025
    %4674 = vmatprep.subr.bf16.mxu0 %v4034
    %4675 = vmatpush1.bf16.msra.mxu0 %v4033
    %4676 = vmatprep.subr.bf16.mxu0 %v4042
    %4677 = vmatpush1.bf16.msra.mxu0 %v4041
    %4678 = vmatprep.subr.bf16.mxu0 %v4050
    %4679 = vmatpush1.bf16.msra.mxu0 %v4049
    %4680 = vmatprep.subr.bf16.mxu0 %v4058
    %4681 = vmatpush1.bf16.msra.mxu0 %v4057
    %4682 = vmatprep.subr.bf16.mxu0 %v4066
    %4683 = vmatpush1.bf16.msra.mxu0 %v4065
    %4684 = vmatprep.subr.bf16.mxu0 %v4074
    %4685 = vmatpush1.bf16.msra.mxu0 %v4073
    %4686 = vmatprep.subr.bf16.mxu0 %v4082
    %4687 = vmatpush1.bf16.msra.mxu0 %v4081
    %4688 = vmatprep.subr.bf16.mxu0 %v4090
    %4689 = vmatpush1.bf16.msra.mxu0 %v4089
    %4690 = vmatprep.subr.bf16.mxu0 %v4098
    %4691 = vmatpush1.bf16.msra.mxu0 %v4097
    %4692 = vmatprep.subr.bf16.mxu0 %v4106
    %4693 = vmatpush1.bf16.msra.mxu0 %v4105
    %4694 = vmatprep.subr.bf16.mxu0 %v4114
    %4695 = vmatpush1.bf16.msra.mxu0 %v4113
    %4696 = vmatprep.subr.bf16.mxu0 %v4122
    %4697 = vmatpush1.bf16.msra.mxu0 %v4121
    %4698 = vmatprep.mubr.bf16.mxu0 %v2800
    %4699 = vmatmul.mubr.bf16.gmra.mrb[0].mxu0 %v2799
    %v4700 = vpop.f32.mrb[0].mxu0
    %v4701 = vadd.f32 %v4660, %v4700
    %v4702 = vpop.f32.mrb[0].mxu0
    %v4703 = vadd.f32 %v4662, %v4702
    %v4704 = vpop.f32.mrb[0].mxu0
    %v4705 = vpop.f32.mrb[0].mxu0
    %4706 = vdwg.mxu0
    %v4707 = vsub.f32 0.0, %v4455
    %v4708 = vsub.f32 0.0, %v4457
    %v4709 = vsub.f32 0.0, %v4537
    %v4710 = vsub.f32 0.0, %v4539
    %v4711 = vsub.f32 0.0, %v4619
    %v4712 = vsub.f32 0.0, %v4621
    %v4713 = vsub.f32 0.0, %v4701
    %v4714 = vsub.f32 0.0, %v4703
    %v4715 = vmul.f32 %v4707, 1.442695
    %v4716 = vpow.pop %v4715
    %v4717 = vmul.f32 %v4708, 1.442695
    %v4718 = vpow.pop %v4717
    %v4719 = vmul.f32 %v4709, 1.442695
    %v4720 = vpow.pop %v4719
    %v4721 = vmul.f32 %v4710, 1.442695
    %v4722 = vpow.pop %v4721
    %v4723 = vmul.f32 %v4711, 1.442695
    %v4724 = vpow.pop %v4723
    %v4725 = vmul.f32 %v4712, 1.442695
    %v4726 = vpow.pop %v4725
    %v4727 = vmul.f32 %v4713, 1.442695
    %v4728 = vpow.pop %v4727
    %v4729 = vmul.f32 %v4714, 1.442695
    %v4730 = vpow.pop %v4729
    %v4731 = vadd.f32 %v4716, 1.0
    %v4732 = vadd.f32 %v4718, 1.0
    %v4733 = vadd.f32 %v4720, 1.0
    %v4734 = vadd.f32 %v4722, 1.0
    %v4735 = vadd.f32 %v4724, 1.0
    %v4736 = vadd.f32 %v4726, 1.0
    %v4737 = vadd.f32 %v4728, 1.0
    %v4738 = vadd.f32 %v4730, 1.0
    %v4739 = vrcp.pop %v4731
    %v4740 = vrcp.pop %v4732
    %v4741 = vrcp.pop %v4733
    %v4742 = vrcp.pop %v4734
    %v4743 = vrcp.pop %v4735
    %v4744 = vrcp.pop %v4736
    %v4745 = vrcp.pop %v4737
    %v4746 = vrcp.pop %v4738
    %v4747 = vpack.c.bf16 %v4739, %v4739
    %v4748 = vpack.c.bf16 %v4740, %v4740
    %v4749 = vpack.c.bf16 %v4741, %v4741
    %v4750 = vpack.c.bf16 %v4742, %v4742
    %v4751 = vpack.c.bf16 %v4743, %v4743
    %v4752 = vpack.c.bf16 %v4744, %v4744
    %v4753 = vpack.c.bf16 %v4745, %v4745
    %v4754 = vpack.c.bf16 %v4746, %v4746
    %v4763 = vunpack.c.l.b16 %v4747
    %v4764 = vunpack.c.l.b16 %v4748
    %v4765 = vunpack.c.l.b16 %v4749
    %v4766 = vunpack.c.l.b16 %v4750
    %v4767 = vunpack.c.l.b16 %v4751
    %v4768 = vunpack.c.l.b16 %v4752
    %v4769 = vunpack.c.l.b16 %v4753
    %v4770 = vunpack.c.l.b16 %v4754
    %v4771 = vpack.c.b16 %v4764, %v4763
    %v4772 = vpack.c.b16 %v4766, %v4765
    %v4773 = vpack.c.b16 %v4768, %v4767
    %v4774 = vpack.c.b16 %v4770, %v4769
    %4779 = vst [vmem:[%s10] sm:$0xff] %v4771
    %4780 = vst [vmem:[%s10 + $0x8] sm:$0xff] %v4772
    %4781 = vst [vmem:[%s10 + $0x10] sm:$0xff] %v4773
    %4782 = vst [vmem:[%s10 + $0x18] sm:$0xff] %v4774
    %4783 = vst [vmem:[%s11] sm:$0xff] %v2484
    %4784 = vst [vmem:[%s11 + $0x8] sm:$0xff] %v2486
    // Predicated region
    $region62: #{vae_forward.1} parent=1 // pred_check
      _
    $region63: #{vae_forward.1} parent=1 // pred_check_branch
      %4786 = sbr.rel (0) target = $region65
    $region64: #{vae_forward.1} parent=1 // pred_region
      _
    $region65: #{vae_forward.1} parent=1 // pred_fallthru
      _
    // Predicated region
    $region66: #{vae_forward.1} parent=1 // pred_check
      _
    $region67: #{vae_forward.1} parent=1 // pred_check_branch
      %4788 = sbr.rel (0) target = $region69
    $region68: #{vae_forward.1} parent=1 // pred_region
      _
    $region69: #{vae_forward.1} parent=1 // pred_fallthru
      _
    // Predicated region
    $region70: #{vae_forward.1} parent=1 // pred_check
      _
    $region71: #{vae_forward.1} parent=1 // pred_check_branch
      %4790 = sbr.rel (0) target = $region73
    $region72: #{vae_forward.1} parent=1 // pred_region
      _
    $region73: #{vae_forward.1} parent=1 // pred_fallthru
      _
    // Predicated region
    $region74: #{vae_forward.1} parent=1 // pred_check
      _
    $region75: #{vae_forward.1} parent=1 // pred_check_branch
      %4792 = sbr.rel (0) target = $region77
    $region76: #{vae_forward.1} parent=1 // pred_region
      _
    $region77: #{vae_forward.1} parent=1 // pred_fallthru
      _
    %4793 = vsyncpa [#allocation3], 1
    %4794 = vsyncpa [#allocation5], 1
    %4795 = vsyncpa [#allocation8], 1

</llo_original>
